<compile_context>
chip_gen: v6e
topology: v6e:2x2x1
jax: 0.10.0
libtpu: 0.0.40
codegen_flags: <defaults>
</compile_context>

<pallas_src>
import functools

import jax
import jax.numpy as jnp
from jax.experimental import pallas as pl
from jax.experimental.pallas import tpu as pltpu

INPUT_FEATURES = 17
HIDDEN = 200            # true hidden width of the PyTorch model
HIDDEN_PAD = 256        # lane-aligned padded width used inside the kernel
NUM_HIDDEN_LAYERS = 6
LN_EPS = 1e-5


def _softplus(v):
    # numerically stable softplus = log(1 + exp(v))
    return jnp.logaddexp(v, 0.0)


def mlp_kernel(x_ref, w0_ref, b0_ref, wh_ref, bh_ref,
               lnw_ref, lnb_ref, wo_ref, bo_ref, o_ref):
    tb = x_ref.shape[0]
    half = tb // 2                      # TB is a multiple of 16 -> half % 8 == 0

    # (1, 256) row vectors; Mosaic splats them where they are used.
    lnw = lnw_ref[...]
    lnb = lnb_ref[...]
    inv_n = jnp.float32(1.0 / HIDDEN)

    def ln_mish(h):
        # LayerNorm over the 200 real lanes.  Padded lanes of h are exactly
        # zero, so sum(h) and sum(h*h) over 256 lanes equal the sums over the
        # 200 real lanes; var = E[h^2] - mean^2 needs no lane mask.
        s1 = jnp.sum(h, axis=-1, keepdims=True)
        s2 = jnp.sum(h * h, axis=-1, keepdims=True)
        mean = s1 * inv_n
        var = s2 * inv_n - mean * mean
        hn = (h - mean) * jax.lax.rsqrt(var + LN_EPS) * lnw + lnb   # pads -> 0
        # Mish(x) = x * tanh(softplus(x)) = x - 2x / (t^2 + 2t + 2), t = e^x.
        # The exp clamp at 20 makes the correction term < 1e-17 * x, so no
        # extra select is needed for large x.  Padded lanes: hn == 0 -> 0.
        t = jnp.exp(jnp.minimum(hn, 20.0))
        den = t * (t + 2.0) + 2.0
        r = pl.reciprocal(den, approx=True)           # cheap EUP reciprocal
        r = r * (2.0 - den * r)                       # 1 Newton step -> ~exact
        return hn - (hn + hn) * r

    # Split the tile into two independent row-half streams so the MXU work of
    # one half overlaps the XLU/VPU/EUP work of the other.
    x = x_ref[...]
    xa = x[:half].astype(jnp.bfloat16)
    xb = x[half:].astype(jnp.bfloat16)

    # Linear(17 -> 256pad) + LN + Mish  (bf16 operands, f32 accumulation)
    w0 = w0_ref[...]
    b0 = b0_ref[...]
    ha = jnp.dot(xa, w0, preferred_element_type=jnp.float32) + b0
    hb = jnp.dot(xb, w0, preferred_element_type=jnp.float32) + b0
    ha = ln_mish(ha)
    hb = ln_mish(hb)

    # 6 x [ Linear(256pad -> 256pad) + LN + Mish ]   (Dropout(0.0) == identity)
    for i in range(NUM_HIDDEN_LAYERS):                # static unroll
        w = wh_ref[i]                                 # (256, 256) bf16
        b = bh_ref[i]                                 # (1, 256)   f32
        na = jnp.dot(ha.astype(jnp.bfloat16), w,
                     preferred_element_type=jnp.float32) + b
        nb = jnp.dot(hb.astype(jnp.bfloat16), w,
                     preferred_element_type=jnp.float32) + b
        ha = ln_mish(na)
        hb = ln_mish(nb)

    # Output Linear(200 -> 1) as a VPU multiply + lane reduction, then Softplus.
    wo = wo_ref[...]                                  # (1, 256) f32
    bo = bo_ref[...]                                  # (1, 1)   f32
    za = jnp.sum(ha * wo, axis=-1, keepdims=True) + bo
    zb = jnp.sum(hb * wo, axis=-1, keepdims=True) + bo
    o_ref[:half, :] = _softplus(za)
    o_ref[half:, :] = _softplus(zb)


def _round_up(n, m):
    return ((n + m - 1) // m) * m


@functools.partial(jax.jit, static_argnames=("tb",))
def cann_forward(x, params, *, tb=1024):
    """Run the Pallas kernel on x of shape (B, 17) with padded params."""
    B = x.shape[0]
    # Row tile: multiple of 16 (two sublane-aligned half-streams), capped so
    # the grid has >= 2 tiles whenever B allows it (v7x: 2 TensorCores share
    # the "parallel" batch axis), never larger than `tb`.
    TB = min(tb, max(16, _round_up((B + 1) // 2, 16)))
    B_pad = _round_up(B, TB)
    if B_pad != B:
        x = jnp.pad(x, ((0, B_pad - B), (0, 0)))
    grid = (B_pad // TB,)

    in_specs = [
        pl.BlockSpec((TB, INPUT_FEATURES), lambda i: (i, 0)),      # x tile
        pl.BlockSpec(params["w0"].shape, lambda i: (0, 0)),        # (17, 256) bf16
        pl.BlockSpec(params["b0"].shape, lambda i: (0, 0)),        # (1, 256)
        pl.BlockSpec(params["wh"].shape, lambda i: (0, 0, 0)),     # (6, 256, 256) bf16
        pl.BlockSpec(params["bh"].shape, lambda i: (0, 0, 0)),     # (6, 1, 256)
        pl.BlockSpec(params["ln_w"].shape, lambda i: (0, 0)),      # (1, 256)
        pl.BlockSpec(params["ln_b"].shape, lambda i: (0, 0)),      # (1, 256)
        pl.BlockSpec(params["wo"].shape, lambda i: (0, 0)),        # (1, 256)
        pl.BlockSpec(params["bo"].shape, lambda i: (0, 0)),        # (1, 1)
    ]

    out = pl.pallas_call(
        mlp_kernel,
        out_shape=jax.ShapeDtypeStruct((B_pad, 1), jnp.float32),
        grid=grid,
        in_specs=in_specs,
        out_specs=pl.BlockSpec((TB, 1), lambda i: (i, 0)),
        compiler_params=pltpu.CompilerParams(
            dimension_semantics=("parallel",)),
    )(x, params["w0"], params["b0"], params["wh"], params["bh"],
      params["ln_w"], params["ln_b"], params["wo"], params["bo"])
    return out[:B]


def init_params(key):
    """Mirror the PyTorch module's _init_weights: kaiming_normal_ on Linear
    weights (std = sqrt(2 / fan_in)), zero biases, LayerNorm weight=1, bias=0.
    Weights are stored transposed (in, out) so the kernel hot path is x @ W."""
    k0, *kh_keys, ko = jax.random.split(key, NUM_HIDDEN_LAYERS + 2)

    def kaiming(k, fan_in, shape):
        std = (2.0 / fan_in) ** 0.5
        return std * jax.random.normal(k, shape, dtype=jnp.float32)

    return {
        "w0": kaiming(k0, INPUT_FEATURES, (INPUT_FEATURES, HIDDEN)),   # (17, 200)
        "b0": jnp.zeros((1, HIDDEN), jnp.float32),
        "wh": jnp.stack([kaiming(k, HIDDEN, (HIDDEN, HIDDEN))
                         for k in kh_keys]),                            # (6, 200, 200)
        "bh": jnp.zeros((NUM_HIDDEN_LAYERS, 1, HIDDEN), jnp.float32),
        "ln_w": jnp.ones((1, HIDDEN), jnp.float32),
        "ln_b": jnp.zeros((1, HIDDEN), jnp.float32),
        "wo": kaiming(ko, HIDDEN, (HIDDEN, 1)),                         # (200, 1)
        "bo": jnp.zeros((1, 1), jnp.float32),
    }


def pad_params(p):
    """Zero-pad the hidden width 200 -> 256 for the lane-aligned kernel.
    ln_w / ln_b are padded with ZEROS so padded lanes stay exactly zero.
    Matmul weights (w0, wh) are pre-cast to bfloat16 for the MXU; accumulation
    in the kernel stays f32."""
    pad = HIDDEN_PAD - HIDDEN
    return {
        "w0": jnp.pad(p["w0"], ((0, 0), (0, pad))).astype(jnp.bfloat16),
        "b0": jnp.pad(p["b0"], ((0, 0), (0, pad))),
        "wh": jnp.pad(p["wh"], ((0, 0), (0, pad), (0, pad))).astype(jnp.bfloat16),
        "bh": jnp.pad(p["bh"], ((0, 0), (0, 0), (0, pad))),
        "ln_w": jnp.pad(p["ln_w"], ((0, 0), (0, pad))),
        "ln_b": jnp.pad(p["ln_b"], ((0, 0), (0, pad))),
        "wo": jnp.pad(p["wo"].T, ((0, 0), (0, pad))),      # (1, 256) row vector
        "bo": p["bo"],
    }


def reference_forward(x, params, *, matmul_dtype=jnp.float32):
    """Pure-JAX reference of the PyTorch forward (unpadded params).
    matmul_dtype=jnp.bfloat16 mimics the kernel's bf16 MXU operands (f32 acc)
    for a tight numerical cross-check."""
    def mm(a, w):
        return jnp.dot(a.astype(matmul_dtype), w.astype(matmul_dtype),
                       preferred_element_type=jnp.float32)

    def ln_mish(h):
        mean = jnp.mean(h, axis=-1, keepdims=True)
        var = jnp.mean((h - mean) ** 2, axis=-1, keepdims=True)
        hn = (h - mean) / jnp.sqrt(var + LN_EPS) * params["ln_w"] + params["ln_b"]
        return hn * jnp.tanh(jax.nn.softplus(hn))

    h = ln_mish(mm(x, params["w0"]) + params["b0"])
    for i in range(NUM_HIDDEN_LAYERS):
        h = ln_mish(mm(h, params["wh"][i]) + params["bh"][i])
    return jax.nn.softplus(h @ params["wo"] + params["bo"])


if __name__ == "__main__":
    key = jax.random.PRNGKey(0)
    pkey, xkey = jax.random.split(key)

    params = init_params(pkey)
    kernel_params = pad_params(params)

    batch = 64
    x = jax.random.normal(xkey, (batch, INPUT_FEATURES), dtype=jnp.float32)

    out = jax.block_until_ready(cann_forward(x, kernel_params))
    assert out.shape == (batch, 1), out.shape

    # Tight check against a reference that uses the same bf16 MXU operands.
    ref_bf16 = reference_forward(x, params, matmul_dtype=jnp.bfloat16)
    assert jnp.allclose(out, ref_bf16, atol=2e-3, rtol=2e-3), (
        float(jnp.max(jnp.abs(out - ref_bf16))))

    # Looser check against the full-f32 PyTorch-equivalent reference; the gap
    # is the expected bf16-matmul drift across 7 LayerNorm'd layers.
    ref_f32 = reference_forward(x, params, matmul_dtype=jnp.float32)
    assert jnp.allclose(out, ref_f32, atol=5e-2, rtol=5e-2), (
        float(jnp.max(jnp.abs(out - ref_f32))))

    print("KERNEL_OK")
</pallas_src>

<mosaic_0001>
module attributes {stable_mosaic.version = 11 : i64} {
  func.func @mlp_kernel(%arg0: i32, %arg1: memref<32x17xf32, #tpu.memory_space<vmem>>, %arg2: memref<17x256xbf16, #tpu.memory_space<vmem>>, %arg3: memref<1x256xf32, #tpu.memory_space<vmem>>, %arg4: memref<6x256x256xbf16, #tpu.memory_space<vmem>>, %arg5: memref<6x1x256xf32, #tpu.memory_space<vmem>>, %arg6: memref<1x256xf32, #tpu.memory_space<vmem>>, %arg7: memref<1x256xf32, #tpu.memory_space<vmem>>, %arg8: memref<1x256xf32, #tpu.memory_space<vmem>>, %arg9: memref<1x1xf32, #tpu.memory_space<vmem>>, %arg10: memref<32x1xf32, #tpu.memory_space<vmem>>) attributes {dimension_semantics = [#tpu.dimension_semantics<parallel>], iteration_bounds = array<i64: 2>, scalar_prefetch = 0 : i64, scratch_operands = 0 : i64, tpu.core_type = #tpu.core_type<tc>, window_params = [{transform_indices = @transform_0, window_bounds = array<i64: 32, 17>}, {pipeline_mode = #tpu.pipeline_mode<synchronous>, transform_indices = @transform_1, window_bounds = array<i64: 17, 256>}, {pipeline_mode = #tpu.pipeline_mode<synchronous>, transform_indices = @transform_2, window_bounds = array<i64: 1, 256>}, {pipeline_mode = #tpu.pipeline_mode<synchronous>, transform_indices = @transform_3, window_bounds = array<i64: 6, 256, 256>}, {pipeline_mode = #tpu.pipeline_mode<synchronous>, transform_indices = @transform_4, window_bounds = array<i64: 6, 1, 256>}, {pipeline_mode = #tpu.pipeline_mode<synchronous>, transform_indices = @transform_5, window_bounds = array<i64: 1, 256>}, {pipeline_mode = #tpu.pipeline_mode<synchronous>, transform_indices = @transform_6, window_bounds = array<i64: 1, 256>}, {pipeline_mode = #tpu.pipeline_mode<synchronous>, transform_indices = @transform_7, window_bounds = array<i64: 1, 256>}, {pipeline_mode = #tpu.pipeline_mode<synchronous>, transform_indices = @transform_8, window_bounds = array<i64: 1, 1>}, {transform_indices = @transform_9, window_bounds = array<i64: 32, 1>}]} {
    %c0 = arith.constant 0 : index
    %c0_0 = arith.constant 0 : index
    %0 = vector.load %arg6[%c0, %c0_0] : memref<1x256xf32, #tpu.memory_space<vmem>>, vector<1x256xf32>
    %c0_1 = arith.constant 0 : index
    %c0_2 = arith.constant 0 : index
    %1 = vector.load %arg7[%c0_1, %c0_2] : memref<1x256xf32, #tpu.memory_space<vmem>>, vector<1x256xf32>
    %c0_3 = arith.constant 0 : index
    %c0_4 = arith.constant 0 : index
    %2 = vector.load %arg1[%c0_3, %c0_4] : memref<32x17xf32, #tpu.memory_space<vmem>>, vector<32x17xf32>
    %3 = vector.extract_strided_slice %2 {offsets = [0, 0], sizes = [16, 17], strides = [1, 1]} : vector<32x17xf32> to vector<16x17xf32>
    %4 = arith.truncf %3 : vector<16x17xf32> to vector<16x17xbf16>
    %5 = vector.extract_strided_slice %2 {offsets = [16, 0], sizes = [16, 17], strides = [1, 1]} : vector<32x17xf32> to vector<16x17xf32>
    %6 = arith.truncf %5 : vector<16x17xf32> to vector<16x17xbf16>
    %c0_5 = arith.constant 0 : index
    %c0_6 = arith.constant 0 : index
    %7 = vector.load %arg2[%c0_5, %c0_6] : memref<17x256xbf16, #tpu.memory_space<vmem>>, vector<17x256xbf16>
    %c0_7 = arith.constant 0 : index
    %c0_8 = arith.constant 0 : index
    %8 = vector.load %arg3[%c0_7, %c0_8] : memref<1x256xf32, #tpu.memory_space<vmem>>, vector<1x256xf32>
    %cst = arith.constant dense<0.000000e+00> : vector<16x256xf32>
    %9 = tpu.matmul %4, %7, %cst {dimension_numbers = #tpu.dot_dimension_numbers<[1], [0], [0], [1], [0, 0, 1, 1], [], []>} : vector<16x17xbf16>, vector<17x256xbf16>, vector<16x256xf32> -> vector<16x256xf32>
    %10 = vector.broadcast %8 : vector<1x256xf32> to vector<16x256xf32>
    %11 = arith.addf %9, %10 : vector<16x256xf32>
    %cst_9 = arith.constant dense<0.000000e+00> : vector<16x256xf32>
    %12 = tpu.matmul %6, %7, %cst_9 {dimension_numbers = #tpu.dot_dimension_numbers<[1], [0], [0], [1], [0, 0, 1, 1], [], []>} : vector<16x17xbf16>, vector<17x256xbf16>, vector<16x256xf32> -> vector<16x256xf32>
    %13 = vector.broadcast %8 : vector<1x256xf32> to vector<16x256xf32>
    %14 = arith.addf %12, %13 : vector<16x256xf32>
    %cst_10 = arith.constant dense<0.000000e+00> : vector<16xf32>
    %15 = vector.multi_reduction <add>, %11, %cst_10 [1] : vector<16x256xf32> to vector<16xf32>
    %16 = vector.shape_cast %15 : vector<16xf32> to vector<16x1xf32>
    %17 = arith.mulf %11, %11 : vector<16x256xf32>
    %cst_11 = arith.constant dense<0.000000e+00> : vector<16xf32>
    %18 = vector.multi_reduction <add>, %17, %cst_11 [1] : vector<16x256xf32> to vector<16xf32>
    %19 = vector.shape_cast %18 : vector<16xf32> to vector<16x1xf32>
    %cst_12 = arith.constant 5.000000e-03 : f32
    %20 = vector.broadcast %cst_12 : f32 to vector<16x1xf32>
    %21 = arith.mulf %16, %20 : vector<16x1xf32>
    %cst_13 = arith.constant 5.000000e-03 : f32
    %22 = vector.broadcast %cst_13 : f32 to vector<16x1xf32>
    %23 = arith.mulf %19, %22 : vector<16x1xf32>
    %24 = arith.mulf %21, %21 : vector<16x1xf32>
    %25 = arith.subf %23, %24 : vector<16x1xf32>
    %26 = vector.broadcast %21 : vector<16x1xf32> to vector<16x256xf32>
    %27 = arith.subf %11, %26 : vector<16x256xf32>
    %cst_14 = arith.constant 9.99999974E-6 : f32
    %28 = vector.broadcast %cst_14 : f32 to vector<16x1xf32>
    %29 = arith.addf %25, %28 : vector<16x1xf32>
    %30 = math.rsqrt %29 : vector<16x1xf32>
    %31 = vector.broadcast %30 : vector<16x1xf32> to vector<16x256xf32>
    %32 = arith.mulf %27, %31 : vector<16x256xf32>
    %33 = vector.broadcast %0 : vector<1x256xf32> to vector<16x256xf32>
    %34 = arith.mulf %32, %33 : vector<16x256xf32>
    %35 = vector.broadcast %1 : vector<1x256xf32> to vector<16x256xf32>
    %36 = arith.addf %34, %35 : vector<16x256xf32>
    %cst_15 = arith.constant 2.000000e+01 : f32
    %37 = vector.broadcast %cst_15 : f32 to vector<16x256xf32>
    %38 = arith.minimumf %36, %37 : vector<16x256xf32>
    %39 = math.exp %38 : vector<16x256xf32>
    %cst_16 = arith.constant 2.000000e+00 : f32
    %40 = vector.broadcast %cst_16 : f32 to vector<16x256xf32>
    %41 = arith.addf %39, %40 : vector<16x256xf32>
    %42 = arith.mulf %39, %41 : vector<16x256xf32>
    %cst_17 = arith.constant 2.000000e+00 : f32
    %43 = vector.broadcast %cst_17 : f32 to vector<16x256xf32>
    %44 = arith.addf %42, %43 : vector<16x256xf32>
    %45 = tpu.reciprocal %44 {approx = true} : vector<16x256xf32> -> vector<16x256xf32>
    %46 = arith.mulf %44, %45 : vector<16x256xf32>
    %cst_18 = arith.constant 2.000000e+00 : f32
    %47 = vector.broadcast %cst_18 : f32 to vector<16x256xf32>
    %48 = arith.subf %47, %46 : vector<16x256xf32>
    %49 = arith.mulf %45, %48 : vector<16x256xf32>
    %50 = arith.addf %36, %36 : vector<16x256xf32>
    %51 = arith.mulf %50, %49 : vector<16x256xf32>
    %52 = arith.subf %36, %51 : vector<16x256xf32>
    %cst_19 = arith.constant dense<0.000000e+00> : vector<16xf32>
    %53 = vector.multi_reduction <add>, %14, %cst_19 [1] : vector<16x256xf32> to vector<16xf32>
    %54 = vector.shape_cast %53 : vector<16xf32> to vector<16x1xf32>
    %55 = arith.mulf %14, %14 : vector<16x256xf32>
    %cst_20 = arith.constant dense<0.000000e+00> : vector<16xf32>
    %56 = vector.multi_reduction <add>, %55, %cst_20 [1] : vector<16x256xf32> to vector<16xf32>
    %57 = vector.shape_cast %56 : vector<16xf32> to vector<16x1xf32>
    %cst_21 = arith.constant 5.000000e-03 : f32
    %58 = vector.broadcast %cst_21 : f32 to vector<16x1xf32>
    %59 = arith.mulf %54, %58 : vector<16x1xf32>
    %cst_22 = arith.constant 5.000000e-03 : f32
    %60 = vector.broadcast %cst_22 : f32 to vector<16x1xf32>
    %61 = arith.mulf %57, %60 : vector<16x1xf32>
    %62 = arith.mulf %59, %59 : vector<16x1xf32>
    %63 = arith.subf %61, %62 : vector<16x1xf32>
    %64 = vector.broadcast %59 : vector<16x1xf32> to vector<16x256xf32>
    %65 = arith.subf %14, %64 : vector<16x256xf32>
    %cst_23 = arith.constant 9.99999974E-6 : f32
    %66 = vector.broadcast %cst_23 : f32 to vector<16x1xf32>
    %67 = arith.addf %63, %66 : vector<16x1xf32>
    %68 = math.rsqrt %67 : vector<16x1xf32>
    %69 = vector.broadcast %68 : vector<16x1xf32> to vector<16x256xf32>
    %70 = arith.mulf %65, %69 : vector<16x256xf32>
    %71 = vector.broadcast %0 : vector<1x256xf32> to vector<16x256xf32>
    %72 = arith.mulf %70, %71 : vector<16x256xf32>
    %73 = vector.broadcast %1 : vector<1x256xf32> to vector<16x256xf32>
    %74 = arith.addf %72, %73 : vector<16x256xf32>
    %cst_24 = arith.constant 2.000000e+01 : f32
    %75 = vector.broadcast %cst_24 : f32 to vector<16x256xf32>
    %76 = arith.minimumf %74, %75 : vector<16x256xf32>
    %77 = math.exp %76 : vector<16x256xf32>
    %cst_25 = arith.constant 2.000000e+00 : f32
    %78 = vector.broadcast %cst_25 : f32 to vector<16x256xf32>
    %79 = arith.addf %77, %78 : vector<16x256xf32>
    %80 = arith.mulf %77, %79 : vector<16x256xf32>
    %cst_26 = arith.constant 2.000000e+00 : f32
    %81 = vector.broadcast %cst_26 : f32 to vector<16x256xf32>
    %82 = arith.addf %80, %81 : vector<16x256xf32>
    %83 = tpu.reciprocal %82 {approx = true} : vector<16x256xf32> -> vector<16x256xf32>
    %84 = arith.mulf %82, %83 : vector<16x256xf32>
    %cst_27 = arith.constant 2.000000e+00 : f32
    %85 = vector.broadcast %cst_27 : f32 to vector<16x256xf32>
    %86 = arith.subf %85, %84 : vector<16x256xf32>
    %87 = arith.mulf %83, %86 : vector<16x256xf32>
    %88 = arith.addf %74, %74 : vector<16x256xf32>
    %89 = arith.mulf %88, %87 : vector<16x256xf32>
    %90 = arith.subf %74, %89 : vector<16x256xf32>
    %c0_28 = arith.constant 0 : index
    %c0_29 = arith.constant 0 : index
    %c0_30 = arith.constant 0 : index
    %91 = vector.load %arg4[%c0_28, %c0_29, %c0_30] : memref<6x256x256xbf16, #tpu.memory_space<vmem>>, vector<1x256x256xbf16>
    %92 = vector.shape_cast %91 : vector<1x256x256xbf16> to vector<256x256xbf16>
    %c0_31 = arith.constant 0 : index
    %c0_32 = arith.constant 0 : index
    %c0_33 = arith.constant 0 : index
    %93 = vector.load %arg5[%c0_31, %c0_32, %c0_33] : memref<6x1x256xf32, #tpu.memory_space<vmem>>, vector<1x1x256xf32>
    %94 = vector.shape_cast %93 : vector<1x1x256xf32> to vector<1x256xf32>
    %95 = arith.truncf %52 : vector<16x256xf32> to vector<16x256xbf16>
    %cst_34 = arith.constant dense<0.000000e+00> : vector<16x256xf32>
    %96 = tpu.matmul %95, %92, %cst_34 {dimension_numbers = #tpu.dot_dimension_numbers<[1], [0], [0], [1], [0, 0, 1, 1], [], []>} : vector<16x256xbf16>, vector<256x256xbf16>, vector<16x256xf32> -> vector<16x256xf32>
    %97 = vector.broadcast %94 : vector<1x256xf32> to vector<16x256xf32>
    %98 = arith.addf %96, %97 : vector<16x256xf32>
    %99 = arith.truncf %90 : vector<16x256xf32> to vector<16x256xbf16>
    %cst_35 = arith.constant dense<0.000000e+00> : vector<16x256xf32>
    %100 = tpu.matmul %99, %92, %cst_35 {dimension_numbers = #tpu.dot_dimension_numbers<[1], [0], [0], [1], [0, 0, 1, 1], [], []>} : vector<16x256xbf16>, vector<256x256xbf16>, vector<16x256xf32> -> vector<16x256xf32>
    %101 = vector.broadcast %94 : vector<1x256xf32> to vector<16x256xf32>
    %102 = arith.addf %100, %101 : vector<16x256xf32>
    %cst_36 = arith.constant dense<0.000000e+00> : vector<16xf32>
    %103 = vector.multi_reduction <add>, %98, %cst_36 [1] : vector<16x256xf32> to vector<16xf32>
    %104 = vector.shape_cast %103 : vector<16xf32> to vector<16x1xf32>
    %105 = arith.mulf %98, %98 : vector<16x256xf32>
    %cst_37 = arith.constant dense<0.000000e+00> : vector<16xf32>
    %106 = vector.multi_reduction <add>, %105, %cst_37 [1] : vector<16x256xf32> to vector<16xf32>
    %107 = vector.shape_cast %106 : vector<16xf32> to vector<16x1xf32>
    %cst_38 = arith.constant 5.000000e-03 : f32
    %108 = vector.broadcast %cst_38 : f32 to vector<16x1xf32>
    %109 = arith.mulf %104, %108 : vector<16x1xf32>
    %cst_39 = arith.constant 5.000000e-03 : f32
    %110 = vector.broadcast %cst_39 : f32 to vector<16x1xf32>
    %111 = arith.mulf %107, %110 : vector<16x1xf32>
    %112 = arith.mulf %109, %109 : vector<16x1xf32>
    %113 = arith.subf %111, %112 : vector<16x1xf32>
    %114 = vector.broadcast %109 : vector<16x1xf32> to vector<16x256xf32>
    %115 = arith.subf %98, %114 : vector<16x256xf32>
    %cst_40 = arith.constant 9.99999974E-6 : f32
    %116 = vector.broadcast %cst_40 : f32 to vector<16x1xf32>
    %117 = arith.addf %113, %116 : vector<16x1xf32>
    %118 = math.rsqrt %117 : vector<16x1xf32>
    %119 = vector.broadcast %118 : vector<16x1xf32> to vector<16x256xf32>
    %120 = arith.mulf %115, %119 : vector<16x256xf32>
    %121 = vector.broadcast %0 : vector<1x256xf32> to vector<16x256xf32>
    %122 = arith.mulf %120, %121 : vector<16x256xf32>
    %123 = vector.broadcast %1 : vector<1x256xf32> to vector<16x256xf32>
    %124 = arith.addf %122, %123 : vector<16x256xf32>
    %cst_41 = arith.constant 2.000000e+01 : f32
    %125 = vector.broadcast %cst_41 : f32 to vector<16x256xf32>
    %126 = arith.minimumf %124, %125 : vector<16x256xf32>
    %127 = math.exp %126 : vector<16x256xf32>
    %cst_42 = arith.constant 2.000000e+00 : f32
    %128 = vector.broadcast %cst_42 : f32 to vector<16x256xf32>
    %129 = arith.addf %127, %128 : vector<16x256xf32>
    %130 = arith.mulf %127, %129 : vector<16x256xf32>
    %cst_43 = arith.constant 2.000000e+00 : f32
    %131 = vector.broadcast %cst_43 : f32 to vector<16x256xf32>
    %132 = arith.addf %130, %131 : vector<16x256xf32>
    %133 = tpu.reciprocal %132 {approx = true} : vector<16x256xf32> -> vector<16x256xf32>
    %134 = arith.mulf %132, %133 : vector<16x256xf32>
    %cst_44 = arith.constant 2.000000e+00 : f32
    %135 = vector.broadcast %cst_44 : f32 to vector<16x256xf32>
    %136 = arith.subf %135, %134 : vector<16x256xf32>
    %137 = arith.mulf %133, %136 : vector<16x256xf32>
    %138 = arith.addf %124, %124 : vector<16x256xf32>
    %139 = arith.mulf %138, %137 : vector<16x256xf32>
    %140 = arith.subf %124, %139 : vector<16x256xf32>
    %cst_45 = arith.constant dense<0.000000e+00> : vector<16xf32>
    %141 = vector.multi_reduction <add>, %102, %cst_45 [1] : vector<16x256xf32> to vector<16xf32>
    %142 = vector.shape_cast %141 : vector<16xf32> to vector<16x1xf32>
    %143 = arith.mulf %102, %102 : vector<16x256xf32>
    %cst_46 = arith.constant dense<0.000000e+00> : vector<16xf32>
    %144 = vector.multi_reduction <add>, %143, %cst_46 [1] : vector<16x256xf32> to vector<16xf32>
    %145 = vector.shape_cast %144 : vector<16xf32> to vector<16x1xf32>
    %cst_47 = arith.constant 5.000000e-03 : f32
    %146 = vector.broadcast %cst_47 : f32 to vector<16x1xf32>
    %147 = arith.mulf %142, %146 : vector<16x1xf32>
    %cst_48 = arith.constant 5.000000e-03 : f32
    %148 = vector.broadcast %cst_48 : f32 to vector<16x1xf32>
    %149 = arith.mulf %145, %148 : vector<16x1xf32>
    %150 = arith.mulf %147, %147 : vector<16x1xf32>
    %151 = arith.subf %149, %150 : vector<16x1xf32>
    %152 = vector.broadcast %147 : vector<16x1xf32> to vector<16x256xf32>
    %153 = arith.subf %102, %152 : vector<16x256xf32>
    %cst_49 = arith.constant 9.99999974E-6 : f32
    %154 = vector.broadcast %cst_49 : f32 to vector<16x1xf32>
    %155 = arith.addf %151, %154 : vector<16x1xf32>
    %156 = math.rsqrt %155 : vector<16x1xf32>
    %157 = vector.broadcast %156 : vector<16x1xf32> to vector<16x256xf32>
    %158 = arith.mulf %153, %157 : vector<16x256xf32>
    %159 = vector.broadcast %0 : vector<1x256xf32> to vector<16x256xf32>
    %160 = arith.mulf %158, %159 : vector<16x256xf32>
    %161 = vector.broadcast %1 : vector<1x256xf32> to vector<16x256xf32>
    %162 = arith.addf %160, %161 : vector<16x256xf32>
    %cst_50 = arith.constant 2.000000e+01 : f32
    %163 = vector.broadcast %cst_50 : f32 to vector<16x256xf32>
    %164 = arith.minimumf %162, %163 : vector<16x256xf32>
    %165 = math.exp %164 : vector<16x256xf32>
    %cst_51 = arith.constant 2.000000e+00 : f32
    %166 = vector.broadcast %cst_51 : f32 to vector<16x256xf32>
    %167 = arith.addf %165, %166 : vector<16x256xf32>
    %168 = arith.mulf %165, %167 : vector<16x256xf32>
    %cst_52 = arith.constant 2.000000e+00 : f32
    %169 = vector.broadcast %cst_52 : f32 to vector<16x256xf32>
    %170 = arith.addf %168, %169 : vector<16x256xf32>
    %171 = tpu.reciprocal %170 {approx = true} : vector<16x256xf32> -> vector<16x256xf32>
    %172 = arith.mulf %170, %171 : vector<16x256xf32>
    %cst_53 = arith.constant 2.000000e+00 : f32
    %173 = vector.broadcast %cst_53 : f32 to vector<16x256xf32>
    %174 = arith.subf %173, %172 : vector<16x256xf32>
    %175 = arith.mulf %171, %174 : vector<16x256xf32>
    %176 = arith.addf %162, %162 : vector<16x256xf32>
    %177 = arith.mulf %176, %175 : vector<16x256xf32>
    %178 = arith.subf %162, %177 : vector<16x256xf32>
    %c1 = arith.constant 1 : index
    %c0_54 = arith.constant 0 : index
    %c0_55 = arith.constant 0 : index
    %179 = vector.load %arg4[%c1, %c0_54, %c0_55] : memref<6x256x256xbf16, #tpu.memory_space<vmem>>, vector<1x256x256xbf16>
    %180 = vector.shape_cast %179 : vector<1x256x256xbf16> to vector<256x256xbf16>
    %c1_56 = arith.constant 1 : index
    %c0_57 = arith.constant 0 : index
    %c0_58 = arith.constant 0 : index
    %181 = vector.load %arg5[%c1_56, %c0_57, %c0_58] : memref<6x1x256xf32, #tpu.memory_space<vmem>>, vector<1x1x256xf32>
    %182 = vector.shape_cast %181 : vector<1x1x256xf32> to vector<1x256xf32>
    %183 = arith.truncf %140 : vector<16x256xf32> to vector<16x256xbf16>
    %cst_59 = arith.constant dense<0.000000e+00> : vector<16x256xf32>
    %184 = tpu.matmul %183, %180, %cst_59 {dimension_numbers = #tpu.dot_dimension_numbers<[1], [0], [0], [1], [0, 0, 1, 1], [], []>} : vector<16x256xbf16>, vector<256x256xbf16>, vector<16x256xf32> -> vector<16x256xf32>
    %185 = vector.broadcast %182 : vector<1x256xf32> to vector<16x256xf32>
    %186 = arith.addf %184, %185 : vector<16x256xf32>
    %187 = arith.truncf %178 : vector<16x256xf32> to vector<16x256xbf16>
    %cst_60 = arith.constant dense<0.000000e+00> : vector<16x256xf32>
    %188 = tpu.matmul %187, %180, %cst_60 {dimension_numbers = #tpu.dot_dimension_numbers<[1], [0], [0], [1], [0, 0, 1, 1], [], []>} : vector<16x256xbf16>, vector<256x256xbf16>, vector<16x256xf32> -> vector<16x256xf32>
    %189 = vector.broadcast %182 : vector<1x256xf32> to vector<16x256xf32>
    %190 = arith.addf %188, %189 : vector<16x256xf32>
    %cst_61 = arith.constant dense<0.000000e+00> : vector<16xf32>
    %191 = vector.multi_reduction <add>, %186, %cst_61 [1] : vector<16x256xf32> to vector<16xf32>
    %192 = vector.shape_cast %191 : vector<16xf32> to vector<16x1xf32>
    %193 = arith.mulf %186, %186 : vector<16x256xf32>
    %cst_62 = arith.constant dense<0.000000e+00> : vector<16xf32>
    %194 = vector.multi_reduction <add>, %193, %cst_62 [1] : vector<16x256xf32> to vector<16xf32>
    %195 = vector.shape_cast %194 : vector<16xf32> to vector<16x1xf32>
    %cst_63 = arith.constant 5.000000e-03 : f32
    %196 = vector.broadcast %cst_63 : f32 to vector<16x1xf32>
    %197 = arith.mulf %192, %196 : vector<16x1xf32>
    %cst_64 = arith.constant 5.000000e-03 : f32
    %198 = vector.broadcast %cst_64 : f32 to vector<16x1xf32>
    %199 = arith.mulf %195, %198 : vector<16x1xf32>
    %200 = arith.mulf %197, %197 : vector<16x1xf32>
    %201 = arith.subf %199, %200 : vector<16x1xf32>
    %202 = vector.broadcast %197 : vector<16x1xf32> to vector<16x256xf32>
    %203 = arith.subf %186, %202 : vector<16x256xf32>
    %cst_65 = arith.constant 9.99999974E-6 : f32
    %204 = vector.broadcast %cst_65 : f32 to vector<16x1xf32>
    %205 = arith.addf %201, %204 : vector<16x1xf32>
    %206 = math.rsqrt %205 : vector<16x1xf32>
    %207 = vector.broadcast %206 : vector<16x1xf32> to vector<16x256xf32>
    %208 = arith.mulf %203, %207 : vector<16x256xf32>
    %209 = vector.broadcast %0 : vector<1x256xf32> to vector<16x256xf32>
    %210 = arith.mulf %208, %209 : vector<16x256xf32>
    %211 = vector.broadcast %1 : vector<1x256xf32> to vector<16x256xf32>
    %212 = arith.addf %210, %211 : vector<16x256xf32>
    %cst_66 = arith.constant 2.000000e+01 : f32
    %213 = vector.broadcast %cst_66 : f32 to vector<16x256xf32>
    %214 = arith.minimumf %212, %213 : vector<16x256xf32>
    %215 = math.exp %214 : vector<16x256xf32>
    %cst_67 = arith.constant 2.000000e+00 : f32
    %216 = vector.broadcast %cst_67 : f32 to vector<16x256xf32>
    %217 = arith.addf %215, %216 : vector<16x256xf32>
    %218 = arith.mulf %215, %217 : vector<16x256xf32>
    %cst_68 = arith.constant 2.000000e+00 : f32
    %219 = vector.broadcast %cst_68 : f32 to vector<16x256xf32>
    %220 = arith.addf %218, %219 : vector<16x256xf32>
    %221 = tpu.reciprocal %220 {approx = true} : vector<16x256xf32> -> vector<16x256xf32>
    %222 = arith.mulf %220, %221 : vector<16x256xf32>
    %cst_69 = arith.constant 2.000000e+00 : f32
    %223 = vector.broadcast %cst_69 : f32 to vector<16x256xf32>
    %224 = arith.subf %223, %222 : vector<16x256xf32>
    %225 = arith.mulf %221, %224 : vector<16x256xf32>
    %226 = arith.addf %212, %212 : vector<16x256xf32>
    %227 = arith.mulf %226, %225 : vector<16x256xf32>
    %228 = arith.subf %212, %227 : vector<16x256xf32>
    %cst_70 = arith.constant dense<0.000000e+00> : vector<16xf32>
    %229 = vector.multi_reduction <add>, %190, %cst_70 [1] : vector<16x256xf32> to vector<16xf32>
    %230 = vector.shape_cast %229 : vector<16xf32> to vector<16x1xf32>
    %231 = arith.mulf %190, %190 : vector<16x256xf32>
    %cst_71 = arith.constant dense<0.000000e+00> : vector<16xf32>
    %232 = vector.multi_reduction <add>, %231, %cst_71 [1] : vector<16x256xf32> to vector<16xf32>
    %233 = vector.shape_cast %232 : vector<16xf32> to vector<16x1xf32>
    %cst_72 = arith.constant 5.000000e-03 : f32
    %234 = vector.broadcast %cst_72 : f32 to vector<16x1xf32>
    %235 = arith.mulf %230, %234 : vector<16x1xf32>
    %cst_73 = arith.constant 5.000000e-03 : f32
    %236 = vector.broadcast %cst_73 : f32 to vector<16x1xf32>
    %237 = arith.mulf %233, %236 : vector<16x1xf32>
    %238 = arith.mulf %235, %235 : vector<16x1xf32>
    %239 = arith.subf %237, %238 : vector<16x1xf32>
    %240 = vector.broadcast %235 : vector<16x1xf32> to vector<16x256xf32>
    %241 = arith.subf %190, %240 : vector<16x256xf32>
    %cst_74 = arith.constant 9.99999974E-6 : f32
    %242 = vector.broadcast %cst_74 : f32 to vector<16x1xf32>
    %243 = arith.addf %239, %242 : vector<16x1xf32>
    %244 = math.rsqrt %243 : vector<16x1xf32>
    %245 = vector.broadcast %244 : vector<16x1xf32> to vector<16x256xf32>
    %246 = arith.mulf %241, %245 : vector<16x256xf32>
    %247 = vector.broadcast %0 : vector<1x256xf32> to vector<16x256xf32>
    %248 = arith.mulf %246, %247 : vector<16x256xf32>
    %249 = vector.broadcast %1 : vector<1x256xf32> to vector<16x256xf32>
    %250 = arith.addf %248, %249 : vector<16x256xf32>
    %cst_75 = arith.constant 2.000000e+01 : f32
    %251 = vector.broadcast %cst_75 : f32 to vector<16x256xf32>
    %252 = arith.minimumf %250, %251 : vector<16x256xf32>
    %253 = math.exp %252 : vector<16x256xf32>
    %cst_76 = arith.constant 2.000000e+00 : f32
    %254 = vector.broadcast %cst_76 : f32 to vector<16x256xf32>
    %255 = arith.addf %253, %254 : vector<16x256xf32>
    %256 = arith.mulf %253, %255 : vector<16x256xf32>
    %cst_77 = arith.constant 2.000000e+00 : f32
    %257 = vector.broadcast %cst_77 : f32 to vector<16x256xf32>
    %258 = arith.addf %256, %257 : vector<16x256xf32>
    %259 = tpu.reciprocal %258 {approx = true} : vector<16x256xf32> -> vector<16x256xf32>
    %260 = arith.mulf %258, %259 : vector<16x256xf32>
    %cst_78 = arith.constant 2.000000e+00 : f32
    %261 = vector.broadcast %cst_78 : f32 to vector<16x256xf32>
    %262 = arith.subf %261, %260 : vector<16x256xf32>
    %263 = arith.mulf %259, %262 : vector<16x256xf32>
    %264 = arith.addf %250, %250 : vector<16x256xf32>
    %265 = arith.mulf %264, %263 : vector<16x256xf32>
    %266 = arith.subf %250, %265 : vector<16x256xf32>
    %c2 = arith.constant 2 : index
    %c0_79 = arith.constant 0 : index
    %c0_80 = arith.constant 0 : index
    %267 = vector.load %arg4[%c2, %c0_79, %c0_80] : memref<6x256x256xbf16, #tpu.memory_space<vmem>>, vector<1x256x256xbf16>
    %268 = vector.shape_cast %267 : vector<1x256x256xbf16> to vector<256x256xbf16>
    %c2_81 = arith.constant 2 : index
    %c0_82 = arith.constant 0 : index
    %c0_83 = arith.constant 0 : index
    %269 = vector.load %arg5[%c2_81, %c0_82, %c0_83] : memref<6x1x256xf32, #tpu.memory_space<vmem>>, vector<1x1x256xf32>
    %270 = vector.shape_cast %269 : vector<1x1x256xf32> to vector<1x256xf32>
    %271 = arith.truncf %228 : vector<16x256xf32> to vector<16x256xbf16>
    %cst_84 = arith.constant dense<0.000000e+00> : vector<16x256xf32>
    %272 = tpu.matmul %271, %268, %cst_84 {dimension_numbers = #tpu.dot_dimension_numbers<[1], [0], [0], [1], [0, 0, 1, 1], [], []>} : vector<16x256xbf16>, vector<256x256xbf16>, vector<16x256xf32> -> vector<16x256xf32>
    %273 = vector.broadcast %270 : vector<1x256xf32> to vector<16x256xf32>
    %274 = arith.addf %272, %273 : vector<16x256xf32>
    %275 = arith.truncf %266 : vector<16x256xf32> to vector<16x256xbf16>
    %cst_85 = arith.constant dense<0.000000e+00> : vector<16x256xf32>
    %276 = tpu.matmul %275, %268, %cst_85 {dimension_numbers = #tpu.dot_dimension_numbers<[1], [0], [0], [1], [0, 0, 1, 1], [], []>} : vector<16x256xbf16>, vector<256x256xbf16>, vector<16x256xf32> -> vector<16x256xf32>
    %277 = vector.broadcast %270 : vector<1x256xf32> to vector<16x256xf32>
    %278 = arith.addf %276, %277 : vector<16x256xf32>
    %cst_86 = arith.constant dense<0.000000e+00> : vector<16xf32>
    %279 = vector.multi_reduction <add>, %274, %cst_86 [1] : vector<16x256xf32> to vector<16xf32>
    %280 = vector.shape_cast %279 : vector<16xf32> to vector<16x1xf32>
    %281 = arith.mulf %274, %274 : vector<16x256xf32>
    %cst_87 = arith.constant dense<0.000000e+00> : vector<16xf32>
    %282 = vector.multi_reduction <add>, %281, %cst_87 [1] : vector<16x256xf32> to vector<16xf32>
    %283 = vector.shape_cast %282 : vector<16xf32> to vector<16x1xf32>
    %cst_88 = arith.constant 5.000000e-03 : f32
    %284 = vector.broadcast %cst_88 : f32 to vector<16x1xf32>
    %285 = arith.mulf %280, %284 : vector<16x1xf32>
    %cst_89 = arith.constant 5.000000e-03 : f32
    %286 = vector.broadcast %cst_89 : f32 to vector<16x1xf32>
    %287 = arith.mulf %283, %286 : vector<16x1xf32>
    %288 = arith.mulf %285, %285 : vector<16x1xf32>
    %289 = arith.subf %287, %288 : vector<16x1xf32>
    %290 = vector.broadcast %285 : vector<16x1xf32> to vector<16x256xf32>
    %291 = arith.subf %274, %290 : vector<16x256xf32>
    %cst_90 = arith.constant 9.99999974E-6 : f32
    %292 = vector.broadcast %cst_90 : f32 to vector<16x1xf32>
    %293 = arith.addf %289, %292 : vector<16x1xf32>
    %294 = math.rsqrt %293 : vector<16x1xf32>
    %295 = vector.broadcast %294 : vector<16x1xf32> to vector<16x256xf32>
    %296 = arith.mulf %291, %295 : vector<16x256xf32>
    %297 = vector.broadcast %0 : vector<1x256xf32> to vector<16x256xf32>
    %298 = arith.mulf %296, %297 : vector<16x256xf32>
    %299 = vector.broadcast %1 : vector<1x256xf32> to vector<16x256xf32>
    %300 = arith.addf %298, %299 : vector<16x256xf32>
    %cst_91 = arith.constant 2.000000e+01 : f32
    %301 = vector.broadcast %cst_91 : f32 to vector<16x256xf32>
    %302 = arith.minimumf %300, %301 : vector<16x256xf32>
    %303 = math.exp %302 : vector<16x256xf32>
    %cst_92 = arith.constant 2.000000e+00 : f32
    %304 = vector.broadcast %cst_92 : f32 to vector<16x256xf32>
    %305 = arith.addf %303, %304 : vector<16x256xf32>
    %306 = arith.mulf %303, %305 : vector<16x256xf32>
    %cst_93 = arith.constant 2.000000e+00 : f32
    %307 = vector.broadcast %cst_93 : f32 to vector<16x256xf32>
    %308 = arith.addf %306, %307 : vector<16x256xf32>
    %309 = tpu.reciprocal %308 {approx = true} : vector<16x256xf32> -> vector<16x256xf32>
    %310 = arith.mulf %308, %309 : vector<16x256xf32>
    %cst_94 = arith.constant 2.000000e+00 : f32
    %311 = vector.broadcast %cst_94 : f32 to vector<16x256xf32>
    %312 = arith.subf %311, %310 : vector<16x256xf32>
    %313 = arith.mulf %309, %312 : vector<16x256xf32>
    %314 = arith.addf %300, %300 : vector<16x256xf32>
    %315 = arith.mulf %314, %313 : vector<16x256xf32>
    %316 = arith.subf %300, %315 : vector<16x256xf32>
    %cst_95 = arith.constant dense<0.000000e+00> : vector<16xf32>
    %317 = vector.multi_reduction <add>, %278, %cst_95 [1] : vector<16x256xf32> to vector<16xf32>
    %318 = vector.shape_cast %317 : vector<16xf32> to vector<16x1xf32>
    %319 = arith.mulf %278, %278 : vector<16x256xf32>
    %cst_96 = arith.constant dense<0.000000e+00> : vector<16xf32>
    %320 = vector.multi_reduction <add>, %319, %cst_96 [1] : vector<16x256xf32> to vector<16xf32>
    %321 = vector.shape_cast %320 : vector<16xf32> to vector<16x1xf32>
    %cst_97 = arith.constant 5.000000e-03 : f32
    %322 = vector.broadcast %cst_97 : f32 to vector<16x1xf32>
    %323 = arith.mulf %318, %322 : vector<16x1xf32>
    %cst_98 = arith.constant 5.000000e-03 : f32
    %324 = vector.broadcast %cst_98 : f32 to vector<16x1xf32>
    %325 = arith.mulf %321, %324 : vector<16x1xf32>
    %326 = arith.mulf %323, %323 : vector<16x1xf32>
    %327 = arith.subf %325, %326 : vector<16x1xf32>
    %328 = vector.broadcast %323 : vector<16x1xf32> to vector<16x256xf32>
    %329 = arith.subf %278, %328 : vector<16x256xf32>
    %cst_99 = arith.constant 9.99999974E-6 : f32
    %330 = vector.broadcast %cst_99 : f32 to vector<16x1xf32>
    %331 = arith.addf %327, %330 : vector<16x1xf32>
    %332 = math.rsqrt %331 : vector<16x1xf32>
    %333 = vector.broadcast %332 : vector<16x1xf32> to vector<16x256xf32>
    %334 = arith.mulf %329, %333 : vector<16x256xf32>
    %335 = vector.broadcast %0 : vector<1x256xf32> to vector<16x256xf32>
    %336 = arith.mulf %334, %335 : vector<16x256xf32>
    %337 = vector.broadcast %1 : vector<1x256xf32> to vector<16x256xf32>
    %338 = arith.addf %336, %337 : vector<16x256xf32>
    %cst_100 = arith.constant 2.000000e+01 : f32
    %339 = vector.broadcast %cst_100 : f32 to vector<16x256xf32>
    %340 = arith.minimumf %338, %339 : vector<16x256xf32>
    %341 = math.exp %340 : vector<16x256xf32>
    %cst_101 = arith.constant 2.000000e+00 : f32
    %342 = vector.broadcast %cst_101 : f32 to vector<16x256xf32>
    %343 = arith.addf %341, %342 : vector<16x256xf32>
    %344 = arith.mulf %341, %343 : vector<16x256xf32>
    %cst_102 = arith.constant 2.000000e+00 : f32
    %345 = vector.broadcast %cst_102 : f32 to vector<16x256xf32>
    %346 = arith.addf %344, %345 : vector<16x256xf32>
    %347 = tpu.reciprocal %346 {approx = true} : vector<16x256xf32> -> vector<16x256xf32>
    %348 = arith.mulf %346, %347 : vector<16x256xf32>
    %cst_103 = arith.constant 2.000000e+00 : f32
    %349 = vector.broadcast %cst_103 : f32 to vector<16x256xf32>
    %350 = arith.subf %349, %348 : vector<16x256xf32>
    %351 = arith.mulf %347, %350 : vector<16x256xf32>
    %352 = arith.addf %338, %338 : vector<16x256xf32>
    %353 = arith.mulf %352, %351 : vector<16x256xf32>
    %354 = arith.subf %338, %353 : vector<16x256xf32>
    %c3 = arith.constant 3 : index
    %c0_104 = arith.constant 0 : index
    %c0_105 = arith.constant 0 : index
    %355 = vector.load %arg4[%c3, %c0_104, %c0_105] : memref<6x256x256xbf16, #tpu.memory_space<vmem>>, vector<1x256x256xbf16>
    %356 = vector.shape_cast %355 : vector<1x256x256xbf16> to vector<256x256xbf16>
    %c3_106 = arith.constant 3 : index
    %c0_107 = arith.constant 0 : index
    %c0_108 = arith.constant 0 : index
    %357 = vector.load %arg5[%c3_106, %c0_107, %c0_108] : memref<6x1x256xf32, #tpu.memory_space<vmem>>, vector<1x1x256xf32>
    %358 = vector.shape_cast %357 : vector<1x1x256xf32> to vector<1x256xf32>
    %359 = arith.truncf %316 : vector<16x256xf32> to vector<16x256xbf16>
    %cst_109 = arith.constant dense<0.000000e+00> : vector<16x256xf32>
    %360 = tpu.matmul %359, %356, %cst_109 {dimension_numbers = #tpu.dot_dimension_numbers<[1], [0], [0], [1], [0, 0, 1, 1], [], []>} : vector<16x256xbf16>, vector<256x256xbf16>, vector<16x256xf32> -> vector<16x256xf32>
    %361 = vector.broadcast %358 : vector<1x256xf32> to vector<16x256xf32>
    %362 = arith.addf %360, %361 : vector<16x256xf32>
    %363 = arith.truncf %354 : vector<16x256xf32> to vector<16x256xbf16>
    %cst_110 = arith.constant dense<0.000000e+00> : vector<16x256xf32>
    %364 = tpu.matmul %363, %356, %cst_110 {dimension_numbers = #tpu.dot_dimension_numbers<[1], [0], [0], [1], [0, 0, 1, 1], [], []>} : vector<16x256xbf16>, vector<256x256xbf16>, vector<16x256xf32> -> vector<16x256xf32>
    %365 = vector.broadcast %358 : vector<1x256xf32> to vector<16x256xf32>
    %366 = arith.addf %364, %365 : vector<16x256xf32>
    %cst_111 = arith.constant dense<0.000000e+00> : vector<16xf32>
    %367 = vector.multi_reduction <add>, %362, %cst_111 [1] : vector<16x256xf32> to vector<16xf32>
    %368 = vector.shape_cast %367 : vector<16xf32> to vector<16x1xf32>
    %369 = arith.mulf %362, %362 : vector<16x256xf32>
    %cst_112 = arith.constant dense<0.000000e+00> : vector<16xf32>
    %370 = vector.multi_reduction <add>, %369, %cst_112 [1] : vector<16x256xf32> to vector<16xf32>
    %371 = vector.shape_cast %370 : vector<16xf32> to vector<16x1xf32>
    %cst_113 = arith.constant 5.000000e-03 : f32
    %372 = vector.broadcast %cst_113 : f32 to vector<16x1xf32>
    %373 = arith.mulf %368, %372 : vector<16x1xf32>
    %cst_114 = arith.constant 5.000000e-03 : f32
    %374 = vector.broadcast %cst_114 : f32 to vector<16x1xf32>
    %375 = arith.mulf %371, %374 : vector<16x1xf32>
    %376 = arith.mulf %373, %373 : vector<16x1xf32>
    %377 = arith.subf %375, %376 : vector<16x1xf32>
    %378 = vector.broadcast %373 : vector<16x1xf32> to vector<16x256xf32>
    %379 = arith.subf %362, %378 : vector<16x256xf32>
    %cst_115 = arith.constant 9.99999974E-6 : f32
    %380 = vector.broadcast %cst_115 : f32 to vector<16x1xf32>
    %381 = arith.addf %377, %380 : vector<16x1xf32>
    %382 = math.rsqrt %381 : vector<16x1xf32>
    %383 = vector.broadcast %382 : vector<16x1xf32> to vector<16x256xf32>
    %384 = arith.mulf %379, %383 : vector<16x256xf32>
    %385 = vector.broadcast %0 : vector<1x256xf32> to vector<16x256xf32>
    %386 = arith.mulf %384, %385 : vector<16x256xf32>
    %387 = vector.broadcast %1 : vector<1x256xf32> to vector<16x256xf32>
    %388 = arith.addf %386, %387 : vector<16x256xf32>
    %cst_116 = arith.constant 2.000000e+01 : f32
    %389 = vector.broadcast %cst_116 : f32 to vector<16x256xf32>
    %390 = arith.minimumf %388, %389 : vector<16x256xf32>
    %391 = math.exp %390 : vector<16x256xf32>
    %cst_117 = arith.constant 2.000000e+00 : f32
    %392 = vector.broadcast %cst_117 : f32 to vector<16x256xf32>
    %393 = arith.addf %391, %392 : vector<16x256xf32>
    %394 = arith.mulf %391, %393 : vector<16x256xf32>
    %cst_118 = arith.constant 2.000000e+00 : f32
    %395 = vector.broadcast %cst_118 : f32 to vector<16x256xf32>
    %396 = arith.addf %394, %395 : vector<16x256xf32>
    %397 = tpu.reciprocal %396 {approx = true} : vector<16x256xf32> -> vector<16x256xf32>
    %398 = arith.mulf %396, %397 : vector<16x256xf32>
    %cst_119 = arith.constant 2.000000e+00 : f32
    %399 = vector.broadcast %cst_119 : f32 to vector<16x256xf32>
    %400 = arith.subf %399, %398 : vector<16x256xf32>
    %401 = arith.mulf %397, %400 : vector<16x256xf32>
    %402 = arith.addf %388, %388 : vector<16x256xf32>
    %403 = arith.mulf %402, %401 : vector<16x256xf32>
    %404 = arith.subf %388, %403 : vector<16x256xf32>
    %cst_120 = arith.constant dense<0.000000e+00> : vector<16xf32>
    %405 = vector.multi_reduction <add>, %366, %cst_120 [1] : vector<16x256xf32> to vector<16xf32>
    %406 = vector.shape_cast %405 : vector<16xf32> to vector<16x1xf32>
    %407 = arith.mulf %366, %366 : vector<16x256xf32>
    %cst_121 = arith.constant dense<0.000000e+00> : vector<16xf32>
    %408 = vector.multi_reduction <add>, %407, %cst_121 [1] : vector<16x256xf32> to vector<16xf32>
    %409 = vector.shape_cast %408 : vector<16xf32> to vector<16x1xf32>
    %cst_122 = arith.constant 5.000000e-03 : f32
    %410 = vector.broadcast %cst_122 : f32 to vector<16x1xf32>
    %411 = arith.mulf %406, %410 : vector<16x1xf32>
    %cst_123 = arith.constant 5.000000e-03 : f32
    %412 = vector.broadcast %cst_123 : f32 to vector<16x1xf32>
    %413 = arith.mulf %409, %412 : vector<16x1xf32>
    %414 = arith.mulf %411, %411 : vector<16x1xf32>
    %415 = arith.subf %413, %414 : vector<16x1xf32>
    %416 = vector.broadcast %411 : vector<16x1xf32> to vector<16x256xf32>
    %417 = arith.subf %366, %416 : vector<16x256xf32>
    %cst_124 = arith.constant 9.99999974E-6 : f32
    %418 = vector.broadcast %cst_124 : f32 to vector<16x1xf32>
    %419 = arith.addf %415, %418 : vector<16x1xf32>
    %420 = math.rsqrt %419 : vector<16x1xf32>
    %421 = vector.broadcast %420 : vector<16x1xf32> to vector<16x256xf32>
    %422 = arith.mulf %417, %421 : vector<16x256xf32>
    %423 = vector.broadcast %0 : vector<1x256xf32> to vector<16x256xf32>
    %424 = arith.mulf %422, %423 : vector<16x256xf32>
    %425 = vector.broadcast %1 : vector<1x256xf32> to vector<16x256xf32>
    %426 = arith.addf %424, %425 : vector<16x256xf32>
    %cst_125 = arith.constant 2.000000e+01 : f32
    %427 = vector.broadcast %cst_125 : f32 to vector<16x256xf32>
    %428 = arith.minimumf %426, %427 : vector<16x256xf32>
    %429 = math.exp %428 : vector<16x256xf32>
    %cst_126 = arith.constant 2.000000e+00 : f32
    %430 = vector.broadcast %cst_126 : f32 to vector<16x256xf32>
    %431 = arith.addf %429, %430 : vector<16x256xf32>
    %432 = arith.mulf %429, %431 : vector<16x256xf32>
    %cst_127 = arith.constant 2.000000e+00 : f32
    %433 = vector.broadcast %cst_127 : f32 to vector<16x256xf32>
    %434 = arith.addf %432, %433 : vector<16x256xf32>
    %435 = tpu.reciprocal %434 {approx = true} : vector<16x256xf32> -> vector<16x256xf32>
    %436 = arith.mulf %434, %435 : vector<16x256xf32>
    %cst_128 = arith.constant 2.000000e+00 : f32
    %437 = vector.broadcast %cst_128 : f32 to vector<16x256xf32>
    %438 = arith.subf %437, %436 : vector<16x256xf32>
    %439 = arith.mulf %435, %438 : vector<16x256xf32>
    %440 = arith.addf %426, %426 : vector<16x256xf32>
    %441 = arith.mulf %440, %439 : vector<16x256xf32>
    %442 = arith.subf %426, %441 : vector<16x256xf32>
    %c4 = arith.constant 4 : index
    %c0_129 = arith.constant 0 : index
    %c0_130 = arith.constant 0 : index
    %443 = vector.load %arg4[%c4, %c0_129, %c0_130] : memref<6x256x256xbf16, #tpu.memory_space<vmem>>, vector<1x256x256xbf16>
    %444 = vector.shape_cast %443 : vector<1x256x256xbf16> to vector<256x256xbf16>
    %c4_131 = arith.constant 4 : index
    %c0_132 = arith.constant 0 : index
    %c0_133 = arith.constant 0 : index
    %445 = vector.load %arg5[%c4_131, %c0_132, %c0_133] : memref<6x1x256xf32, #tpu.memory_space<vmem>>, vector<1x1x256xf32>
    %446 = vector.shape_cast %445 : vector<1x1x256xf32> to vector<1x256xf32>
    %447 = arith.truncf %404 : vector<16x256xf32> to vector<16x256xbf16>
    %cst_134 = arith.constant dense<0.000000e+00> : vector<16x256xf32>
    %448 = tpu.matmul %447, %444, %cst_134 {dimension_numbers = #tpu.dot_dimension_numbers<[1], [0], [0], [1], [0, 0, 1, 1], [], []>} : vector<16x256xbf16>, vector<256x256xbf16>, vector<16x256xf32> -> vector<16x256xf32>
    %449 = vector.broadcast %446 : vector<1x256xf32> to vector<16x256xf32>
    %450 = arith.addf %448, %449 : vector<16x256xf32>
    %451 = arith.truncf %442 : vector<16x256xf32> to vector<16x256xbf16>
    %cst_135 = arith.constant dense<0.000000e+00> : vector<16x256xf32>
    %452 = tpu.matmul %451, %444, %cst_135 {dimension_numbers = #tpu.dot_dimension_numbers<[1], [0], [0], [1], [0, 0, 1, 1], [], []>} : vector<16x256xbf16>, vector<256x256xbf16>, vector<16x256xf32> -> vector<16x256xf32>
    %453 = vector.broadcast %446 : vector<1x256xf32> to vector<16x256xf32>
    %454 = arith.addf %452, %453 : vector<16x256xf32>
    %cst_136 = arith.constant dense<0.000000e+00> : vector<16xf32>
    %455 = vector.multi_reduction <add>, %450, %cst_136 [1] : vector<16x256xf32> to vector<16xf32>
    %456 = vector.shape_cast %455 : vector<16xf32> to vector<16x1xf32>
    %457 = arith.mulf %450, %450 : vector<16x256xf32>
    %cst_137 = arith.constant dense<0.000000e+00> : vector<16xf32>
    %458 = vector.multi_reduction <add>, %457, %cst_137 [1] : vector<16x256xf32> to vector<16xf32>
    %459 = vector.shape_cast %458 : vector<16xf32> to vector<16x1xf32>
    %cst_138 = arith.constant 5.000000e-03 : f32
    %460 = vector.broadcast %cst_138 : f32 to vector<16x1xf32>
    %461 = arith.mulf %456, %460 : vector<16x1xf32>
    %cst_139 = arith.constant 5.000000e-03 : f32
    %462 = vector.broadcast %cst_139 : f32 to vector<16x1xf32>
    %463 = arith.mulf %459, %462 : vector<16x1xf32>
    %464 = arith.mulf %461, %461 : vector<16x1xf32>
    %465 = arith.subf %463, %464 : vector<16x1xf32>
    %466 = vector.broadcast %461 : vector<16x1xf32> to vector<16x256xf32>
    %467 = arith.subf %450, %466 : vector<16x256xf32>
    %cst_140 = arith.constant 9.99999974E-6 : f32
    %468 = vector.broadcast %cst_140 : f32 to vector<16x1xf32>
    %469 = arith.addf %465, %468 : vector<16x1xf32>
    %470 = math.rsqrt %469 : vector<16x1xf32>
    %471 = vector.broadcast %470 : vector<16x1xf32> to vector<16x256xf32>
    %472 = arith.mulf %467, %471 : vector<16x256xf32>
    %473 = vector.broadcast %0 : vector<1x256xf32> to vector<16x256xf32>
    %474 = arith.mulf %472, %473 : vector<16x256xf32>
    %475 = vector.broadcast %1 : vector<1x256xf32> to vector<16x256xf32>
    %476 = arith.addf %474, %475 : vector<16x256xf32>
    %cst_141 = arith.constant 2.000000e+01 : f32
    %477 = vector.broadcast %cst_141 : f32 to vector<16x256xf32>
    %478 = arith.minimumf %476, %477 : vector<16x256xf32>
    %479 = math.exp %478 : vector<16x256xf32>
    %cst_142 = arith.constant 2.000000e+00 : f32
    %480 = vector.broadcast %cst_142 : f32 to vector<16x256xf32>
    %481 = arith.addf %479, %480 : vector<16x256xf32>
    %482 = arith.mulf %479, %481 : vector<16x256xf32>
    %cst_143 = arith.constant 2.000000e+00 : f32
    %483 = vector.broadcast %cst_143 : f32 to vector<16x256xf32>
    %484 = arith.addf %482, %483 : vector<16x256xf32>
    %485 = tpu.reciprocal %484 {approx = true} : vector<16x256xf32> -> vector<16x256xf32>
    %486 = arith.mulf %484, %485 : vector<16x256xf32>
    %cst_144 = arith.constant 2.000000e+00 : f32
    %487 = vector.broadcast %cst_144 : f32 to vector<16x256xf32>
    %488 = arith.subf %487, %486 : vector<16x256xf32>
    %489 = arith.mulf %485, %488 : vector<16x256xf32>
    %490 = arith.addf %476, %476 : vector<16x256xf32>
    %491 = arith.mulf %490, %489 : vector<16x256xf32>
    %492 = arith.subf %476, %491 : vector<16x256xf32>
    %cst_145 = arith.constant dense<0.000000e+00> : vector<16xf32>
    %493 = vector.multi_reduction <add>, %454, %cst_145 [1] : vector<16x256xf32> to vector<16xf32>
    %494 = vector.shape_cast %493 : vector<16xf32> to vector<16x1xf32>
    %495 = arith.mulf %454, %454 : vector<16x256xf32>
    %cst_146 = arith.constant dense<0.000000e+00> : vector<16xf32>
    %496 = vector.multi_reduction <add>, %495, %cst_146 [1] : vector<16x256xf32> to vector<16xf32>
    %497 = vector.shape_cast %496 : vector<16xf32> to vector<16x1xf32>
    %cst_147 = arith.constant 5.000000e-03 : f32
    %498 = vector.broadcast %cst_147 : f32 to vector<16x1xf32>
    %499 = arith.mulf %494, %498 : vector<16x1xf32>
    %cst_148 = arith.constant 5.000000e-03 : f32
    %500 = vector.broadcast %cst_148 : f32 to vector<16x1xf32>
    %501 = arith.mulf %497, %500 : vector<16x1xf32>
    %502 = arith.mulf %499, %499 : vector<16x1xf32>
    %503 = arith.subf %501, %502 : vector<16x1xf32>
    %504 = vector.broadcast %499 : vector<16x1xf32> to vector<16x256xf32>
    %505 = arith.subf %454, %504 : vector<16x256xf32>
    %cst_149 = arith.constant 9.99999974E-6 : f32
    %506 = vector.broadcast %cst_149 : f32 to vector<16x1xf32>
    %507 = arith.addf %503, %506 : vector<16x1xf32>
    %508 = math.rsqrt %507 : vector<16x1xf32>
    %509 = vector.broadcast %508 : vector<16x1xf32> to vector<16x256xf32>
    %510 = arith.mulf %505, %509 : vector<16x256xf32>
    %511 = vector.broadcast %0 : vector<1x256xf32> to vector<16x256xf32>
    %512 = arith.mulf %510, %511 : vector<16x256xf32>
    %513 = vector.broadcast %1 : vector<1x256xf32> to vector<16x256xf32>
    %514 = arith.addf %512, %513 : vector<16x256xf32>
    %cst_150 = arith.constant 2.000000e+01 : f32
    %515 = vector.broadcast %cst_150 : f32 to vector<16x256xf32>
    %516 = arith.minimumf %514, %515 : vector<16x256xf32>
    %517 = math.exp %516 : vector<16x256xf32>
    %cst_151 = arith.constant 2.000000e+00 : f32
    %518 = vector.broadcast %cst_151 : f32 to vector<16x256xf32>
    %519 = arith.addf %517, %518 : vector<16x256xf32>
    %520 = arith.mulf %517, %519 : vector<16x256xf32>
    %cst_152 = arith.constant 2.000000e+00 : f32
    %521 = vector.broadcast %cst_152 : f32 to vector<16x256xf32>
    %522 = arith.addf %520, %521 : vector<16x256xf32>
    %523 = tpu.reciprocal %522 {approx = true} : vector<16x256xf32> -> vector<16x256xf32>
    %524 = arith.mulf %522, %523 : vector<16x256xf32>
    %cst_153 = arith.constant 2.000000e+00 : f32
    %525 = vector.broadcast %cst_153 : f32 to vector<16x256xf32>
    %526 = arith.subf %525, %524 : vector<16x256xf32>
    %527 = arith.mulf %523, %526 : vector<16x256xf32>
    %528 = arith.addf %514, %514 : vector<16x256xf32>
    %529 = arith.mulf %528, %527 : vector<16x256xf32>
    %530 = arith.subf %514, %529 : vector<16x256xf32>
    %c5 = arith.constant 5 : index
    %c0_154 = arith.constant 0 : index
    %c0_155 = arith.constant 0 : index
    %531 = vector.load %arg4[%c5, %c0_154, %c0_155] : memref<6x256x256xbf16, #tpu.memory_space<vmem>>, vector<1x256x256xbf16>
    %532 = vector.shape_cast %531 : vector<1x256x256xbf16> to vector<256x256xbf16>
    %c5_156 = arith.constant 5 : index
    %c0_157 = arith.constant 0 : index
    %c0_158 = arith.constant 0 : index
    %533 = vector.load %arg5[%c5_156, %c0_157, %c0_158] : memref<6x1x256xf32, #tpu.memory_space<vmem>>, vector<1x1x256xf32>
    %534 = vector.shape_cast %533 : vector<1x1x256xf32> to vector<1x256xf32>
    %535 = arith.truncf %492 : vector<16x256xf32> to vector<16x256xbf16>
    %cst_159 = arith.constant dense<0.000000e+00> : vector<16x256xf32>
    %536 = tpu.matmul %535, %532, %cst_159 {dimension_numbers = #tpu.dot_dimension_numbers<[1], [0], [0], [1], [0, 0, 1, 1], [], []>} : vector<16x256xbf16>, vector<256x256xbf16>, vector<16x256xf32> -> vector<16x256xf32>
    %537 = vector.broadcast %534 : vector<1x256xf32> to vector<16x256xf32>
    %538 = arith.addf %536, %537 : vector<16x256xf32>
    %539 = arith.truncf %530 : vector<16x256xf32> to vector<16x256xbf16>
    %cst_160 = arith.constant dense<0.000000e+00> : vector<16x256xf32>
    %540 = tpu.matmul %539, %532, %cst_160 {dimension_numbers = #tpu.dot_dimension_numbers<[1], [0], [0], [1], [0, 0, 1, 1], [], []>} : vector<16x256xbf16>, vector<256x256xbf16>, vector<16x256xf32> -> vector<16x256xf32>
    %541 = vector.broadcast %534 : vector<1x256xf32> to vector<16x256xf32>
    %542 = arith.addf %540, %541 : vector<16x256xf32>
    %cst_161 = arith.constant dense<0.000000e+00> : vector<16xf32>
    %543 = vector.multi_reduction <add>, %538, %cst_161 [1] : vector<16x256xf32> to vector<16xf32>
    %544 = vector.shape_cast %543 : vector<16xf32> to vector<16x1xf32>
    %545 = arith.mulf %538, %538 : vector<16x256xf32>
    %cst_162 = arith.constant dense<0.000000e+00> : vector<16xf32>
    %546 = vector.multi_reduction <add>, %545, %cst_162 [1] : vector<16x256xf32> to vector<16xf32>
    %547 = vector.shape_cast %546 : vector<16xf32> to vector<16x1xf32>
    %cst_163 = arith.constant 5.000000e-03 : f32
    %548 = vector.broadcast %cst_163 : f32 to vector<16x1xf32>
    %549 = arith.mulf %544, %548 : vector<16x1xf32>
    %cst_164 = arith.constant 5.000000e-03 : f32
    %550 = vector.broadcast %cst_164 : f32 to vector<16x1xf32>
    %551 = arith.mulf %547, %550 : vector<16x1xf32>
    %552 = arith.mulf %549, %549 : vector<16x1xf32>
    %553 = arith.subf %551, %552 : vector<16x1xf32>
    %554 = vector.broadcast %549 : vector<16x1xf32> to vector<16x256xf32>
    %555 = arith.subf %538, %554 : vector<16x256xf32>
    %cst_165 = arith.constant 9.99999974E-6 : f32
    %556 = vector.broadcast %cst_165 : f32 to vector<16x1xf32>
    %557 = arith.addf %553, %556 : vector<16x1xf32>
    %558 = math.rsqrt %557 : vector<16x1xf32>
    %559 = vector.broadcast %558 : vector<16x1xf32> to vector<16x256xf32>
    %560 = arith.mulf %555, %559 : vector<16x256xf32>
    %561 = vector.broadcast %0 : vector<1x256xf32> to vector<16x256xf32>
    %562 = arith.mulf %560, %561 : vector<16x256xf32>
    %563 = vector.broadcast %1 : vector<1x256xf32> to vector<16x256xf32>
    %564 = arith.addf %562, %563 : vector<16x256xf32>
    %cst_166 = arith.constant 2.000000e+01 : f32
    %565 = vector.broadcast %cst_166 : f32 to vector<16x256xf32>
    %566 = arith.minimumf %564, %565 : vector<16x256xf32>
    %567 = math.exp %566 : vector<16x256xf32>
    %cst_167 = arith.constant 2.000000e+00 : f32
    %568 = vector.broadcast %cst_167 : f32 to vector<16x256xf32>
    %569 = arith.addf %567, %568 : vector<16x256xf32>
    %570 = arith.mulf %567, %569 : vector<16x256xf32>
    %cst_168 = arith.constant 2.000000e+00 : f32
    %571 = vector.broadcast %cst_168 : f32 to vector<16x256xf32>
    %572 = arith.addf %570, %571 : vector<16x256xf32>
    %573 = tpu.reciprocal %572 {approx = true} : vector<16x256xf32> -> vector<16x256xf32>
    %574 = arith.mulf %572, %573 : vector<16x256xf32>
    %cst_169 = arith.constant 2.000000e+00 : f32
    %575 = vector.broadcast %cst_169 : f32 to vector<16x256xf32>
    %576 = arith.subf %575, %574 : vector<16x256xf32>
    %577 = arith.mulf %573, %576 : vector<16x256xf32>
    %578 = arith.addf %564, %564 : vector<16x256xf32>
    %579 = arith.mulf %578, %577 : vector<16x256xf32>
    %580 = arith.subf %564, %579 : vector<16x256xf32>
    %cst_170 = arith.constant dense<0.000000e+00> : vector<16xf32>
    %581 = vector.multi_reduction <add>, %542, %cst_170 [1] : vector<16x256xf32> to vector<16xf32>
    %582 = vector.shape_cast %581 : vector<16xf32> to vector<16x1xf32>
    %583 = arith.mulf %542, %542 : vector<16x256xf32>
    %cst_171 = arith.constant dense<0.000000e+00> : vector<16xf32>
    %584 = vector.multi_reduction <add>, %583, %cst_171 [1] : vector<16x256xf32> to vector<16xf32>
    %585 = vector.shape_cast %584 : vector<16xf32> to vector<16x1xf32>
    %cst_172 = arith.constant 5.000000e-03 : f32
    %586 = vector.broadcast %cst_172 : f32 to vector<16x1xf32>
    %587 = arith.mulf %582, %586 : vector<16x1xf32>
    %cst_173 = arith.constant 5.000000e-03 : f32
    %588 = vector.broadcast %cst_173 : f32 to vector<16x1xf32>
    %589 = arith.mulf %585, %588 : vector<16x1xf32>
    %590 = arith.mulf %587, %587 : vector<16x1xf32>
    %591 = arith.subf %589, %590 : vector<16x1xf32>
    %592 = vector.broadcast %587 : vector<16x1xf32> to vector<16x256xf32>
    %593 = arith.subf %542, %592 : vector<16x256xf32>
    %cst_174 = arith.constant 9.99999974E-6 : f32
    %594 = vector.broadcast %cst_174 : f32 to vector<16x1xf32>
    %595 = arith.addf %591, %594 : vector<16x1xf32>
    %596 = math.rsqrt %595 : vector<16x1xf32>
    %597 = vector.broadcast %596 : vector<16x1xf32> to vector<16x256xf32>
    %598 = arith.mulf %593, %597 : vector<16x256xf32>
    %599 = vector.broadcast %0 : vector<1x256xf32> to vector<16x256xf32>
    %600 = arith.mulf %598, %599 : vector<16x256xf32>
    %601 = vector.broadcast %1 : vector<1x256xf32> to vector<16x256xf32>
    %602 = arith.addf %600, %601 : vector<16x256xf32>
    %cst_175 = arith.constant 2.000000e+01 : f32
    %603 = vector.broadcast %cst_175 : f32 to vector<16x256xf32>
    %604 = arith.minimumf %602, %603 : vector<16x256xf32>
    %605 = math.exp %604 : vector<16x256xf32>
    %cst_176 = arith.constant 2.000000e+00 : f32
    %606 = vector.broadcast %cst_176 : f32 to vector<16x256xf32>
    %607 = arith.addf %605, %606 : vector<16x256xf32>
    %608 = arith.mulf %605, %607 : vector<16x256xf32>
    %cst_177 = arith.constant 2.000000e+00 : f32
    %609 = vector.broadcast %cst_177 : f32 to vector<16x256xf32>
    %610 = arith.addf %608, %609 : vector<16x256xf32>
    %611 = tpu.reciprocal %610 {approx = true} : vector<16x256xf32> -> vector<16x256xf32>
    %612 = arith.mulf %610, %611 : vector<16x256xf32>
    %cst_178 = arith.constant 2.000000e+00 : f32
    %613 = vector.broadcast %cst_178 : f32 to vector<16x256xf32>
    %614 = arith.subf %613, %612 : vector<16x256xf32>
    %615 = arith.mulf %611, %614 : vector<16x256xf32>
    %616 = arith.addf %602, %602 : vector<16x256xf32>
    %617 = arith.mulf %616, %615 : vector<16x256xf32>
    %618 = arith.subf %602, %617 : vector<16x256xf32>
    %c0_179 = arith.constant 0 : index
    %c0_180 = arith.constant 0 : index
    %619 = vector.load %arg8[%c0_179, %c0_180] : memref<1x256xf32, #tpu.memory_space<vmem>>, vector<1x256xf32>
    %c0_181 = arith.constant 0 : index
    %c0_182 = arith.constant 0 : index
    %620 = vector.load %arg9[%c0_181, %c0_182] : memref<1x1xf32, #tpu.memory_space<vmem>>, vector<1x1xf32>
    %621 = vector.broadcast %619 : vector<1x256xf32> to vector<16x256xf32>
    %622 = arith.mulf %580, %621 : vector<16x256xf32>
    %cst_183 = arith.constant dense<0.000000e+00> : vector<16xf32>
    %623 = vector.multi_reduction <add>, %622, %cst_183 [1] : vector<16x256xf32> to vector<16xf32>
    %624 = vector.shape_cast %623 : vector<16xf32> to vector<16x1xf32>
    %625 = vector.broadcast %620 : vector<1x1xf32> to vector<16x1xf32>
    %626 = arith.addf %624, %625 : vector<16x1xf32>
    %627 = vector.broadcast %619 : vector<1x256xf32> to vector<16x256xf32>
    %628 = arith.mulf %618, %627 : vector<16x256xf32>
    %cst_184 = arith.constant dense<0.000000e+00> : vector<16xf32>
    %629 = vector.multi_reduction <add>, %628, %cst_184 [1] : vector<16x256xf32> to vector<16xf32>
    %630 = vector.shape_cast %629 : vector<16xf32> to vector<16x1xf32>
    %631 = vector.broadcast %620 : vector<1x1xf32> to vector<16x1xf32>
    %632 = arith.addf %630, %631 : vector<16x1xf32>
    %cst_185 = arith.constant 0.000000e+00 : f32
    %633 = vector.broadcast %cst_185 : f32 to vector<16x1xf32>
    %634 = arith.maximumf %626, %633 : vector<16x1xf32>
    %635 = vector.broadcast %cst_185 : f32 to vector<16x1xf32>
    %636 = arith.subf %626, %635 : vector<16x1xf32>
    %637 = arith.cmpf one, %636, %636 : vector<16x1xf32>
    %638 = vector.broadcast %cst_185 : f32 to vector<16x1xf32>
    %639 = arith.addf %626, %638 : vector<16x1xf32>
    %640 = math.absf %636 : vector<16x1xf32>
    %cst_186 = arith.constant 0.000000e+00 : f32
    %641 = vector.broadcast %cst_186 : f32 to vector<16x1xf32>
    %642 = arith.subf %641, %640 : vector<16x1xf32>
    %643 = math.exp %642 : vector<16x1xf32>
    %644 = math.log1p %643 : vector<16x1xf32>
    %645 = arith.addf %634, %644 : vector<16x1xf32>
    %646 = arith.select %637, %639, %645 : vector<16x1xi1>, vector<16x1xf32>
    %c0_187 = arith.constant 0 : index
    %c0_188 = arith.constant 0 : index
    %647 = vector.load %arg10[%c0_187, %c0_188] : memref<32x1xf32, #tpu.memory_space<vmem>>, vector<16x1xf32>
    tpu.vector_store %arg10[%c0_187, %c0_188], %646 {strides = array<i32>} : memref<32x1xf32, #tpu.memory_space<vmem>>, vector<16x1xf32>,
    %cst_189 = arith.constant 0.000000e+00 : f32
    %648 = vector.broadcast %cst_189 : f32 to vector<16x1xf32>
    %649 = arith.maximumf %632, %648 : vector<16x1xf32>
    %650 = vector.broadcast %cst_189 : f32 to vector<16x1xf32>
    %651 = arith.subf %632, %650 : vector<16x1xf32>
    %652 = arith.cmpf one, %651, %651 : vector<16x1xf32>
    %653 = vector.broadcast %cst_189 : f32 to vector<16x1xf32>
    %654 = arith.addf %632, %653 : vector<16x1xf32>
    %655 = math.absf %651 : vector<16x1xf32>
    %cst_190 = arith.constant 0.000000e+00 : f32
    %656 = vector.broadcast %cst_190 : f32 to vector<16x1xf32>
    %657 = arith.subf %656, %655 : vector<16x1xf32>
    %658 = math.exp %657 : vector<16x1xf32>
    %659 = math.log1p %658 : vector<16x1xf32>
    %660 = arith.addf %649, %659 : vector<16x1xf32>
    %661 = arith.select %652, %654, %660 : vector<16x1xi1>, vector<16x1xf32>
    %c16 = arith.constant 16 : index
    %c0_191 = arith.constant 0 : index
    %662 = vector.load %arg10[%c16, %c0_191] : memref<32x1xf32, #tpu.memory_space<vmem>>, vector<16x1xf32>
    tpu.vector_store %arg10[%c16, %c0_191], %661 {strides = array<i32>} : memref<32x1xf32, #tpu.memory_space<vmem>>, vector<16x1xf32>,
    return
  }
  func.func @transform_0(%arg0: i32) -> (i32, i32) {
    %c0_i32 = arith.constant 0 : i32
    %c0_i32_0 = arith.constant 0 : i32
    return %arg0, %c0_i32 : i32, i32
  }
  func.func @transform_1(%arg0: i32) -> (i32, i32) {
    %c0_i32 = arith.constant 0 : i32
    %c0_i32_0 = arith.constant 0 : i32
    %c0_i32_1 = arith.constant 0 : i32
    return %c0_i32, %c0_i32_0 : i32, i32
  }
  func.func @transform_2(%arg0: i32) -> (i32, i32) {
    %c0_i32 = arith.constant 0 : i32
    %c0_i32_0 = arith.constant 0 : i32
    %c0_i32_1 = arith.constant 0 : i32
    return %c0_i32, %c0_i32_0 : i32, i32
  }
  func.func @transform_3(%arg0: i32) -> (i32, i32, i32) {
    %c0_i32 = arith.constant 0 : i32
    %c0_i32_0 = arith.constant 0 : i32
    %c0_i32_1 = arith.constant 0 : i32
    %c0_i32_2 = arith.constant 0 : i32
    return %c0_i32, %c0_i32_0, %c0_i32_1 : i32, i32, i32
  }
  func.func @transform_4(%arg0: i32) -> (i32, i32, i32) {
    %c0_i32 = arith.constant 0 : i32
    %c0_i32_0 = arith.constant 0 : i32
    %c0_i32_1 = arith.constant 0 : i32
    %c0_i32_2 = arith.constant 0 : i32
    return %c0_i32, %c0_i32_0, %c0_i32_1 : i32, i32, i32
  }
  func.func @transform_5(%arg0: i32) -> (i32, i32) {
    %c0_i32 = arith.constant 0 : i32
    %c0_i32_0 = arith.constant 0 : i32
    %c0_i32_1 = arith.constant 0 : i32
    return %c0_i32, %c0_i32_0 : i32, i32
  }
  func.func @transform_6(%arg0: i32) -> (i32, i32) {
    %c0_i32 = arith.constant 0 : i32
    %c0_i32_0 = arith.constant 0 : i32
    %c0_i32_1 = arith.constant 0 : i32
    return %c0_i32, %c0_i32_0 : i32, i32
  }
  func.func @transform_7(%arg0: i32) -> (i32, i32) {
    %c0_i32 = arith.constant 0 : i32
    %c0_i32_0 = arith.constant 0 : i32
    %c0_i32_1 = arith.constant 0 : i32
    return %c0_i32, %c0_i32_0 : i32, i32
  }
  func.func @transform_8(%arg0: i32) -> (i32, i32) {
    %c0_i32 = arith.constant 0 : i32
    %c0_i32_0 = arith.constant 0 : i32
    %c0_i32_1 = arith.constant 0 : i32
    return %c0_i32, %c0_i32_0 : i32, i32
  }
  func.func @transform_9(%arg0: i32) -> (i32, i32) {
    %c0_i32 = arith.constant 0 : i32
    %c0_i32_0 = arith.constant 0 : i32
    return %arg0, %c0_i32 : i32, i32
  }
}

</mosaic_0001>

<llo_original>
// kernel: cann_forward.1
$region0: #{cann_forward.1}
  #allocation0 [shape = 'u32[]', space=smem, size = 0x4, offset = 0x4, fixed_abs, tag = 'smem constant byte address 0x4 - core index']
  #allocation1 [shape = 'u32[144,128]{1,0:T(1,128)}', space=vmem, size = 0x12000, scoped, tag = 'internal scratch']
  #allocation2 [shape = 'f32[1,1]{1,0:T(1,128)S(1)}', space=vmem, size = 0x200, scoped, tag = 'scoped memory for cann_forward.1']
  %s0 = inlined_call_operand.vmem [shape: f32[64,17], index: 0, kind: input, shape index: {}]
  %s1 = inlined_call_operand.vmem [shape: bf16[17,256], index: 1, kind: input, shape index: {}]
  %s2 = inlined_call_operand.vmem [shape: f32[1,256], index: 2, kind: input, shape index: {}]
  %s3 = inlined_call_operand.hbm [shape: bf16[6,256,256], index: 3, kind: input, shape index: {}]
  %s4 = inlined_call_operand.vmem [shape: f32[6,1,256], index: 4, kind: input, shape index: {}]
  %s5 = inlined_call_operand.vmem [shape: f32[1,256], index: 5, kind: input, shape index: {}]
  %s6 = inlined_call_operand.vmem [shape: f32[1,256], index: 6, kind: input, shape index: {}]
  %s7 = inlined_call_operand.vmem [shape: f32[1,256], index: 7, kind: input, shape index: {}]
  %s8 = inlined_call_operand.<no memory space> [shape: f32[1,1], index: 8, kind: input, shape index: {}]
  %s9 = inlined_call_operand.vmem [shape: f32[64,1], index: 9, kind: output, shape index: {}]
  %s10 = sld [smem:[#allocation0]]
  $region73: #{cann_forward.1} parent=0
    _
  %s12 = ssub.s32 1, %s10
  %s13 = scalar_select 0, %s12, %s10
  %v14 = vstv %s8
  %15 = vst [vmem:[#allocation2] sm:$0x1] %v14
  $region1: #{cann_forward.1} parent=0
    #allocation3 [shape = 'u8[786432]{0}', space=vmem, size = 0xc0000, scoped, tag = 'input window, operand 3, single buffered']
    #allocation4 [shape = 's32[2]{0}', space=sflag, size = 0x8, scoped, tag = 'scoped memory for cann_forward.1']
    %16 = vsyncpa [#allocation4], 0
    loop: start=0, step=1, limit=4
    $region2: #{cann_forward.1} parent=1 // loop_pre_header
      _
    $region3: #{cann_forward.1} parent=1 // loop_header
      %s18 = sphi 0, %s22
      %p19 = scmp.ge.s32.totalorder %s18, 4
      %s28 = sphi 0, %s30
      %s31 = sphi 0, %s28
      %s32 = sphi 0, %s31
      %s48 = sphi 0, %s32
      %s52 = sphi 0, %s52
      %s54 = sphi 0, %s52
      %s55 = sphi 0, %s54
      %s69 = sphi 0, %s55
      %s73 = sphi 0, %s73
      %s75 = sphi 0, %s73
      %s76 = sphi 0, %s75
      %s90 = sphi 0, %s76
      %s94 = sphi 0, %s94
      %s96 = sphi 0, %s94
      %s97 = sphi 0, %s96
      %s111 = sphi 0, %s97
      %s115 = sphi 0, %s115
      %s117 = sphi 0, %s115
      %s118 = sphi 0, %s117
      %s132 = sphi 0, %s118
      %s136 = sphi 0, %s136
      %s138 = sphi 0, %s136
      %s139 = sphi 0, %s138
      %s153 = sphi 0, %s139
      %s157 = sphi 0, %s157
      %s159 = sphi 0, %s157
      %s160 = sphi 0, %s159
      %s174 = sphi 0, %s160
      %s178 = sphi 0, %s178
      %s180 = sphi 0, %s178
      %s181 = sphi 0, %s180
      %s195 = sphi 0, %s181
      %s199 = sphi 0, %s199
      %s201 = sphi 0, %s199
      %s202 = sphi 0, %s201
      %s216 = sphi 0, %s202
      %s222 = sphi 0, %s224
      %s225 = sphi 0, %s222
      %s226 = sphi 0, %s225
      %s242 = sphi 0, %s226
    $region4: #{cann_forward.1} parent=1 // loop_header_branch
      %21 = sbr.rel (%p19) target = $region8
    $region5: #{cann_forward.1} parent=1 // loop_body
      %s23 = ssub.s32 %s18, 1
      %s24 = ssub.s32 %s18, 2
      %s25 = sadd.s32 %s18, 1
      %s26 = ssub.s32 %s18, %s25
      %p27 = scmp.eq.s32.totalorder %s26, 0
      %s29 = sadd.s32 %s28, 1
      %s30 = scalar_select %p27, %s28, %s29
      %p33 = pneg %p27
      %p34 = scmp.eq.s32.totalorder %s18, 1
      %p35 = por %p33, %p34
      %p36 = scmp.ne.s32.totalorder %s28, %s31
      %p37 = scmp.eq.s32.totalorder %s18, 0
      %p38 = por %p36, %p37
      %p39 = scmp.ne.s32.totalorder %s28, %s31
      %p40 = scmp.eq.s32.totalorder %s23, 1
      %p41 = por %p39, %p40
      %p42 = scmp.ne.s32.totalorder %s31, %s32
      %p43 = scmp.eq.s32.totalorder %s23, 0
      %p44 = por %p42, %p43
      %p45 = scmp.ne.s32.totalorder %s31, %s32
      %p46 = scmp.eq.s32.totalorder %s24, 1
      %p47 = por %p45, %p46
      %p49 = scmp.ne.s32.totalorder %s32, %s48
      %p50 = scmp.eq.s32.totalorder %s24, 0
      %p51 = por %p49, %p50
      %s53 = sadd.s32 %s52, 1
      %p56 = scmp.eq.s32.totalorder %s18, 1
      %p57 = scmp.ne.s32.totalorder %s52, %s54
      %p58 = scmp.eq.s32.totalorder %s18, 0
      %p59 = por %p57, %p58
      %p60 = scmp.ne.s32.totalorder %s52, %s54
      %p61 = scmp.eq.s32.totalorder %s23, 1
      %p62 = por %p60, %p61
      %p63 = scmp.ne.s32.totalorder %s54, %s55
      %p64 = scmp.eq.s32.totalorder %s23, 0
      %p65 = por %p63, %p64
      %p66 = scmp.ne.s32.totalorder %s54, %s55
      %p67 = scmp.eq.s32.totalorder %s24, 1
      %p68 = por %p66, %p67
      %p70 = scmp.ne.s32.totalorder %s55, %s69
      %p71 = scmp.eq.s32.totalorder %s24, 0
      %p72 = por %p70, %p71
      %s74 = sadd.s32 %s73, 1
      %p77 = scmp.eq.s32.totalorder %s18, 1
      %p78 = scmp.ne.s32.totalorder %s73, %s75
      %p79 = scmp.eq.s32.totalorder %s18, 0
      %p80 = por %p78, %p79
      %p81 = scmp.ne.s32.totalorder %s73, %s75
      %p82 = scmp.eq.s32.totalorder %s23, 1
      %p83 = por %p81, %p82
      %p84 = scmp.ne.s32.totalorder %s75, %s76
      %p85 = scmp.eq.s32.totalorder %s23, 0
      %p86 = por %p84, %p85
      %p87 = scmp.ne.s32.totalorder %s75, %s76
      %p88 = scmp.eq.s32.totalorder %s24, 1
      %p89 = por %p87, %p88
      %p91 = scmp.ne.s32.totalorder %s76, %s90
      %p92 = scmp.eq.s32.totalorder %s24, 0
      %p93 = por %p91, %p92
      %s95 = sadd.s32 %s94, 1
      %p98 = scmp.eq.s32.totalorder %s18, 1
      %p99 = scmp.ne.s32.totalorder %s94, %s96
      %p100 = scmp.eq.s32.totalorder %s18, 0
      %p101 = por %p99, %p100
      %p102 = scmp.ne.s32.totalorder %s94, %s96
      %p103 = scmp.eq.s32.totalorder %s23, 1
      %p104 = por %p102, %p103
      %p105 = scmp.ne.s32.totalorder %s96, %s97
      %p106 = scmp.eq.s32.totalorder %s23, 0
      %p107 = por %p105, %p106
      %p108 = scmp.ne.s32.totalorder %s96, %s97
      %p109 = scmp.eq.s32.totalorder %s24, 1
      %p110 = por %p108, %p109
      %p112 = scmp.ne.s32.totalorder %s97, %s111
      %p113 = scmp.eq.s32.totalorder %s24, 0
      %p114 = por %p112, %p113
      %s116 = sadd.s32 %s115, 1
      %p119 = scmp.eq.s32.totalorder %s18, 1
      %p120 = scmp.ne.s32.totalorder %s115, %s117
      %p121 = scmp.eq.s32.totalorder %s18, 0
      %p122 = por %p120, %p121
      %p123 = scmp.ne.s32.totalorder %s115, %s117
      %p124 = scmp.eq.s32.totalorder %s23, 1
      %p125 = por %p123, %p124
      %p126 = scmp.ne.s32.totalorder %s117, %s118
      %p127 = scmp.eq.s32.totalorder %s23, 0
      %p128 = por %p126, %p127
      %p129 = scmp.ne.s32.totalorder %s117, %s118
      %p130 = scmp.eq.s32.totalorder %s24, 1
      %p131 = por %p129, %p130
      %p133 = scmp.ne.s32.totalorder %s118, %s132
      %p134 = scmp.eq.s32.totalorder %s24, 0
      %p135 = por %p133, %p134
      %s137 = sadd.s32 %s136, 1
      %p140 = scmp.eq.s32.totalorder %s18, 1
      %p141 = scmp.ne.s32.totalorder %s136, %s138
      %p142 = scmp.eq.s32.totalorder %s18, 0
      %p143 = por %p141, %p142
      %p144 = scmp.ne.s32.totalorder %s136, %s138
      %p145 = scmp.eq.s32.totalorder %s23, 1
      %p146 = por %p144, %p145
      %p147 = scmp.ne.s32.totalorder %s138, %s139
      %p148 = scmp.eq.s32.totalorder %s23, 0
      %p149 = por %p147, %p148
      %p150 = scmp.ne.s32.totalorder %s138, %s139
      %p151 = scmp.eq.s32.totalorder %s24, 1
      %p152 = por %p150, %p151
      %p154 = scmp.ne.s32.totalorder %s139, %s153
      %p155 = scmp.eq.s32.totalorder %s24, 0
      %p156 = por %p154, %p155
      %s158 = sadd.s32 %s157, 1
      %p161 = scmp.eq.s32.totalorder %s18, 1
      %p162 = scmp.ne.s32.totalorder %s157, %s159
      %p163 = scmp.eq.s32.totalorder %s18, 0
      %p164 = por %p162, %p163
      %p165 = scmp.ne.s32.totalorder %s157, %s159
      %p166 = scmp.eq.s32.totalorder %s23, 1
      %p167 = por %p165, %p166
      %p168 = scmp.ne.s32.totalorder %s159, %s160
      %p169 = scmp.eq.s32.totalorder %s23, 0
      %p170 = por %p168, %p169
      %p171 = scmp.ne.s32.totalorder %s159, %s160
      %p172 = scmp.eq.s32.totalorder %s24, 1
      %p173 = por %p171, %p172
      %p175 = scmp.ne.s32.totalorder %s160, %s174
      %p176 = scmp.eq.s32.totalorder %s24, 0
      %p177 = por %p175, %p176
      %s179 = sadd.s32 %s178, 1
      %p182 = scmp.eq.s32.totalorder %s18, 1
      %p183 = scmp.ne.s32.totalorder %s178, %s180
      %p184 = scmp.eq.s32.totalorder %s18, 0
      %p185 = por %p183, %p184
      %p186 = scmp.ne.s32.totalorder %s178, %s180
      %p187 = scmp.eq.s32.totalorder %s23, 1
      %p188 = por %p186, %p187
      %p189 = scmp.ne.s32.totalorder %s180, %s181
      %p190 = scmp.eq.s32.totalorder %s23, 0
      %p191 = por %p189, %p190
      %p192 = scmp.ne.s32.totalorder %s180, %s181
      %p193 = scmp.eq.s32.totalorder %s24, 1
      %p194 = por %p192, %p193
      %p196 = scmp.ne.s32.totalorder %s181, %s195
      %p197 = scmp.eq.s32.totalorder %s24, 0
      %p198 = por %p196, %p197
      %s200 = sadd.s32 %s199, 1
      %p203 = scmp.eq.s32.totalorder %s18, 1
      %p204 = scmp.ne.s32.totalorder %s199, %s201
      %p205 = scmp.eq.s32.totalorder %s18, 0
      %p206 = por %p204, %p205
      %p207 = scmp.ne.s32.totalorder %s199, %s201
      %p208 = scmp.eq.s32.totalorder %s23, 1
      %p209 = por %p207, %p208
      %p210 = scmp.ne.s32.totalorder %s201, %s202
      %p211 = scmp.eq.s32.totalorder %s23, 0
      %p212 = por %p210, %p211
      %p213 = scmp.ne.s32.totalorder %s201, %s202
      %p214 = scmp.eq.s32.totalorder %s24, 1
      %p215 = por %p213, %p214
      %p217 = scmp.ne.s32.totalorder %s202, %s216
      %p218 = scmp.eq.s32.totalorder %s24, 0
      %p219 = por %p217, %p218
      %s220 = ssub.s32 %s18, %s25
      %p221 = scmp.eq.s32.totalorder %s220, 0
      %s223 = sadd.s32 %s222, 1
      %s224 = scalar_select %p221, %s222, %s223
      %p227 = pneg %p221
      %p228 = scmp.eq.s32.totalorder %s18, 1
      %p229 = por %p227, %p228
      %p230 = scmp.ne.s32.totalorder %s222, %s225
      %p231 = scmp.eq.s32.totalorder %s18, 0
      %p232 = por %p230, %p231
      %p233 = scmp.ne.s32.totalorder %s222, %s225
      %p234 = scmp.eq.s32.totalorder %s23, 1
      %p235 = por %p233, %p234
      %p236 = scmp.ne.s32.totalorder %s225, %s226
      %p237 = scmp.eq.s32.totalorder %s23, 0
      %p238 = por %p236, %p237
      %p239 = scmp.ne.s32.totalorder %s225, %s226
      %p240 = scmp.eq.s32.totalorder %s24, 1
      %p241 = por %p239, %p240
      %p243 = scmp.ne.s32.totalorder %s226, %s242
      %p244 = scmp.eq.s32.totalorder %s24, 0
      %p245 = por %p243, %p244
      %p246 = scmp.le.s32.totalorder 1, %s18
      %p247 = scmp.lt.s32.totalorder %s18, 3
      %p248 = pnand %p246, %p247
      %p249 = pneg %p248
      // Predicated region
      $region9: #{cann_forward.1} parent=5 // pred_check
        _
      $region10: #{cann_forward.1} parent=5 // pred_check_branch
        %251 = sbr.rel (%p248) target = $region12
      $region11: #{cann_forward.1} parent=5 // pred_region
        %s252 = ssub.s32 %s18, 1
        // Predicated region
        $region13: #{cann_forward.1} parent=11 // pred_check
          %p253 = pneg %p65
        $region14: #{cann_forward.1} parent=11 // pred_check_branch
          %255 = sbr.rel (%p253) target = $region16
        $region15: #{cann_forward.1} parent=11 // pred_region
          _
        $region16: #{cann_forward.1} parent=11 // pred_fallthru
          _
        // Predicated region
        $region17: #{cann_forward.1} parent=11 // pred_check
          %p256 = pneg %p86
        $region18: #{cann_forward.1} parent=11 // pred_check_branch
          %258 = sbr.rel (%p256) target = $region20
        $region19: #{cann_forward.1} parent=11 // pred_region
          _
        $region20: #{cann_forward.1} parent=11 // pred_fallthru
          _
        // Predicated region
        $region21: #{cann_forward.1} parent=11 // pred_check
          %p259 = pneg %p107
        $region22: #{cann_forward.1} parent=11 // pred_check_branch
          %261 = sbr.rel (%p259) target = $region24
        $region23: #{cann_forward.1} parent=11 // pred_region
          %s263 = ssub.s32 24576, 24576
          %264 = vsyncadd [#allocation4], %s263
          %s265 = sshll.u32 [#allocation3], 4
          %s266 = int_to_ptr.vmem [resolvable:$true] %s265
          %271 = dma.hbm_to_vmem [thread:$0]  %s3, 24576, %s266, [#allocation4], 128, 128, 8
        $region24: #{cann_forward.1} parent=11 // pred_fallthru
          _
        // Predicated region
        $region25: #{cann_forward.1} parent=11 // pred_check
          %p272 = pneg %p128
        $region26: #{cann_forward.1} parent=11 // pred_check_branch
          %274 = sbr.rel (%p272) target = $region28
        $region27: #{cann_forward.1} parent=11 // pred_region
          _
        $region28: #{cann_forward.1} parent=11 // pred_fallthru
          _
        // Predicated region
        $region29: #{cann_forward.1} parent=11 // pred_check
          %p275 = pneg %p149
        $region30: #{cann_forward.1} parent=11 // pred_check_branch
          %277 = sbr.rel (%p275) target = $region32
        $region31: #{cann_forward.1} parent=11 // pred_region
          _
        $region32: #{cann_forward.1} parent=11 // pred_fallthru
          _
        // Predicated region
        $region33: #{cann_forward.1} parent=11 // pred_check
          %p278 = pneg %p170
        $region34: #{cann_forward.1} parent=11 // pred_check_branch
          %280 = sbr.rel (%p278) target = $region36
        $region35: #{cann_forward.1} parent=11 // pred_region
          _
        $region36: #{cann_forward.1} parent=11 // pred_fallthru
          _
        // Predicated region
        $region37: #{cann_forward.1} parent=11 // pred_check
          %p281 = pneg %p191
        $region38: #{cann_forward.1} parent=11 // pred_check_branch
          %283 = sbr.rel (%p281) target = $region40
        $region39: #{cann_forward.1} parent=11 // pred_region
          _
        $region40: #{cann_forward.1} parent=11 // pred_fallthru
          _
        // Predicated region
        $region41: #{cann_forward.1} parent=11 // pred_check
          %p284 = pneg %p212
        $region42: #{cann_forward.1} parent=11 // pred_check_branch
          %286 = sbr.rel (%p284) target = $region44
        $region43: #{cann_forward.1} parent=11 // pred_region
          _
        $region44: #{cann_forward.1} parent=11 // pred_fallthru
          _
      $region12: #{cann_forward.1} parent=5 // pred_fallthru
        _
      %p287 = scmp.lt.s32.totalorder %s18, 2
      // Predicated region
      $region45: #{cann_forward.1} parent=5 // pred_check
        %p288 = pneg %p287
      $region46: #{cann_forward.1} parent=5 // pred_check_branch
        %290 = sbr.rel (%p288) target = $region48
      $region47: #{cann_forward.1} parent=5 // pred_region
        // Predicated region
        $region49: #{cann_forward.1} parent=47 // pred_check
          %p291 = pneg %p38
        $region50: #{cann_forward.1} parent=47 // pred_check_branch
          %293 = sbr.rel (%p291) target = $region52
        $region51: #{cann_forward.1} parent=47 // pred_region
          %s294 = smul.u32 4, %s18
          %p295 = scmp.lt.s32.totalorder %s294, 7
          %s296 = scalar_select %p295, %s294, 7
          %s297 = smul.addr %s296, 8
          %s298 = scalar_lea.vmem %s0, %s297
          %s299 = smul.u32 4, %s18
        $region52: #{cann_forward.1} parent=47 // pred_fallthru
          _
      $region48: #{cann_forward.1} parent=5 // pred_fallthru
        _
      %p300 = scmp.le.s32.totalorder 1, %s18
      %p301 = scmp.lt.s32.totalorder %s18, 3
      %p302 = pnand %p300, %p301
      %p303 = pneg %p302
      // Predicated region
      $region53: #{cann_forward.1} parent=5 // pred_check
        _
      $region54: #{cann_forward.1} parent=5 // pred_check_branch
        %305 = sbr.rel (%p302) target = $region56
      $region55: #{cann_forward.1} parent=5 // pred_region
        %s306 = ssub.s32 %s18, 1
        // Predicated region
        $region57: #{cann_forward.1} parent=55 // pred_check
          %p307 = pneg %p107
        $region58: #{cann_forward.1} parent=55 // pred_check_branch
          %309 = sbr.rel (%p307) target = $region60
        $region59: #{cann_forward.1} parent=55 // pred_region
          %310 = dma.done [#allocation4], 24576
        $region60: #{cann_forward.1} parent=55 // pred_fallthru
          _
        %s311 = smul.u32 4, %s23
        %p312 = scmp.lt.s32.totalorder %s311, 7
        %s313 = scalar_select %p312, %s311, 7
        %s314 = smul.addr %s313, 8
        %s315 = scalar_lea.vmem %s0, %s314
        %p316 = pneg %p44
        %p317 = pneg %p41
        %p318 = pneg %p65
        %p319 = pneg %p62
        %p320 = pneg %p86
        %p321 = pneg %p83
        %p322 = pneg %p107
        %p323 = pneg %p104
        %p324 = pneg %p128
        %p325 = pneg %p125
        %p326 = pneg %p149
        %p327 = pneg %p146
        %p328 = pneg %p170
        %p329 = pneg %p167
        %p330 = pneg %p191
        %p331 = pneg %p188
        %p332 = pneg %p212
        %p333 = pneg %p209
        %p334 = pneg %p238
        %p335 = pneg %p235
        %s336 = smul.u32 4, %s23
        %p337 = scmp.lt.s32.totalorder %s336, 7
        %s338 = scalar_select %p337, %s336, 7
        %s339 = smul.addr %s338, 8
        %s340 = scalar_lea.vmem %s9, %s339
        %s341 = smul.u32 4, %s23
        %p342 = scmp.lt.s32.totalorder %s341, 7
        %s343 = scalar_select %p342, %s341, 7
        %s344 = smul.addr %s343, 8
        %s345 = scalar_lea.vmem %s0, %s344
        %s346 = smul.u32 4, %s23
        %s347 = smul.u32 4, %s23
        %p348 = scmp.lt.s32.totalorder %s347, 7
        %s349 = scalar_select %p348, %s347, 7
        %s350 = smul.addr %s349, 8
        %s351 = scalar_lea.vmem %s9, %s350
        %s352 = smul.u32 4, %s23
        %v354 = vld [vmem:[%s5] sm:$0x3]
        %v355 = vld [vmem:[%s6] sm:$0x3]
        %v356 = vld [vmem:[%s345] sm:$0xff]
        %v357 = vld [vmem:[%s345 + $0x8] sm:$0xff]
        %v358 = vld [vmem:[%s345 + $0x10] sm:$0xff]
        %v359 = vld [vmem:[%s345 + $0x18] sm:$0xff]
        %v360 = vpack.c.bf16 %v357, %v356
        %v361 = vpack.c.bf16 %v359, %v358
        %v362 = vld [vmem:[%s1] sm:$0xff]
        %v363 = vld [vmem:[%s1 + $0x8] sm:$0xff]
        %v364 = vld [vmem:[%s1 + $0x10] sm:$0x11]
        %v365 = vld [vmem:[%s2] sm:$0x3]
        %v367 = vlaneseq
        %v368 = vshrl.u32 %v367, 7
        %v369 = vsub.s32 0, %v368
        %v370 = vrot.slane %v365, %v369
        %v371 = vlaneseq
        %v372 = vshrl.u32 %v371, 7
        %v373 = vsub.s32 1, %v372
        %v374 = vrot.slane %v365, %v373
        %v380 = vunpack.c.l.b16 %v362
        %v381 = vunpack.c.h.b16 %v362
        %v382 = vunpack.c.l.b16 %v363
        %v383 = vunpack.c.h.b16 %v363
        %v384 = vunpack.c.l.b16 %v364
        %v385 = vunpack.c.h.b16 %v364
        %v386 = vpack.c.b16 %v382, %v380
        %v387 = vpack.c.b16 %v383, %v381
        %v388 = vpack.c.b16 %v384, %v384
        %v389 = vpack.c.b16 %v385, %v385
        %vm392 = vcmask 138240
        %v394 = vsel %vm392, %v360, 0
        %vm396 = vcmask 1040384
        %v397 = vsel 0, 4294967295, 65535
        %v398 = vsel %vm396, %v397, 0
        %v400 = vand.u32 %v388, %v398
        %v403 = vand.u32 %v389, %v398
        %405 = vmatprep.subr.bf16.mxu0 0
        %406 = vmatpush1.bf16.msra.mxu0 0
        %407 = vmatprep.subr.bf16.mxu0 0
        %408 = vmatpush1.bf16.msra.mxu0 0
        %409 = vmatprep.subr.bf16.mxu0 0
        %410 = vmatpush1.bf16.msra.mxu0 0
        %411 = vmatprep.subr.bf16.mxu0 0
        %412 = vmatpush1.bf16.msra.mxu0 0
        %413 = vmatprep.subr.bf16.mxu0 0
        %414 = vmatpush1.bf16.msra.mxu0 0
        %415 = vmatprep.subr.bf16.mxu0 0
        %416 = vmatpush1.bf16.msra.mxu0 0
        %417 = vmatprep.subr.bf16.mxu0 %v403
        %418 = vmatpush1.bf16.msra.mxu0 %v400
        %419 = vmatprep.subr.bf16.mxu0 %v387
        %420 = vmatpush1.bf16.msra.mxu0 %v386
        %421 = vmatprep.subr.bf16.mxu0 0
        %422 = vmatpush2.bf16.msra.mxu0 0
        %423 = vmatprep.subr.bf16.mxu0 0
        %424 = vmatpush2.bf16.msra.mxu0 0
        %425 = vmatprep.subr.bf16.mxu0 0
        %426 = vmatpush2.bf16.msra.mxu0 0
        %427 = vmatprep.subr.bf16.mxu0 0
        %428 = vmatpush2.bf16.msra.mxu0 0
        %429 = vmatprep.subr.bf16.mxu0 0
        %430 = vmatpush2.bf16.msra.mxu0 0
        %431 = vmatprep.subr.bf16.mxu0 0
        %432 = vmatpush2.bf16.msra.mxu0 0
        %433 = vmatprep.subr.bf16.mxu0 0
        %434 = vmatpush2.bf16.msra.mxu0 0
        %435 = vmatprep.subr.bf16.mxu0 0
        %436 = vmatpush2.bf16.msra.mxu0 0
        %437 = vmatprep.mubr.bf16.mxu0 0
        %438 = vmatmul.mubr.bf16.gmra.mxu0 %v394
        %v439 = vpop.f32.mrf.mxu0
        %v440 = vadd.f32 %v370, %v439
        %v441 = vpop.f32.mrf.mxu0
        %v442 = vadd.f32 %v374, %v441
        %v443 = vpop.f32.mrf.mxu0
        %v444 = vadd.f32 %v370, %v443
        %v445 = vpop.f32.mrf.mxu0
        %v446 = vadd.f32 %v374, %v445
        %447 = vdwg.mxu0
        %v449 = vsel %vm392, %v361, 0
        %451 = vmatprep.subr.bf16.mxu0 0
        %452 = vmatpush1.bf16.msra.mxu0 0
        %453 = vmatprep.subr.bf16.mxu0 0
        %454 = vmatpush1.bf16.msra.mxu0 0
        %455 = vmatprep.subr.bf16.mxu0 0
        %456 = vmatpush1.bf16.msra.mxu0 0
        %457 = vmatprep.subr.bf16.mxu0 0
        %458 = vmatpush1.bf16.msra.mxu0 0
        %459 = vmatprep.subr.bf16.mxu0 0
        %460 = vmatpush1.bf16.msra.mxu0 0
        %461 = vmatprep.subr.bf16.mxu0 0
        %462 = vmatpush1.bf16.msra.mxu0 0
        %463 = vmatprep.subr.bf16.mxu0 %v403
        %464 = vmatpush1.bf16.msra.mxu0 %v400
        %465 = vmatprep.subr.bf16.mxu0 %v387
        %466 = vmatpush1.bf16.msra.mxu0 %v386
        %467 = vmatprep.subr.bf16.mxu0 0
        %468 = vmatpush2.bf16.msra.mxu0 0
        %469 = vmatprep.subr.bf16.mxu0 0
        %470 = vmatpush2.bf16.msra.mxu0 0
        %471 = vmatprep.subr.bf16.mxu0 0
        %472 = vmatpush2.bf16.msra.mxu0 0
        %473 = vmatprep.subr.bf16.mxu0 0
        %474 = vmatpush2.bf16.msra.mxu0 0
        %475 = vmatprep.subr.bf16.mxu0 0
        %476 = vmatpush2.bf16.msra.mxu0 0
        %477 = vmatprep.subr.bf16.mxu0 0
        %478 = vmatpush2.bf16.msra.mxu0 0
        %479 = vmatprep.subr.bf16.mxu0 0
        %480 = vmatpush2.bf16.msra.mxu0 0
        %481 = vmatprep.subr.bf16.mxu0 0
        %482 = vmatpush2.bf16.msra.mxu0 0
        %483 = vmatprep.mubr.bf16.mxu0 0
        %484 = vmatmul.mubr.bf16.gmra.mxu0 %v449
        %v485 = vpop.f32.mrf.mxu0
        %v486 = vadd.f32 %v370, %v485
        %v487 = vpop.f32.mrf.mxu0
        %v488 = vadd.f32 %v374, %v487
        %v489 = vpop.f32.mrf.mxu0
        %v490 = vadd.f32 %v370, %v489
        %v491 = vpop.f32.mrf.mxu0
        %v492 = vadd.f32 %v374, %v491
        %493 = vdwg.mxu0
        %v494 = vadd.f32 %v440, %v442
        %495 = vadd.xlane.f32.xlu0 %v494
        %v496 = vpop.xlane.xlu0 %495
        %v497 = vadd.f32 %v444, %v446
        %498 = vadd.xlane.f32.xlu0 %v497
        %v499 = vpop.xlane.xlu0 %498
        %v500 = vmul.f32 %v440, %v440
        %v501 = vmul.f32 %v442, %v442
        %v502 = vmul.f32 %v444, %v444
        %v503 = vmul.f32 %v446, %v446
        %v504 = vadd.f32 %v500, %v501
        %505 = vadd.xlane.f32.xlu0 %v504
        %v506 = vpop.xlane.xlu0 %505
        %v507 = vadd.f32 %v502, %v503
        %508 = vadd.xlane.f32.xlu0 %v507
        %v509 = vpop.xlane.xlu0 %508
        %v510 = vmul.f32 %v496, 0.005
        %v511 = vmul.f32 %v499, 0.005
        %v512 = vmul.f32 %v506, 0.005
        %v513 = vmul.f32 %v509, 0.005
        %v514 = vmul.f32 %v510, %v510
        %v515 = vmul.f32 %v511, %v511
        %v516 = vsub.f32 %v512, %v514
        %v517 = vsub.f32 %v513, %v515
        %v518 = vsub.f32 %v440, %v510
        %v519 = vsub.f32 %v442, %v510
        %v520 = vsub.f32 %v444, %v511
        %v521 = vsub.f32 %v446, %v511
        %v522 = vadd.f32 %v516, 1e-05
        %v523 = vadd.f32 %v517, 1e-05
        %v524 = vrsqrt.pop %v522
        %v525 = vrsqrt.pop %v523
        %v526 = vmul.f32 %v518, %v524
        %v527 = vmul.f32 %v519, %v524
        %v528 = vmul.f32 %v520, %v525
        %v529 = vmul.f32 %v521, %v525
        %v531 = vlaneseq
        %v532 = vshrl.u32 %v531, 7
        %v533 = vsub.s32 0, %v532
        %v534 = vrot.slane %v354, %v533
        %v535 = vlaneseq
        %v536 = vshrl.u32 %v535, 7
        %v537 = vsub.s32 1, %v536
        %v538 = vrot.slane %v354, %v537
        %v541 = vmul.f32 %v526, %v534
        %v542 = vmul.f32 %v527, %v538
        %v543 = vmul.f32 %v528, %v534
        %v544 = vmul.f32 %v529, %v538
        %v546 = vlaneseq
        %v547 = vshrl.u32 %v546, 7
        %v548 = vsub.s32 0, %v547
        %v549 = vrot.slane %v355, %v548
        %v550 = vlaneseq
        %v551 = vshrl.u32 %v550, 7
        %v552 = vsub.s32 1, %v551
        %v553 = vrot.slane %v355, %v552
        %v556 = vadd.f32 %v541, %v549
        %v557 = vadd.f32 %v542, %v553
        %v558 = vadd.f32 %v543, %v549
        %v559 = vadd.f32 %v544, %v553
        %v560 = vmin.f32 %v556, 20.0
        %v561 = vmin.f32 %v557, 20.0
        %v562 = vmin.f32 %v558, 20.0
        %v563 = vmin.f32 %v559, 20.0
        %v564 = vmul.f32 %v560, 1.442695
        %v565 = vpow.pop %v564
        %v566 = vmul.f32 %v561, 1.442695
        %v567 = vpow.pop %v566
        %v568 = vmul.f32 %v562, 1.442695
        %v569 = vpow.pop %v568
        %v570 = vmul.f32 %v563, 1.442695
        %v571 = vpow.pop %v570
        %v572 = vadd.f32 %v565, 2.0
        %v573 = vadd.f32 %v567, 2.0
        %v574 = vadd.f32 %v569, 2.0
        %v575 = vadd.f32 %v571, 2.0
        %v576 = vmul.f32 %v565, %v572
        %v577 = vmul.f32 %v567, %v573
        %v578 = vmul.f32 %v569, %v574
        %v579 = vmul.f32 %v571, %v575
        %v580 = vadd.f32 %v576, 2.0
        %v581 = vadd.f32 %v577, 2.0
        %v582 = vadd.f32 %v578, 2.0
        %v583 = vadd.f32 %v579, 2.0
        %v584 = vrcp.pop %v580
        %v585 = vrcp.pop %v581
        %v586 = vrcp.pop %v582
        %v587 = vrcp.pop %v583
        %v588 = vmul.f32 %v580, %v584
        %v589 = vmul.f32 %v581, %v585
        %v590 = vmul.f32 %v582, %v586
        %v591 = vmul.f32 %v583, %v587
        %v592 = vsub.f32 2.0, %v588
        %v593 = vsub.f32 2.0, %v589
        %v594 = vsub.f32 2.0, %v590
        %v595 = vsub.f32 2.0, %v591
        %v596 = vmul.f32 %v584, %v592
        %v597 = vmul.f32 %v585, %v593
        %v598 = vmul.f32 %v586, %v594
        %v599 = vmul.f32 %v587, %v595
        %v600 = vadd.f32 %v556, %v556
        %v601 = vadd.f32 %v557, %v557
        %v602 = vadd.f32 %v558, %v558
        %v603 = vadd.f32 %v559, %v559
        %v604 = vmul.f32 %v600, %v596
        %v605 = vmul.f32 %v601, %v597
        %v606 = vmul.f32 %v602, %v598
        %v607 = vmul.f32 %v603, %v599
        %v608 = vsub.f32 %v556, %v604
        %v609 = vsub.f32 %v557, %v605
        %v610 = vsub.f32 %v558, %v606
        %v611 = vsub.f32 %v559, %v607
        %v612 = vadd.f32 %v486, %v488
        %613 = vadd.xlane.f32.xlu0 %v612
        %v614 = vpop.xlane.xlu0 %613
        %v615 = vadd.f32 %v490, %v492
        %616 = vadd.xlane.f32.xlu0 %v615
        %v617 = vpop.xlane.xlu0 %616
        %v618 = vmul.f32 %v486, %v486
        %v619 = vmul.f32 %v488, %v488
        %v620 = vmul.f32 %v490, %v490
        %v621 = vmul.f32 %v492, %v492
        %v622 = vadd.f32 %v618, %v619
        %623 = vadd.xlane.f32.xlu0 %v622
        %v624 = vpop.xlane.xlu0 %623
        %v625 = vadd.f32 %v620, %v621
        %626 = vadd.xlane.f32.xlu0 %v625
        %v627 = vpop.xlane.xlu0 %626
        %v628 = vmul.f32 %v614, 0.005
        %v629 = vmul.f32 %v617, 0.005
        %v630 = vmul.f32 %v624, 0.005
        %v631 = vmul.f32 %v627, 0.005
        %v632 = vmul.f32 %v628, %v628
        %v633 = vmul.f32 %v629, %v629
        %v634 = vsub.f32 %v630, %v632
        %v635 = vsub.f32 %v631, %v633
        %v636 = vsub.f32 %v486, %v628
        %v637 = vsub.f32 %v488, %v628
        %v638 = vsub.f32 %v490, %v629
        %v639 = vsub.f32 %v492, %v629
        %v640 = vadd.f32 %v634, 1e-05
        %v641 = vadd.f32 %v635, 1e-05
        %v642 = vrsqrt.pop %v640
        %v643 = vrsqrt.pop %v641
        %v644 = vmul.f32 %v636, %v642
        %v645 = vmul.f32 %v637, %v642
        %v646 = vmul.f32 %v638, %v643
        %v647 = vmul.f32 %v639, %v643
        %v648 = vmul.f32 %v644, %v534
        %v649 = vmul.f32 %v645, %v538
        %v650 = vmul.f32 %v646, %v534
        %v651 = vmul.f32 %v647, %v538
        %v652 = vadd.f32 %v648, %v549
        %v653 = vadd.f32 %v649, %v553
        %v654 = vadd.f32 %v650, %v549
        %v655 = vadd.f32 %v651, %v553
        %v656 = vmin.f32 %v652, 20.0
        %v657 = vmin.f32 %v653, 20.0
        %v658 = vmin.f32 %v654, 20.0
        %v659 = vmin.f32 %v655, 20.0
        %v660 = vmul.f32 %v656, 1.442695
        %v661 = vpow.pop %v660
        %v662 = vmul.f32 %v657, 1.442695
        %v663 = vpow.pop %v662
        %v664 = vmul.f32 %v658, 1.442695
        %v665 = vpow.pop %v664
        %v666 = vmul.f32 %v659, 1.442695
        %v667 = vpow.pop %v666
        %v668 = vadd.f32 %v661, 2.0
        %v669 = vadd.f32 %v663, 2.0
        %v670 = vadd.f32 %v665, 2.0
        %v671 = vadd.f32 %v667, 2.0
        %v672 = vmul.f32 %v661, %v668
        %v673 = vmul.f32 %v663, %v669
        %v674 = vmul.f32 %v665, %v670
        %v675 = vmul.f32 %v667, %v671
        %v676 = vadd.f32 %v672, 2.0
        %v677 = vadd.f32 %v673, 2.0
        %v678 = vadd.f32 %v674, 2.0
        %v679 = vadd.f32 %v675, 2.0
        %v680 = vrcp.pop %v676
        %v681 = vrcp.pop %v677
        %v682 = vrcp.pop %v678
        %v683 = vrcp.pop %v679
        %v684 = vmul.f32 %v676, %v680
        %v685 = vmul.f32 %v677, %v681
        %v686 = vmul.f32 %v678, %v682
        %v687 = vmul.f32 %v679, %v683
        %v688 = vsub.f32 2.0, %v684
        %v689 = vsub.f32 2.0, %v685
        %v690 = vsub.f32 2.0, %v686
        %v691 = vsub.f32 2.0, %v687
        %v692 = vmul.f32 %v680, %v688
        %v693 = vmul.f32 %v681, %v689
        %v694 = vmul.f32 %v682, %v690
        %v695 = vmul.f32 %v683, %v691
        %v696 = vadd.f32 %v652, %v652
        %v697 = vadd.f32 %v653, %v653
        %v698 = vadd.f32 %v654, %v654
        %v699 = vadd.f32 %v655, %v655
        %v700 = vmul.f32 %v696, %v692
        %v701 = vmul.f32 %v697, %v693
        %v702 = vmul.f32 %v698, %v694
        %v703 = vmul.f32 %v699, %v695
        %v704 = vsub.f32 %v652, %v700
        %v705 = vsub.f32 %v653, %v701
        %v706 = vsub.f32 %v654, %v702
        %v707 = vsub.f32 %v655, %v703
        %v708 = vld [vmem:[#allocation3] sm:$0xff]
        %v709 = vld [vmem:[#allocation3 + $0x8] sm:$0xff]
        %v710 = vld [vmem:[#allocation3 + $0x10] sm:$0xff]
        %v711 = vld [vmem:[#allocation3 + $0x18] sm:$0xff]
        %v712 = vld [vmem:[#allocation3 + $0x20] sm:$0xff]
        %v713 = vld [vmem:[#allocation3 + $0x28] sm:$0xff]
        %v714 = vld [vmem:[#allocation3 + $0x30] sm:$0xff]
        %v715 = vld [vmem:[#allocation3 + $0x38] sm:$0xff]
        %v716 = vld [vmem:[#allocation3 + $0x40] sm:$0xff]
        %v717 = vld [vmem:[#allocation3 + $0x48] sm:$0xff]
        %v718 = vld [vmem:[#allocation3 + $0x50] sm:$0xff]
        %v719 = vld [vmem:[#allocation3 + $0x58] sm:$0xff]
        %v720 = vld [vmem:[#allocation3 + $0x60] sm:$0xff]
        %v721 = vld [vmem:[#allocation3 + $0x68] sm:$0xff]
        %v722 = vld [vmem:[#allocation3 + $0x70] sm:$0xff]
        %v723 = vld [vmem:[#allocation3 + $0x78] sm:$0xff]
        %v724 = vld [vmem:[#allocation3 + $0x80] sm:$0xff]
        %v725 = vld [vmem:[#allocation3 + $0x88] sm:$0xff]
        %v726 = vld [vmem:[#allocation3 + $0x90] sm:$0xff]
        %v727 = vld [vmem:[#allocation3 + $0x98] sm:$0xff]
        %v728 = vld [vmem:[#allocation3 + $0xa0] sm:$0xff]
        %v729 = vld [vmem:[#allocation3 + $0xa8] sm:$0xff]
        %v730 = vld [vmem:[#allocation3 + $0xb0] sm:$0xff]
        %v731 = vld [vmem:[#allocation3 + $0xb8] sm:$0xff]
        %v732 = vld [vmem:[#allocation3 + $0xc0] sm:$0xff]
        %v733 = vld [vmem:[#allocation3 + $0xc8] sm:$0xff]
        %v734 = vld [vmem:[#allocation3 + $0xd0] sm:$0xff]
        %v735 = vld [vmem:[#allocation3 + $0xd8] sm:$0xff]
        %v736 = vld [vmem:[#allocation3 + $0xe0] sm:$0xff]
        %v737 = vld [vmem:[#allocation3 + $0xe8] sm:$0xff]
        %v738 = vld [vmem:[#allocation3 + $0xf0] sm:$0xff]
        %v739 = vld [vmem:[#allocation3 + $0xf8] sm:$0xff]
        %v740 = vld [vmem:[%s4] sm:$0x3]
        %v741 = vpack.c.bf16 %v610, %v608
        %v742 = vpack.c.bf16 %v611, %v609
        %v744 = vlaneseq
        %v745 = vshrl.u32 %v744, 7
        %v746 = vsub.s32 0, %v745
        %v747 = vrot.slane %v740, %v746
        %v748 = vlaneseq
        %v749 = vshrl.u32 %v748, 7
        %v750 = vsub.s32 1, %v749
        %v751 = vrot.slane %v740, %v750
        %v786 = vunpack.c.l.b16 %v708
        %v787 = vunpack.c.h.b16 %v708
        %v788 = vunpack.c.l.b16 %v709
        %v789 = vunpack.c.h.b16 %v709
        %v790 = vunpack.c.l.b16 %v710
        %v791 = vunpack.c.h.b16 %v710
        %v792 = vunpack.c.l.b16 %v711
        %v793 = vunpack.c.h.b16 %v711
        %v794 = vunpack.c.l.b16 %v712
        %v795 = vunpack.c.h.b16 %v712
        %v796 = vunpack.c.l.b16 %v713
        %v797 = vunpack.c.h.b16 %v713
        %v798 = vunpack.c.l.b16 %v714
        %v799 = vunpack.c.h.b16 %v714
        %v800 = vunpack.c.l.b16 %v715
        %v801 = vunpack.c.h.b16 %v715
        %v802 = vunpack.c.l.b16 %v716
        %v803 = vunpack.c.h.b16 %v716
        %v804 = vunpack.c.l.b16 %v717
        %v805 = vunpack.c.h.b16 %v717
        %v806 = vunpack.c.l.b16 %v718
        %v807 = vunpack.c.h.b16 %v718
        %v808 = vunpack.c.l.b16 %v719
        %v809 = vunpack.c.h.b16 %v719
        %v810 = vunpack.c.l.b16 %v720
        %v811 = vunpack.c.h.b16 %v720
        %v812 = vunpack.c.l.b16 %v721
        %v813 = vunpack.c.h.b16 %v721
        %v814 = vunpack.c.l.b16 %v722
        %v815 = vunpack.c.h.b16 %v722
        %v816 = vunpack.c.l.b16 %v723
        %v817 = vunpack.c.h.b16 %v723
        %v818 = vunpack.c.l.b16 %v724
        %v819 = vunpack.c.h.b16 %v724
        %v820 = vunpack.c.l.b16 %v725
        %v821 = vunpack.c.h.b16 %v725
        %v822 = vunpack.c.l.b16 %v726
        %v823 = vunpack.c.h.b16 %v726
        %v824 = vunpack.c.l.b16 %v727
        %v825 = vunpack.c.h.b16 %v727
        %v826 = vunpack.c.l.b16 %v728
        %v827 = vunpack.c.h.b16 %v728
        %v828 = vunpack.c.l.b16 %v729
        %v829 = vunpack.c.h.b16 %v729
        %v830 = vunpack.c.l.b16 %v730
        %v831 = vunpack.c.h.b16 %v730
        %v832 = vunpack.c.l.b16 %v731
        %v833 = vunpack.c.h.b16 %v731
        %v834 = vunpack.c.l.b16 %v732
        %v835 = vunpack.c.h.b16 %v732
        %v836 = vunpack.c.l.b16 %v733
        %v837 = vunpack.c.h.b16 %v733
        %v838 = vunpack.c.l.b16 %v734
        %v839 = vunpack.c.h.b16 %v734
        %v840 = vunpack.c.l.b16 %v735
        %v841 = vunpack.c.h.b16 %v735
        %v842 = vunpack.c.l.b16 %v736
        %v843 = vunpack.c.h.b16 %v736
        %v844 = vunpack.c.l.b16 %v737
        %v845 = vunpack.c.h.b16 %v737
        %v846 = vunpack.c.l.b16 %v738
        %v847 = vunpack.c.h.b16 %v738
        %v848 = vunpack.c.l.b16 %v739
        %v849 = vunpack.c.h.b16 %v739
        %v850 = vpack.c.b16 %v788, %v786
        %v851 = vpack.c.b16 %v789, %v787
        %v852 = vpack.c.b16 %v792, %v790
        %v853 = vpack.c.b16 %v793, %v791
        %v854 = vpack.c.b16 %v796, %v794
        %v855 = vpack.c.b16 %v797, %v795
        %v856 = vpack.c.b16 %v800, %v798
        %v857 = vpack.c.b16 %v801, %v799
        %v858 = vpack.c.b16 %v804, %v802
        %v859 = vpack.c.b16 %v805, %v803
        %v860 = vpack.c.b16 %v808, %v806
        %v861 = vpack.c.b16 %v809, %v807
        %v862 = vpack.c.b16 %v812, %v810
        %v863 = vpack.c.b16 %v813, %v811
        %v864 = vpack.c.b16 %v816, %v814
        %v865 = vpack.c.b16 %v817, %v815
        %v866 = vpack.c.b16 %v820, %v818
        %v867 = vpack.c.b16 %v821, %v819
        %v868 = vpack.c.b16 %v824, %v822
        %v869 = vpack.c.b16 %v825, %v823
        %v870 = vpack.c.b16 %v828, %v826
        %v871 = vpack.c.b16 %v829, %v827
        %v872 = vpack.c.b16 %v832, %v830
        %v873 = vpack.c.b16 %v833, %v831
        %v874 = vpack.c.b16 %v836, %v834
        %v875 = vpack.c.b16 %v837, %v835
        %v876 = vpack.c.b16 %v840, %v838
        %v877 = vpack.c.b16 %v841, %v839
        %v878 = vpack.c.b16 %v844, %v842
        %v879 = vpack.c.b16 %v845, %v843
        %v880 = vpack.c.b16 %v848, %v846
        %v881 = vpack.c.b16 %v849, %v847
        %914 = vmatprep.subr.bf16.mxu0 %v865
        %915 = vmatpush1.bf16.msra.mxu0 %v864
        %916 = vmatprep.subr.bf16.mxu0 %v863
        %917 = vmatpush1.bf16.msra.mxu0 %v862
        %918 = vmatprep.subr.bf16.mxu0 %v861
        %919 = vmatpush1.bf16.msra.mxu0 %v860
        %920 = vmatprep.subr.bf16.mxu0 %v859
        %921 = vmatpush1.bf16.msra.mxu0 %v858
        %922 = vmatprep.subr.bf16.mxu0 %v857
        %923 = vmatpush1.bf16.msra.mxu0 %v856
        %924 = vmatprep.subr.bf16.mxu0 %v855
        %925 = vmatpush1.bf16.msra.mxu0 %v854
        %926 = vmatprep.subr.bf16.mxu0 %v853
        %927 = vmatpush1.bf16.msra.mxu0 %v852
        %928 = vmatprep.subr.bf16.mxu0 %v851
        %929 = vmatpush1.bf16.msra.mxu0 %v850
        %930 = vmatprep.subr.bf16.mxu0 %v881
        %931 = vmatpush2.bf16.msra.mxu0 %v880
        %932 = vmatprep.subr.bf16.mxu0 %v879
        %933 = vmatpush2.bf16.msra.mxu0 %v878
        %934 = vmatprep.subr.bf16.mxu0 %v877
        %935 = vmatpush2.bf16.msra.mxu0 %v876
        %936 = vmatprep.subr.bf16.mxu0 %v875
        %937 = vmatpush2.bf16.msra.mxu0 %v874
        %938 = vmatprep.subr.bf16.mxu0 %v873
        %939 = vmatpush2.bf16.msra.mxu0 %v872
        %940 = vmatprep.subr.bf16.mxu0 %v871
        %941 = vmatpush2.bf16.msra.mxu0 %v870
        %942 = vmatprep.subr.bf16.mxu0 %v869
        %943 = vmatpush2.bf16.msra.mxu0 %v868
        %944 = vmatprep.subr.bf16.mxu0 %v867
        %945 = vmatpush2.bf16.msra.mxu0 %v866
        %946 = vmatprep.mubr.bf16.mxu0 %v742
        %947 = vmatmul.mubr.bf16.gmra.mxu0 %v741
        %v948 = vpop.f32.mrf.mxu0
        %v949 = vadd.f32 %v747, %v948
        %v950 = vpop.f32.mrf.mxu0
        %v951 = vadd.f32 %v751, %v950
        %v952 = vpop.f32.mrf.mxu0
        %v953 = vadd.f32 %v747, %v952
        %v954 = vpop.f32.mrf.mxu0
        %v955 = vadd.f32 %v751, %v954
        %956 = vdwg.mxu0
        %v957 = vpack.c.bf16 %v706, %v704
        %v958 = vpack.c.bf16 %v707, %v705
        %959 = vmatprep.subr.bf16.mxu0 %v865
        %960 = vmatpush1.bf16.msra.mxu0 %v864
        %961 = vmatprep.subr.bf16.mxu0 %v863
        %962 = vmatpush1.bf16.msra.mxu0 %v862
        %963 = vmatprep.subr.bf16.mxu0 %v861
        %964 = vmatpush1.bf16.msra.mxu0 %v860
        %965 = vmatprep.subr.bf16.mxu0 %v859
        %966 = vmatpush1.bf16.msra.mxu0 %v858
        %967 = vmatprep.subr.bf16.mxu0 %v857
        %968 = vmatpush1.bf16.msra.mxu0 %v856
        %969 = vmatprep.subr.bf16.mxu0 %v855
        %970 = vmatpush1.bf16.msra.mxu0 %v854
        %971 = vmatprep.subr.bf16.mxu0 %v853
        %972 = vmatpush1.bf16.msra.mxu0 %v852
        %973 = vmatprep.subr.bf16.mxu0 %v851
        %974 = vmatpush1.bf16.msra.mxu0 %v850
        %975 = vmatprep.subr.bf16.mxu0 %v881
        %976 = vmatpush2.bf16.msra.mxu0 %v880
        %977 = vmatprep.subr.bf16.mxu0 %v879
        %978 = vmatpush2.bf16.msra.mxu0 %v878
        %979 = vmatprep.subr.bf16.mxu0 %v877
        %980 = vmatpush2.bf16.msra.mxu0 %v876
        %981 = vmatprep.subr.bf16.mxu0 %v875
        %982 = vmatpush2.bf16.msra.mxu0 %v874
        %983 = vmatprep.subr.bf16.mxu0 %v873
        %984 = vmatpush2.bf16.msra.mxu0 %v872
        %985 = vmatprep.subr.bf16.mxu0 %v871
        %986 = vmatpush2.bf16.msra.mxu0 %v870
        %987 = vmatprep.subr.bf16.mxu0 %v869
        %988 = vmatpush2.bf16.msra.mxu0 %v868
        %989 = vmatprep.subr.bf16.mxu0 %v867
        %990 = vmatpush2.bf16.msra.mxu0 %v866
        %991 = vmatprep.mubr.bf16.mxu0 %v958
        %992 = vmatmul.mubr.bf16.gmra.mxu0 %v957
        %v993 = vpop.f32.mrf.mxu0
        %v994 = vadd.f32 %v747, %v993
        %v995 = vpop.f32.mrf.mxu0
        %v996 = vadd.f32 %v751, %v995
        %v997 = vpop.f32.mrf.mxu0
        %v998 = vadd.f32 %v747, %v997
        %v999 = vpop.f32.mrf.mxu0
        %v1000 = vadd.f32 %v751, %v999
        %1001 = vdwg.mxu0
        %v1002 = vadd.f32 %v949, %v951
        %1003 = vadd.xlane.f32.xlu0 %v1002
        %v1004 = vpop.xlane.xlu0 %1003
        %v1005 = vadd.f32 %v953, %v955
        %1006 = vadd.xlane.f32.xlu0 %v1005
        %v1007 = vpop.xlane.xlu0 %1006
        %v1008 = vmul.f32 %v949, %v949
        %v1009 = vmul.f32 %v951, %v951
        %v1010 = vmul.f32 %v953, %v953
        %v1011 = vmul.f32 %v955, %v955
        %v1012 = vadd.f32 %v1008, %v1009
        %1013 = vadd.xlane.f32.xlu0 %v1012
        %v1014 = vpop.xlane.xlu0 %1013
        %v1015 = vadd.f32 %v1010, %v1011
        %1016 = vadd.xlane.f32.xlu0 %v1015
        %v1017 = vpop.xlane.xlu0 %1016
        %v1018 = vmul.f32 %v1004, 0.005
        %v1019 = vmul.f32 %v1007, 0.005
        %v1020 = vmul.f32 %v1014, 0.005
        %v1021 = vmul.f32 %v1017, 0.005
        %v1022 = vmul.f32 %v1018, %v1018
        %v1023 = vmul.f32 %v1019, %v1019
        %v1024 = vsub.f32 %v1020, %v1022
        %v1025 = vsub.f32 %v1021, %v1023
        %v1026 = vsub.f32 %v949, %v1018
        %v1027 = vsub.f32 %v951, %v1018
        %v1028 = vsub.f32 %v953, %v1019
        %v1029 = vsub.f32 %v955, %v1019
        %v1030 = vadd.f32 %v1024, 1e-05
        %v1031 = vadd.f32 %v1025, 1e-05
        %v1032 = vrsqrt.pop %v1030
        %v1033 = vrsqrt.pop %v1031
        %v1034 = vmul.f32 %v1026, %v1032
        %v1035 = vmul.f32 %v1027, %v1032
        %v1036 = vmul.f32 %v1028, %v1033
        %v1037 = vmul.f32 %v1029, %v1033
        %v1038 = vmul.f32 %v1034, %v534
        %v1039 = vmul.f32 %v1035, %v538
        %v1040 = vmul.f32 %v1036, %v534
        %v1041 = vmul.f32 %v1037, %v538
        %v1042 = vadd.f32 %v1038, %v549
        %v1043 = vadd.f32 %v1039, %v553
        %v1044 = vadd.f32 %v1040, %v549
        %v1045 = vadd.f32 %v1041, %v553
        %v1046 = vmin.f32 %v1042, 20.0
        %v1047 = vmin.f32 %v1043, 20.0
        %v1048 = vmin.f32 %v1044, 20.0
        %v1049 = vmin.f32 %v1045, 20.0
        %v1050 = vmul.f32 %v1046, 1.442695
        %v1051 = vpow.pop %v1050
        %v1052 = vmul.f32 %v1047, 1.442695
        %v1053 = vpow.pop %v1052
        %v1054 = vmul.f32 %v1048, 1.442695
        %v1055 = vpow.pop %v1054
        %v1056 = vmul.f32 %v1049, 1.442695
        %v1057 = vpow.pop %v1056
        %v1058 = vadd.f32 %v1051, 2.0
        %v1059 = vadd.f32 %v1053, 2.0
        %v1060 = vadd.f32 %v1055, 2.0
        %v1061 = vadd.f32 %v1057, 2.0
        %v1062 = vmul.f32 %v1051, %v1058
        %v1063 = vmul.f32 %v1053, %v1059
        %v1064 = vmul.f32 %v1055, %v1060
        %v1065 = vmul.f32 %v1057, %v1061
        %v1066 = vadd.f32 %v1062, 2.0
        %v1067 = vadd.f32 %v1063, 2.0
        %v1068 = vadd.f32 %v1064, 2.0
        %v1069 = vadd.f32 %v1065, 2.0
        %v1070 = vrcp.pop %v1066
        %v1071 = vrcp.pop %v1067
        %v1072 = vrcp.pop %v1068
        %v1073 = vrcp.pop %v1069
        %v1074 = vmul.f32 %v1066, %v1070
        %v1075 = vmul.f32 %v1067, %v1071
        %v1076 = vmul.f32 %v1068, %v1072
        %v1077 = vmul.f32 %v1069, %v1073
        %v1078 = vsub.f32 2.0, %v1074
        %v1079 = vsub.f32 2.0, %v1075
        %v1080 = vsub.f32 2.0, %v1076
        %v1081 = vsub.f32 2.0, %v1077
        %v1082 = vmul.f32 %v1070, %v1078
        %v1083 = vmul.f32 %v1071, %v1079
        %v1084 = vmul.f32 %v1072, %v1080
        %v1085 = vmul.f32 %v1073, %v1081
        %v1086 = vadd.f32 %v1042, %v1042
        %v1087 = vadd.f32 %v1043, %v1043
        %v1088 = vadd.f32 %v1044, %v1044
        %v1089 = vadd.f32 %v1045, %v1045
        %v1090 = vmul.f32 %v1086, %v1082
        %v1091 = vmul.f32 %v1087, %v1083
        %v1092 = vmul.f32 %v1088, %v1084
        %v1093 = vmul.f32 %v1089, %v1085
        %v1094 = vsub.f32 %v1042, %v1090
        %v1095 = vsub.f32 %v1043, %v1091
        %v1096 = vsub.f32 %v1044, %v1092
        %v1097 = vsub.f32 %v1045, %v1093
        %v1098 = vadd.f32 %v994, %v996
        %1099 = vadd.xlane.f32.xlu0 %v1098
        %v1100 = vpop.xlane.xlu0 %1099
        %v1101 = vadd.f32 %v998, %v1000
        %1102 = vadd.xlane.f32.xlu0 %v1101
        %v1103 = vpop.xlane.xlu0 %1102
        %v1104 = vmul.f32 %v994, %v994
        %v1105 = vmul.f32 %v996, %v996
        %v1106 = vmul.f32 %v998, %v998
        %v1107 = vmul.f32 %v1000, %v1000
        %v1108 = vadd.f32 %v1104, %v1105
        %1109 = vadd.xlane.f32.xlu0 %v1108
        %v1110 = vpop.xlane.xlu0 %1109
        %v1111 = vadd.f32 %v1106, %v1107
        %1112 = vadd.xlane.f32.xlu0 %v1111
        %v1113 = vpop.xlane.xlu0 %1112
        %v1114 = vmul.f32 %v1100, 0.005
        %v1115 = vmul.f32 %v1103, 0.005
        %v1116 = vmul.f32 %v1110, 0.005
        %v1117 = vmul.f32 %v1113, 0.005
        %v1118 = vmul.f32 %v1114, %v1114
        %v1119 = vmul.f32 %v1115, %v1115
        %v1120 = vsub.f32 %v1116, %v1118
        %v1121 = vsub.f32 %v1117, %v1119
        %v1122 = vsub.f32 %v994, %v1114
        %v1123 = vsub.f32 %v996, %v1114
        %v1124 = vsub.f32 %v998, %v1115
        %v1125 = vsub.f32 %v1000, %v1115
        %v1126 = vadd.f32 %v1120, 1e-05
        %v1127 = vadd.f32 %v1121, 1e-05
        %v1128 = vrsqrt.pop %v1126
        %v1129 = vrsqrt.pop %v1127
        %v1130 = vmul.f32 %v1122, %v1128
        %v1131 = vmul.f32 %v1123, %v1128
        %v1132 = vmul.f32 %v1124, %v1129
        %v1133 = vmul.f32 %v1125, %v1129
        %v1134 = vmul.f32 %v1130, %v534
        %v1135 = vmul.f32 %v1131, %v538
        %v1136 = vmul.f32 %v1132, %v534
        %v1137 = vmul.f32 %v1133, %v538
        %v1138 = vadd.f32 %v1134, %v549
        %v1139 = vadd.f32 %v1135, %v553
        %v1140 = vadd.f32 %v1136, %v549
        %v1141 = vadd.f32 %v1137, %v553
        %v1142 = vmin.f32 %v1138, 20.0
        %v1143 = vmin.f32 %v1139, 20.0
        %v1144 = vmin.f32 %v1140, 20.0
        %v1145 = vmin.f32 %v1141, 20.0
        %v1146 = vmul.f32 %v1142, 1.442695
        %v1147 = vpow.pop %v1146
        %v1148 = vmul.f32 %v1143, 1.442695
        %v1149 = vpow.pop %v1148
        %v1150 = vmul.f32 %v1144, 1.442695
        %v1151 = vpow.pop %v1150
        %v1152 = vmul.f32 %v1145, 1.442695
        %v1153 = vpow.pop %v1152
        %v1154 = vadd.f32 %v1147, 2.0
        %v1155 = vadd.f32 %v1149, 2.0
        %v1156 = vadd.f32 %v1151, 2.0
        %v1157 = vadd.f32 %v1153, 2.0
        %v1158 = vmul.f32 %v1147, %v1154
        %v1159 = vmul.f32 %v1149, %v1155
        %v1160 = vmul.f32 %v1151, %v1156
        %v1161 = vmul.f32 %v1153, %v1157
        %v1162 = vadd.f32 %v1158, 2.0
        %v1163 = vadd.f32 %v1159, 2.0
        %v1164 = vadd.f32 %v1160, 2.0
        %v1165 = vadd.f32 %v1161, 2.0
        %v1166 = vrcp.pop %v1162
        %v1167 = vrcp.pop %v1163
        %v1168 = vrcp.pop %v1164
        %v1169 = vrcp.pop %v1165
        %v1170 = vmul.f32 %v1162, %v1166
        %v1171 = vmul.f32 %v1163, %v1167
        %v1172 = vmul.f32 %v1164, %v1168
        %v1173 = vmul.f32 %v1165, %v1169
        %v1174 = vsub.f32 2.0, %v1170
        %v1175 = vsub.f32 2.0, %v1171
        %v1176 = vsub.f32 2.0, %v1172
        %v1177 = vsub.f32 2.0, %v1173
        %v1178 = vmul.f32 %v1166, %v1174
        %v1179 = vmul.f32 %v1167, %v1175
        %v1180 = vmul.f32 %v1168, %v1176
        %v1181 = vmul.f32 %v1169, %v1177
        %v1182 = vadd.f32 %v1138, %v1138
        %v1183 = vadd.f32 %v1139, %v1139
        %v1184 = vadd.f32 %v1140, %v1140
        %v1185 = vadd.f32 %v1141, %v1141
        %v1186 = vmul.f32 %v1182, %v1178
        %v1187 = vmul.f32 %v1183, %v1179
        %v1188 = vmul.f32 %v1184, %v1180
        %v1189 = vmul.f32 %v1185, %v1181
        %v1190 = vsub.f32 %v1138, %v1186
        %v1191 = vsub.f32 %v1139, %v1187
        %v1192 = vsub.f32 %v1140, %v1188
        %v1193 = vsub.f32 %v1141, %v1189
        %s1194 = scalar_lea.vmem [#allocation3], 256
        %v1195 = vld [vmem:[%s1194] sm:$0xff]
        %v1196 = vld [vmem:[%s1194 + $0x8] sm:$0xff]
        %v1197 = vld [vmem:[%s1194 + $0x10] sm:$0xff]
        %v1198 = vld [vmem:[%s1194 + $0x18] sm:$0xff]
        %v1199 = vld [vmem:[%s1194 + $0x20] sm:$0xff]
        %v1200 = vld [vmem:[%s1194 + $0x28] sm:$0xff]
        %v1201 = vld [vmem:[%s1194 + $0x30] sm:$0xff]
        %v1202 = vld [vmem:[%s1194 + $0x38] sm:$0xff]
        %v1203 = vld [vmem:[%s1194 + $0x40] sm:$0xff]
        %v1204 = vld [vmem:[%s1194 + $0x48] sm:$0xff]
        %v1205 = vld [vmem:[%s1194 + $0x50] sm:$0xff]
        %v1206 = vld [vmem:[%s1194 + $0x58] sm:$0xff]
        %v1207 = vld [vmem:[%s1194 + $0x60] sm:$0xff]
        %v1208 = vld [vmem:[%s1194 + $0x68] sm:$0xff]
        %v1209 = vld [vmem:[%s1194 + $0x70] sm:$0xff]
        %v1210 = vld [vmem:[%s1194 + $0x78] sm:$0xff]
        %v1211 = vld [vmem:[%s1194 + $0x80] sm:$0xff]
        %v1212 = vld [vmem:[%s1194 + $0x88] sm:$0xff]
        %v1213 = vld [vmem:[%s1194 + $0x90] sm:$0xff]
        %v1214 = vld [vmem:[%s1194 + $0x98] sm:$0xff]
        %v1215 = vld [vmem:[%s1194 + $0xa0] sm:$0xff]
        %v1216 = vld [vmem:[%s1194 + $0xa8] sm:$0xff]
        %v1217 = vld [vmem:[%s1194 + $0xb0] sm:$0xff]
        %v1218 = vld [vmem:[%s1194 + $0xb8] sm:$0xff]
        %v1219 = vld [vmem:[%s1194 + $0xc0] sm:$0xff]
        %v1220 = vld [vmem:[%s1194 + $0xc8] sm:$0xff]
        %v1221 = vld [vmem:[%s1194 + $0xd0] sm:$0xff]
        %v1222 = vld [vmem:[%s1194 + $0xd8] sm:$0xff]
        %v1223 = vld [vmem:[%s1194 + $0xe0] sm:$0xff]
        %v1224 = vld [vmem:[%s1194 + $0xe8] sm:$0xff]
        %v1225 = vld [vmem:[%s1194 + $0xf0] sm:$0xff]
        %v1226 = vld [vmem:[%s1194 + $0xf8] sm:$0xff]
        %s1227 = scalar_lea.vmem %s4, 2
        %v1228 = vld [vmem:[%s1227] sm:$0x3]
        %v1229 = vpack.c.bf16 %v1096, %v1094
        %v1230 = vpack.c.bf16 %v1097, %v1095
        %v1232 = vlaneseq
        %v1233 = vshrl.u32 %v1232, 7
        %v1234 = vsub.s32 0, %v1233
        %v1235 = vrot.slane %v1228, %v1234
        %v1236 = vlaneseq
        %v1237 = vshrl.u32 %v1236, 7
        %v1238 = vsub.s32 1, %v1237
        %v1239 = vrot.slane %v1228, %v1238
        %v1274 = vunpack.c.l.b16 %v1195
        %v1275 = vunpack.c.h.b16 %v1195
        %v1276 = vunpack.c.l.b16 %v1196
        %v1277 = vunpack.c.h.b16 %v1196
        %v1278 = vunpack.c.l.b16 %v1197
        %v1279 = vunpack.c.h.b16 %v1197
        %v1280 = vunpack.c.l.b16 %v1198
        %v1281 = vunpack.c.h.b16 %v1198
        %v1282 = vunpack.c.l.b16 %v1199
        %v1283 = vunpack.c.h.b16 %v1199
        %v1284 = vunpack.c.l.b16 %v1200
        %v1285 = vunpack.c.h.b16 %v1200
        %v1286 = vunpack.c.l.b16 %v1201
        %v1287 = vunpack.c.h.b16 %v1201
        %v1288 = vunpack.c.l.b16 %v1202
        %v1289 = vunpack.c.h.b16 %v1202
        %v1290 = vunpack.c.l.b16 %v1203
        %v1291 = vunpack.c.h.b16 %v1203
        %v1292 = vunpack.c.l.b16 %v1204
        %v1293 = vunpack.c.h.b16 %v1204
        %v1294 = vunpack.c.l.b16 %v1205
        %v1295 = vunpack.c.h.b16 %v1205
        %v1296 = vunpack.c.l.b16 %v1206
        %v1297 = vunpack.c.h.b16 %v1206
        %v1298 = vunpack.c.l.b16 %v1207
        %v1299 = vunpack.c.h.b16 %v1207
        %v1300 = vunpack.c.l.b16 %v1208
        %v1301 = vunpack.c.h.b16 %v1208
        %v1302 = vunpack.c.l.b16 %v1209
        %v1303 = vunpack.c.h.b16 %v1209
        %v1304 = vunpack.c.l.b16 %v1210
        %v1305 = vunpack.c.h.b16 %v1210
        %v1306 = vunpack.c.l.b16 %v1211
        %v1307 = vunpack.c.h.b16 %v1211
        %v1308 = vunpack.c.l.b16 %v1212
        %v1309 = vunpack.c.h.b16 %v1212
        %v1310 = vunpack.c.l.b16 %v1213
        %v1311 = vunpack.c.h.b16 %v1213
        %v1312 = vunpack.c.l.b16 %v1214
        %v1313 = vunpack.c.h.b16 %v1214
        %v1314 = vunpack.c.l.b16 %v1215
        %v1315 = vunpack.c.h.b16 %v1215
        %v1316 = vunpack.c.l.b16 %v1216
        %v1317 = vunpack.c.h.b16 %v1216
        %v1318 = vunpack.c.l.b16 %v1217
        %v1319 = vunpack.c.h.b16 %v1217
        %v1320 = vunpack.c.l.b16 %v1218
        %v1321 = vunpack.c.h.b16 %v1218
        %v1322 = vunpack.c.l.b16 %v1219
        %v1323 = vunpack.c.h.b16 %v1219
        %v1324 = vunpack.c.l.b16 %v1220
        %v1325 = vunpack.c.h.b16 %v1220
        %v1326 = vunpack.c.l.b16 %v1221
        %v1327 = vunpack.c.h.b16 %v1221
        %v1328 = vunpack.c.l.b16 %v1222
        %v1329 = vunpack.c.h.b16 %v1222
        %v1330 = vunpack.c.l.b16 %v1223
        %v1331 = vunpack.c.h.b16 %v1223
        %v1332 = vunpack.c.l.b16 %v1224
        %v1333 = vunpack.c.h.b16 %v1224
        %v1334 = vunpack.c.l.b16 %v1225
        %v1335 = vunpack.c.h.b16 %v1225
        %v1336 = vunpack.c.l.b16 %v1226
        %v1337 = vunpack.c.h.b16 %v1226
        %v1338 = vpack.c.b16 %v1276, %v1274
        %v1339 = vpack.c.b16 %v1277, %v1275
        %v1340 = vpack.c.b16 %v1280, %v1278
        %v1341 = vpack.c.b16 %v1281, %v1279
        %v1342 = vpack.c.b16 %v1284, %v1282
        %v1343 = vpack.c.b16 %v1285, %v1283
        %v1344 = vpack.c.b16 %v1288, %v1286
        %v1345 = vpack.c.b16 %v1289, %v1287
        %v1346 = vpack.c.b16 %v1292, %v1290
        %v1347 = vpack.c.b16 %v1293, %v1291
        %v1348 = vpack.c.b16 %v1296, %v1294
        %v1349 = vpack.c.b16 %v1297, %v1295
        %v1350 = vpack.c.b16 %v1300, %v1298
        %v1351 = vpack.c.b16 %v1301, %v1299
        %v1352 = vpack.c.b16 %v1304, %v1302
        %v1353 = vpack.c.b16 %v1305, %v1303
        %v1354 = vpack.c.b16 %v1308, %v1306
        %v1355 = vpack.c.b16 %v1309, %v1307
        %v1356 = vpack.c.b16 %v1312, %v1310
        %v1357 = vpack.c.b16 %v1313, %v1311
        %v1358 = vpack.c.b16 %v1316, %v1314
        %v1359 = vpack.c.b16 %v1317, %v1315
        %v1360 = vpack.c.b16 %v1320, %v1318
        %v1361 = vpack.c.b16 %v1321, %v1319
        %v1362 = vpack.c.b16 %v1324, %v1322
        %v1363 = vpack.c.b16 %v1325, %v1323
        %v1364 = vpack.c.b16 %v1328, %v1326
        %v1365 = vpack.c.b16 %v1329, %v1327
        %v1366 = vpack.c.b16 %v1332, %v1330
        %v1367 = vpack.c.b16 %v1333, %v1331
        %v1368 = vpack.c.b16 %v1336, %v1334
        %v1369 = vpack.c.b16 %v1337, %v1335
        %1402 = vmatprep.subr.bf16.mxu0 %v1353
        %1403 = vmatpush1.bf16.msra.mxu0 %v1352
        %1404 = vmatprep.subr.bf16.mxu0 %v1351
        %1405 = vmatpush1.bf16.msra.mxu0 %v1350
        %1406 = vmatprep.subr.bf16.mxu0 %v1349
        %1407 = vmatpush1.bf16.msra.mxu0 %v1348
        %1408 = vmatprep.subr.bf16.mxu0 %v1347
        %1409 = vmatpush1.bf16.msra.mxu0 %v1346
        %1410 = vmatprep.subr.bf16.mxu0 %v1345
        %1411 = vmatpush1.bf16.msra.mxu0 %v1344
        %1412 = vmatprep.subr.bf16.mxu0 %v1343
        %1413 = vmatpush1.bf16.msra.mxu0 %v1342
        %1414 = vmatprep.subr.bf16.mxu0 %v1341
        %1415 = vmatpush1.bf16.msra.mxu0 %v1340
        %1416 = vmatprep.subr.bf16.mxu0 %v1339
        %1417 = vmatpush1.bf16.msra.mxu0 %v1338
        %1418 = vmatprep.subr.bf16.mxu0 %v1369
        %1419 = vmatpush2.bf16.msra.mxu0 %v1368
        %1420 = vmatprep.subr.bf16.mxu0 %v1367
        %1421 = vmatpush2.bf16.msra.mxu0 %v1366
        %1422 = vmatprep.subr.bf16.mxu0 %v1365
        %1423 = vmatpush2.bf16.msra.mxu0 %v1364
        %1424 = vmatprep.subr.bf16.mxu0 %v1363
        %1425 = vmatpush2.bf16.msra.mxu0 %v1362
        %1426 = vmatprep.subr.bf16.mxu0 %v1361
        %1427 = vmatpush2.bf16.msra.mxu0 %v1360
        %1428 = vmatprep.subr.bf16.mxu0 %v1359
        %1429 = vmatpush2.bf16.msra.mxu0 %v1358
        %1430 = vmatprep.subr.bf16.mxu0 %v1357
        %1431 = vmatpush2.bf16.msra.mxu0 %v1356
        %1432 = vmatprep.subr.bf16.mxu0 %v1355
        %1433 = vmatpush2.bf16.msra.mxu0 %v1354
        %1434 = vmatprep.mubr.bf16.mxu0 %v1230
        %1435 = vmatmul.mubr.bf16.gmra.mxu0 %v1229
        %v1436 = vpop.f32.mrf.mxu0
        %v1437 = vadd.f32 %v1235, %v1436
        %v1438 = vpop.f32.mrf.mxu0
        %v1439 = vadd.f32 %v1239, %v1438
        %v1440 = vpop.f32.mrf.mxu0
        %v1441 = vadd.f32 %v1235, %v1440
        %v1442 = vpop.f32.mrf.mxu0
        %v1443 = vadd.f32 %v1239, %v1442
        %1444 = vdwg.mxu0
        %v1445 = vpack.c.bf16 %v1192, %v1190
        %v1446 = vpack.c.bf16 %v1193, %v1191
        %1447 = vmatprep.subr.bf16.mxu0 %v1353
        %1448 = vmatpush1.bf16.msra.mxu0 %v1352
        %1449 = vmatprep.subr.bf16.mxu0 %v1351
        %1450 = vmatpush1.bf16.msra.mxu0 %v1350
        %1451 = vmatprep.subr.bf16.mxu0 %v1349
        %1452 = vmatpush1.bf16.msra.mxu0 %v1348
        %1453 = vmatprep.subr.bf16.mxu0 %v1347
        %1454 = vmatpush1.bf16.msra.mxu0 %v1346
        %1455 = vmatprep.subr.bf16.mxu0 %v1345
        %1456 = vmatpush1.bf16.msra.mxu0 %v1344
        %1457 = vmatprep.subr.bf16.mxu0 %v1343
        %1458 = vmatpush1.bf16.msra.mxu0 %v1342
        %1459 = vmatprep.subr.bf16.mxu0 %v1341
        %1460 = vmatpush1.bf16.msra.mxu0 %v1340
        %1461 = vmatprep.subr.bf16.mxu0 %v1339
        %1462 = vmatpush1.bf16.msra.mxu0 %v1338
        %1463 = vmatprep.subr.bf16.mxu0 %v1369
        %1464 = vmatpush2.bf16.msra.mxu0 %v1368
        %1465 = vmatprep.subr.bf16.mxu0 %v1367
        %1466 = vmatpush2.bf16.msra.mxu0 %v1366
        %1467 = vmatprep.subr.bf16.mxu0 %v1365
        %1468 = vmatpush2.bf16.msra.mxu0 %v1364
        %1469 = vmatprep.subr.bf16.mxu0 %v1363
        %1470 = vmatpush2.bf16.msra.mxu0 %v1362
        %1471 = vmatprep.subr.bf16.mxu0 %v1361
        %1472 = vmatpush2.bf16.msra.mxu0 %v1360
        %1473 = vmatprep.subr.bf16.mxu0 %v1359
        %1474 = vmatpush2.bf16.msra.mxu0 %v1358
        %1475 = vmatprep.subr.bf16.mxu0 %v1357
        %1476 = vmatpush2.bf16.msra.mxu0 %v1356
        %1477 = vmatprep.subr.bf16.mxu0 %v1355
        %1478 = vmatpush2.bf16.msra.mxu0 %v1354
        %1479 = vmatprep.mubr.bf16.mxu0 %v1446
        %1480 = vmatmul.mubr.bf16.gmra.mxu0 %v1445
        %v1481 = vpop.f32.mrf.mxu0
        %v1482 = vadd.f32 %v1235, %v1481
        %v1483 = vpop.f32.mrf.mxu0
        %v1484 = vadd.f32 %v1239, %v1483
        %v1485 = vpop.f32.mrf.mxu0
        %v1486 = vadd.f32 %v1235, %v1485
        %v1487 = vpop.f32.mrf.mxu0
        %v1488 = vadd.f32 %v1239, %v1487
        %1489 = vdwg.mxu0
        %v1490 = vadd.f32 %v1437, %v1439
        %1491 = vadd.xlane.f32.xlu0 %v1490
        %v1492 = vpop.xlane.xlu0 %1491
        %v1493 = vadd.f32 %v1441, %v1443
        %1494 = vadd.xlane.f32.xlu0 %v1493
        %v1495 = vpop.xlane.xlu0 %1494
        %v1496 = vmul.f32 %v1437, %v1437
        %v1497 = vmul.f32 %v1439, %v1439
        %v1498 = vmul.f32 %v1441, %v1441
        %v1499 = vmul.f32 %v1443, %v1443
        %v1500 = vadd.f32 %v1496, %v1497
        %1501 = vadd.xlane.f32.xlu0 %v1500
        %v1502 = vpop.xlane.xlu0 %1501
        %v1503 = vadd.f32 %v1498, %v1499
        %1504 = vadd.xlane.f32.xlu0 %v1503
        %v1505 = vpop.xlane.xlu0 %1504
        %v1506 = vmul.f32 %v1492, 0.005
        %v1507 = vmul.f32 %v1495, 0.005
        %v1508 = vmul.f32 %v1502, 0.005
        %v1509 = vmul.f32 %v1505, 0.005
        %v1510 = vmul.f32 %v1506, %v1506
        %v1511 = vmul.f32 %v1507, %v1507
        %v1512 = vsub.f32 %v1508, %v1510
        %v1513 = vsub.f32 %v1509, %v1511
        %v1514 = vsub.f32 %v1437, %v1506
        %v1515 = vsub.f32 %v1439, %v1506
        %v1516 = vsub.f32 %v1441, %v1507
        %v1517 = vsub.f32 %v1443, %v1507
        %v1518 = vadd.f32 %v1512, 1e-05
        %v1519 = vadd.f32 %v1513, 1e-05
        %v1520 = vrsqrt.pop %v1518
        %v1521 = vrsqrt.pop %v1519
        %v1522 = vmul.f32 %v1514, %v1520
        %v1523 = vmul.f32 %v1515, %v1520
        %v1524 = vmul.f32 %v1516, %v1521
        %v1525 = vmul.f32 %v1517, %v1521
        %v1526 = vmul.f32 %v1522, %v534
        %v1527 = vmul.f32 %v1523, %v538
        %v1528 = vmul.f32 %v1524, %v534
        %v1529 = vmul.f32 %v1525, %v538
        %v1530 = vadd.f32 %v1526, %v549
        %v1531 = vadd.f32 %v1527, %v553
        %v1532 = vadd.f32 %v1528, %v549
        %v1533 = vadd.f32 %v1529, %v553
        %v1534 = vmin.f32 %v1530, 20.0
        %v1535 = vmin.f32 %v1531, 20.0
        %v1536 = vmin.f32 %v1532, 20.0
        %v1537 = vmin.f32 %v1533, 20.0
        %v1538 = vmul.f32 %v1534, 1.442695
        %v1539 = vpow.pop %v1538
        %v1540 = vmul.f32 %v1535, 1.442695
        %v1541 = vpow.pop %v1540
        %v1542 = vmul.f32 %v1536, 1.442695
        %v1543 = vpow.pop %v1542
        %v1544 = vmul.f32 %v1537, 1.442695
        %v1545 = vpow.pop %v1544
        %v1546 = vadd.f32 %v1539, 2.0
        %v1547 = vadd.f32 %v1541, 2.0
        %v1548 = vadd.f32 %v1543, 2.0
        %v1549 = vadd.f32 %v1545, 2.0
        %v1550 = vmul.f32 %v1539, %v1546
        %v1551 = vmul.f32 %v1541, %v1547
        %v1552 = vmul.f32 %v1543, %v1548
        %v1553 = vmul.f32 %v1545, %v1549
        %v1554 = vadd.f32 %v1550, 2.0
        %v1555 = vadd.f32 %v1551, 2.0
        %v1556 = vadd.f32 %v1552, 2.0
        %v1557 = vadd.f32 %v1553, 2.0
        %v1558 = vrcp.pop %v1554
        %v1559 = vrcp.pop %v1555
        %v1560 = vrcp.pop %v1556
        %v1561 = vrcp.pop %v1557
        %v1562 = vmul.f32 %v1554, %v1558
        %v1563 = vmul.f32 %v1555, %v1559
        %v1564 = vmul.f32 %v1556, %v1560
        %v1565 = vmul.f32 %v1557, %v1561
        %v1566 = vsub.f32 2.0, %v1562
        %v1567 = vsub.f32 2.0, %v1563
        %v1568 = vsub.f32 2.0, %v1564
        %v1569 = vsub.f32 2.0, %v1565
        %v1570 = vmul.f32 %v1558, %v1566
        %v1571 = vmul.f32 %v1559, %v1567
        %v1572 = vmul.f32 %v1560, %v1568
        %v1573 = vmul.f32 %v1561, %v1569
        %v1574 = vadd.f32 %v1530, %v1530
        %v1575 = vadd.f32 %v1531, %v1531
        %v1576 = vadd.f32 %v1532, %v1532
        %v1577 = vadd.f32 %v1533, %v1533
        %v1578 = vmul.f32 %v1574, %v1570
        %v1579 = vmul.f32 %v1575, %v1571
        %v1580 = vmul.f32 %v1576, %v1572
        %v1581 = vmul.f32 %v1577, %v1573
        %v1582 = vsub.f32 %v1530, %v1578
        %v1583 = vsub.f32 %v1531, %v1579
        %v1584 = vsub.f32 %v1532, %v1580
        %v1585 = vsub.f32 %v1533, %v1581
        %v1586 = vadd.f32 %v1482, %v1484
        %1587 = vadd.xlane.f32.xlu0 %v1586
        %v1588 = vpop.xlane.xlu0 %1587
        %v1589 = vadd.f32 %v1486, %v1488
        %1590 = vadd.xlane.f32.xlu0 %v1589
        %v1591 = vpop.xlane.xlu0 %1590
        %v1592 = vmul.f32 %v1482, %v1482
        %v1593 = vmul.f32 %v1484, %v1484
        %v1594 = vmul.f32 %v1486, %v1486
        %v1595 = vmul.f32 %v1488, %v1488
        %v1596 = vadd.f32 %v1592, %v1593
        %1597 = vadd.xlane.f32.xlu0 %v1596
        %v1598 = vpop.xlane.xlu0 %1597
        %v1599 = vadd.f32 %v1594, %v1595
        %1600 = vadd.xlane.f32.xlu0 %v1599
        %v1601 = vpop.xlane.xlu0 %1600
        %v1602 = vmul.f32 %v1588, 0.005
        %v1603 = vmul.f32 %v1591, 0.005
        %v1604 = vmul.f32 %v1598, 0.005
        %v1605 = vmul.f32 %v1601, 0.005
        %v1606 = vmul.f32 %v1602, %v1602
        %v1607 = vmul.f32 %v1603, %v1603
        %v1608 = vsub.f32 %v1604, %v1606
        %v1609 = vsub.f32 %v1605, %v1607
        %v1610 = vsub.f32 %v1482, %v1602
        %v1611 = vsub.f32 %v1484, %v1602
        %v1612 = vsub.f32 %v1486, %v1603
        %v1613 = vsub.f32 %v1488, %v1603
        %v1614 = vadd.f32 %v1608, 1e-05
        %v1615 = vadd.f32 %v1609, 1e-05
        %v1616 = vrsqrt.pop %v1614
        %v1617 = vrsqrt.pop %v1615
        %v1618 = vmul.f32 %v1610, %v1616
        %v1619 = vmul.f32 %v1611, %v1616
        %v1620 = vmul.f32 %v1612, %v1617
        %v1621 = vmul.f32 %v1613, %v1617
        %v1622 = vmul.f32 %v1618, %v534
        %v1623 = vmul.f32 %v1619, %v538
        %v1624 = vmul.f32 %v1620, %v534
        %v1625 = vmul.f32 %v1621, %v538
        %v1626 = vadd.f32 %v1622, %v549
        %v1627 = vadd.f32 %v1623, %v553
        %v1628 = vadd.f32 %v1624, %v549
        %v1629 = vadd.f32 %v1625, %v553
        %v1630 = vmin.f32 %v1626, 20.0
        %v1631 = vmin.f32 %v1627, 20.0
        %v1632 = vmin.f32 %v1628, 20.0
        %v1633 = vmin.f32 %v1629, 20.0
        %v1634 = vmul.f32 %v1630, 1.442695
        %v1635 = vpow.pop %v1634
        %v1636 = vmul.f32 %v1631, 1.442695
        %v1637 = vpow.pop %v1636
        %v1638 = vmul.f32 %v1632, 1.442695
        %v1639 = vpow.pop %v1638
        %v1640 = vmul.f32 %v1633, 1.442695
        %v1641 = vpow.pop %v1640
        %v1642 = vadd.f32 %v1635, 2.0
        %v1643 = vadd.f32 %v1637, 2.0
        %v1644 = vadd.f32 %v1639, 2.0
        %v1645 = vadd.f32 %v1641, 2.0
        %v1646 = vmul.f32 %v1635, %v1642
        %v1647 = vmul.f32 %v1637, %v1643
        %v1648 = vmul.f32 %v1639, %v1644
        %v1649 = vmul.f32 %v1641, %v1645
        %v1650 = vadd.f32 %v1646, 2.0
        %v1651 = vadd.f32 %v1647, 2.0
        %v1652 = vadd.f32 %v1648, 2.0
        %v1653 = vadd.f32 %v1649, 2.0
        %v1654 = vrcp.pop %v1650
        %v1655 = vrcp.pop %v1651
        %v1656 = vrcp.pop %v1652
        %v1657 = vrcp.pop %v1653
        %v1658 = vmul.f32 %v1650, %v1654
        %v1659 = vmul.f32 %v1651, %v1655
        %v1660 = vmul.f32 %v1652, %v1656
        %v1661 = vmul.f32 %v1653, %v1657
        %v1662 = vsub.f32 2.0, %v1658
        %v1663 = vsub.f32 2.0, %v1659
        %v1664 = vsub.f32 2.0, %v1660
        %v1665 = vsub.f32 2.0, %v1661
        %v1666 = vmul.f32 %v1654, %v1662
        %v1667 = vmul.f32 %v1655, %v1663
        %v1668 = vmul.f32 %v1656, %v1664
        %v1669 = vmul.f32 %v1657, %v1665
        %v1670 = vadd.f32 %v1626, %v1626
        %v1671 = vadd.f32 %v1627, %v1627
        %v1672 = vadd.f32 %v1628, %v1628
        %v1673 = vadd.f32 %v1629, %v1629
        %v1674 = vmul.f32 %v1670, %v1666
        %v1675 = vmul.f32 %v1671, %v1667
        %v1676 = vmul.f32 %v1672, %v1668
        %v1677 = vmul.f32 %v1673, %v1669
        %v1678 = vsub.f32 %v1626, %v1674
        %v1679 = vsub.f32 %v1627, %v1675
        %v1680 = vsub.f32 %v1628, %v1676
        %v1681 = vsub.f32 %v1629, %v1677
        %s1682 = scalar_lea.vmem [#allocation3], 512
        %v1683 = vld [vmem:[%s1682] sm:$0xff]
        %v1684 = vld [vmem:[%s1682 + $0x8] sm:$0xff]
        %v1685 = vld [vmem:[%s1682 + $0x10] sm:$0xff]
        %v1686 = vld [vmem:[%s1682 + $0x18] sm:$0xff]
        %v1687 = vld [vmem:[%s1682 + $0x20] sm:$0xff]
        %v1688 = vld [vmem:[%s1682 + $0x28] sm:$0xff]
        %v1689 = vld [vmem:[%s1682 + $0x30] sm:$0xff]
        %v1690 = vld [vmem:[%s1682 + $0x38] sm:$0xff]
        %v1691 = vld [vmem:[%s1682 + $0x40] sm:$0xff]
        %v1692 = vld [vmem:[%s1682 + $0x48] sm:$0xff]
        %v1693 = vld [vmem:[%s1682 + $0x50] sm:$0xff]
        %v1694 = vld [vmem:[%s1682 + $0x58] sm:$0xff]
        %v1695 = vld [vmem:[%s1682 + $0x60] sm:$0xff]
        %v1696 = vld [vmem:[%s1682 + $0x68] sm:$0xff]
        %v1697 = vld [vmem:[%s1682 + $0x70] sm:$0xff]
        %v1698 = vld [vmem:[%s1682 + $0x78] sm:$0xff]
        %v1699 = vld [vmem:[%s1682 + $0x80] sm:$0xff]
        %v1700 = vld [vmem:[%s1682 + $0x88] sm:$0xff]
        %v1701 = vld [vmem:[%s1682 + $0x90] sm:$0xff]
        %v1702 = vld [vmem:[%s1682 + $0x98] sm:$0xff]
        %v1703 = vld [vmem:[%s1682 + $0xa0] sm:$0xff]
        %v1704 = vld [vmem:[%s1682 + $0xa8] sm:$0xff]
        %v1705 = vld [vmem:[%s1682 + $0xb0] sm:$0xff]
        %v1706 = vld [vmem:[%s1682 + $0xb8] sm:$0xff]
        %v1707 = vld [vmem:[%s1682 + $0xc0] sm:$0xff]
        %v1708 = vld [vmem:[%s1682 + $0xc8] sm:$0xff]
        %v1709 = vld [vmem:[%s1682 + $0xd0] sm:$0xff]
        %v1710 = vld [vmem:[%s1682 + $0xd8] sm:$0xff]
        %v1711 = vld [vmem:[%s1682 + $0xe0] sm:$0xff]
        %v1712 = vld [vmem:[%s1682 + $0xe8] sm:$0xff]
        %v1713 = vld [vmem:[%s1682 + $0xf0] sm:$0xff]
        %v1714 = vld [vmem:[%s1682 + $0xf8] sm:$0xff]
        %s1715 = scalar_lea.vmem %s4, 4
        %v1716 = vld [vmem:[%s1715] sm:$0x3]
        %v1717 = vpack.c.bf16 %v1584, %v1582
        %v1718 = vpack.c.bf16 %v1585, %v1583
        %v1720 = vlaneseq
        %v1721 = vshrl.u32 %v1720, 7
        %v1722 = vsub.s32 0, %v1721
        %v1723 = vrot.slane %v1716, %v1722
        %v1724 = vlaneseq
        %v1725 = vshrl.u32 %v1724, 7
        %v1726 = vsub.s32 1, %v1725
        %v1727 = vrot.slane %v1716, %v1726
        %v1762 = vunpack.c.l.b16 %v1683
        %v1763 = vunpack.c.h.b16 %v1683
        %v1764 = vunpack.c.l.b16 %v1684
        %v1765 = vunpack.c.h.b16 %v1684
        %v1766 = vunpack.c.l.b16 %v1685
        %v1767 = vunpack.c.h.b16 %v1685
        %v1768 = vunpack.c.l.b16 %v1686
        %v1769 = vunpack.c.h.b16 %v1686
        %v1770 = vunpack.c.l.b16 %v1687
        %v1771 = vunpack.c.h.b16 %v1687
        %v1772 = vunpack.c.l.b16 %v1688
        %v1773 = vunpack.c.h.b16 %v1688
        %v1774 = vunpack.c.l.b16 %v1689
        %v1775 = vunpack.c.h.b16 %v1689
        %v1776 = vunpack.c.l.b16 %v1690
        %v1777 = vunpack.c.h.b16 %v1690
        %v1778 = vunpack.c.l.b16 %v1691
        %v1779 = vunpack.c.h.b16 %v1691
        %v1780 = vunpack.c.l.b16 %v1692
        %v1781 = vunpack.c.h.b16 %v1692
        %v1782 = vunpack.c.l.b16 %v1693
        %v1783 = vunpack.c.h.b16 %v1693
        %v1784 = vunpack.c.l.b16 %v1694
        %v1785 = vunpack.c.h.b16 %v1694
        %v1786 = vunpack.c.l.b16 %v1695
        %v1787 = vunpack.c.h.b16 %v1695
        %v1788 = vunpack.c.l.b16 %v1696
        %v1789 = vunpack.c.h.b16 %v1696
        %v1790 = vunpack.c.l.b16 %v1697
        %v1791 = vunpack.c.h.b16 %v1697
        %v1792 = vunpack.c.l.b16 %v1698
        %v1793 = vunpack.c.h.b16 %v1698
        %v1794 = vunpack.c.l.b16 %v1699
        %v1795 = vunpack.c.h.b16 %v1699
        %v1796 = vunpack.c.l.b16 %v1700
        %v1797 = vunpack.c.h.b16 %v1700
        %v1798 = vunpack.c.l.b16 %v1701
        %v1799 = vunpack.c.h.b16 %v1701
        %v1800 = vunpack.c.l.b16 %v1702
        %v1801 = vunpack.c.h.b16 %v1702
        %v1802 = vunpack.c.l.b16 %v1703
        %v1803 = vunpack.c.h.b16 %v1703
        %v1804 = vunpack.c.l.b16 %v1704
        %v1805 = vunpack.c.h.b16 %v1704
        %v1806 = vunpack.c.l.b16 %v1705
        %v1807 = vunpack.c.h.b16 %v1705
        %v1808 = vunpack.c.l.b16 %v1706
        %v1809 = vunpack.c.h.b16 %v1706
        %v1810 = vunpack.c.l.b16 %v1707
        %v1811 = vunpack.c.h.b16 %v1707
        %v1812 = vunpack.c.l.b16 %v1708
        %v1813 = vunpack.c.h.b16 %v1708
        %v1814 = vunpack.c.l.b16 %v1709
        %v1815 = vunpack.c.h.b16 %v1709
        %v1816 = vunpack.c.l.b16 %v1710
        %v1817 = vunpack.c.h.b16 %v1710
        %v1818 = vunpack.c.l.b16 %v1711
        %v1819 = vunpack.c.h.b16 %v1711
        %v1820 = vunpack.c.l.b16 %v1712
        %v1821 = vunpack.c.h.b16 %v1712
        %v1822 = vunpack.c.l.b16 %v1713
        %v1823 = vunpack.c.h.b16 %v1713
        %v1824 = vunpack.c.l.b16 %v1714
        %v1825 = vunpack.c.h.b16 %v1714
        %v1826 = vpack.c.b16 %v1764, %v1762
        %v1827 = vpack.c.b16 %v1765, %v1763
        %v1828 = vpack.c.b16 %v1768, %v1766
        %v1829 = vpack.c.b16 %v1769, %v1767
        %v1830 = vpack.c.b16 %v1772, %v1770
        %v1831 = vpack.c.b16 %v1773, %v1771
        %v1832 = vpack.c.b16 %v1776, %v1774
        %v1833 = vpack.c.b16 %v1777, %v1775
        %v1834 = vpack.c.b16 %v1780, %v1778
        %v1835 = vpack.c.b16 %v1781, %v1779
        %v1836 = vpack.c.b16 %v1784, %v1782
        %v1837 = vpack.c.b16 %v1785, %v1783
        %v1838 = vpack.c.b16 %v1788, %v1786
        %v1839 = vpack.c.b16 %v1789, %v1787
        %v1840 = vpack.c.b16 %v1792, %v1790
        %v1841 = vpack.c.b16 %v1793, %v1791
        %v1842 = vpack.c.b16 %v1796, %v1794
        %v1843 = vpack.c.b16 %v1797, %v1795
        %v1844 = vpack.c.b16 %v1800, %v1798
        %v1845 = vpack.c.b16 %v1801, %v1799
        %v1846 = vpack.c.b16 %v1804, %v1802
        %v1847 = vpack.c.b16 %v1805, %v1803
        %v1848 = vpack.c.b16 %v1808, %v1806
        %v1849 = vpack.c.b16 %v1809, %v1807
        %v1850 = vpack.c.b16 %v1812, %v1810
        %v1851 = vpack.c.b16 %v1813, %v1811
        %v1852 = vpack.c.b16 %v1816, %v1814
        %v1853 = vpack.c.b16 %v1817, %v1815
        %v1854 = vpack.c.b16 %v1820, %v1818
        %v1855 = vpack.c.b16 %v1821, %v1819
        %v1856 = vpack.c.b16 %v1824, %v1822
        %v1857 = vpack.c.b16 %v1825, %v1823
        %1890 = vmatprep.subr.bf16.mxu0 %v1841
        %1891 = vmatpush1.bf16.msra.mxu0 %v1840
        %1892 = vmatprep.subr.bf16.mxu0 %v1839
        %1893 = vmatpush1.bf16.msra.mxu0 %v1838
        %1894 = vmatprep.subr.bf16.mxu0 %v1837
        %1895 = vmatpush1.bf16.msra.mxu0 %v1836
        %1896 = vmatprep.subr.bf16.mxu0 %v1835
        %1897 = vmatpush1.bf16.msra.mxu0 %v1834
        %1898 = vmatprep.subr.bf16.mxu0 %v1833
        %1899 = vmatpush1.bf16.msra.mxu0 %v1832
        %1900 = vmatprep.subr.bf16.mxu0 %v1831
        %1901 = vmatpush1.bf16.msra.mxu0 %v1830
        %1902 = vmatprep.subr.bf16.mxu0 %v1829
        %1903 = vmatpush1.bf16.msra.mxu0 %v1828
        %1904 = vmatprep.subr.bf16.mxu0 %v1827
        %1905 = vmatpush1.bf16.msra.mxu0 %v1826
        %1906 = vmatprep.subr.bf16.mxu0 %v1857
        %1907 = vmatpush2.bf16.msra.mxu0 %v1856
        %1908 = vmatprep.subr.bf16.mxu0 %v1855
        %1909 = vmatpush2.bf16.msra.mxu0 %v1854
        %1910 = vmatprep.subr.bf16.mxu0 %v1853
        %1911 = vmatpush2.bf16.msra.mxu0 %v1852
        %1912 = vmatprep.subr.bf16.mxu0 %v1851
        %1913 = vmatpush2.bf16.msra.mxu0 %v1850
        %1914 = vmatprep.subr.bf16.mxu0 %v1849
        %1915 = vmatpush2.bf16.msra.mxu0 %v1848
        %1916 = vmatprep.subr.bf16.mxu0 %v1847
        %1917 = vmatpush2.bf16.msra.mxu0 %v1846
        %1918 = vmatprep.subr.bf16.mxu0 %v1845
        %1919 = vmatpush2.bf16.msra.mxu0 %v1844
        %1920 = vmatprep.subr.bf16.mxu0 %v1843
        %1921 = vmatpush2.bf16.msra.mxu0 %v1842
        %1922 = vmatprep.mubr.bf16.mxu0 %v1718
        %1923 = vmatmul.mubr.bf16.gmra.mxu0 %v1717
        %v1924 = vpop.f32.mrf.mxu0
        %v1925 = vadd.f32 %v1723, %v1924
        %v1926 = vpop.f32.mrf.mxu0
        %v1927 = vadd.f32 %v1727, %v1926
        %v1928 = vpop.f32.mrf.mxu0
        %v1929 = vadd.f32 %v1723, %v1928
        %v1930 = vpop.f32.mrf.mxu0
        %v1931 = vadd.f32 %v1727, %v1930
        %1932 = vdwg.mxu0
        %v1933 = vpack.c.bf16 %v1680, %v1678
        %v1934 = vpack.c.bf16 %v1681, %v1679
        %1935 = vmatprep.subr.bf16.mxu0 %v1841
        %1936 = vmatpush1.bf16.msra.mxu0 %v1840
        %1937 = vmatprep.subr.bf16.mxu0 %v1839
        %1938 = vmatpush1.bf16.msra.mxu0 %v1838
        %1939 = vmatprep.subr.bf16.mxu0 %v1837
        %1940 = vmatpush1.bf16.msra.mxu0 %v1836
        %1941 = vmatprep.subr.bf16.mxu0 %v1835
        %1942 = vmatpush1.bf16.msra.mxu0 %v1834
        %1943 = vmatprep.subr.bf16.mxu0 %v1833
        %1944 = vmatpush1.bf16.msra.mxu0 %v1832
        %1945 = vmatprep.subr.bf16.mxu0 %v1831
        %1946 = vmatpush1.bf16.msra.mxu0 %v1830
        %1947 = vmatprep.subr.bf16.mxu0 %v1829
        %1948 = vmatpush1.bf16.msra.mxu0 %v1828
        %1949 = vmatprep.subr.bf16.mxu0 %v1827
        %1950 = vmatpush1.bf16.msra.mxu0 %v1826
        %1951 = vmatprep.subr.bf16.mxu0 %v1857
        %1952 = vmatpush2.bf16.msra.mxu0 %v1856
        %1953 = vmatprep.subr.bf16.mxu0 %v1855
        %1954 = vmatpush2.bf16.msra.mxu0 %v1854
        %1955 = vmatprep.subr.bf16.mxu0 %v1853
        %1956 = vmatpush2.bf16.msra.mxu0 %v1852
        %1957 = vmatprep.subr.bf16.mxu0 %v1851
        %1958 = vmatpush2.bf16.msra.mxu0 %v1850
        %1959 = vmatprep.subr.bf16.mxu0 %v1849
        %1960 = vmatpush2.bf16.msra.mxu0 %v1848
        %1961 = vmatprep.subr.bf16.mxu0 %v1847
        %1962 = vmatpush2.bf16.msra.mxu0 %v1846
        %1963 = vmatprep.subr.bf16.mxu0 %v1845
        %1964 = vmatpush2.bf16.msra.mxu0 %v1844
        %1965 = vmatprep.subr.bf16.mxu0 %v1843
        %1966 = vmatpush2.bf16.msra.mxu0 %v1842
        %1967 = vmatprep.mubr.bf16.mxu0 %v1934
        %1968 = vmatmul.mubr.bf16.gmra.mxu0 %v1933
        %v1969 = vpop.f32.mrf.mxu0
        %v1970 = vadd.f32 %v1723, %v1969
        %v1971 = vpop.f32.mrf.mxu0
        %v1972 = vadd.f32 %v1727, %v1971
        %v1973 = vpop.f32.mrf.mxu0
        %v1974 = vadd.f32 %v1723, %v1973
        %v1975 = vpop.f32.mrf.mxu0
        %v1976 = vadd.f32 %v1727, %v1975
        %1977 = vdwg.mxu0
        %v1978 = vadd.f32 %v1925, %v1927
        %1979 = vadd.xlane.f32.xlu0 %v1978
        %v1980 = vpop.xlane.xlu0 %1979
        %v1981 = vadd.f32 %v1929, %v1931
        %1982 = vadd.xlane.f32.xlu0 %v1981
        %v1983 = vpop.xlane.xlu0 %1982
        %v1984 = vmul.f32 %v1925, %v1925
        %v1985 = vmul.f32 %v1927, %v1927
        %v1986 = vmul.f32 %v1929, %v1929
        %v1987 = vmul.f32 %v1931, %v1931
        %v1988 = vadd.f32 %v1984, %v1985
        %1989 = vadd.xlane.f32.xlu0 %v1988
        %v1990 = vpop.xlane.xlu0 %1989
        %v1991 = vadd.f32 %v1986, %v1987
        %1992 = vadd.xlane.f32.xlu0 %v1991
        %v1993 = vpop.xlane.xlu0 %1992
        %v1994 = vmul.f32 %v1980, 0.005
        %v1995 = vmul.f32 %v1983, 0.005
        %v1996 = vmul.f32 %v1990, 0.005
        %v1997 = vmul.f32 %v1993, 0.005
        %v1998 = vmul.f32 %v1994, %v1994
        %v1999 = vmul.f32 %v1995, %v1995
        %v2000 = vsub.f32 %v1996, %v1998
        %v2001 = vsub.f32 %v1997, %v1999
        %v2002 = vsub.f32 %v1925, %v1994
        %v2003 = vsub.f32 %v1927, %v1994
        %v2004 = vsub.f32 %v1929, %v1995
        %v2005 = vsub.f32 %v1931, %v1995
        %v2006 = vadd.f32 %v2000, 1e-05
        %v2007 = vadd.f32 %v2001, 1e-05
        %v2008 = vrsqrt.pop %v2006
        %v2009 = vrsqrt.pop %v2007
        %v2010 = vmul.f32 %v2002, %v2008
        %v2011 = vmul.f32 %v2003, %v2008
        %v2012 = vmul.f32 %v2004, %v2009
        %v2013 = vmul.f32 %v2005, %v2009
        %v2014 = vmul.f32 %v2010, %v534
        %v2015 = vmul.f32 %v2011, %v538
        %v2016 = vmul.f32 %v2012, %v534
        %v2017 = vmul.f32 %v2013, %v538
        %v2018 = vadd.f32 %v2014, %v549
        %v2019 = vadd.f32 %v2015, %v553
        %v2020 = vadd.f32 %v2016, %v549
        %v2021 = vadd.f32 %v2017, %v553
        %v2022 = vmin.f32 %v2018, 20.0
        %v2023 = vmin.f32 %v2019, 20.0
        %v2024 = vmin.f32 %v2020, 20.0
        %v2025 = vmin.f32 %v2021, 20.0
        %v2026 = vmul.f32 %v2022, 1.442695
        %v2027 = vpow.pop %v2026
        %v2028 = vmul.f32 %v2023, 1.442695
        %v2029 = vpow.pop %v2028
        %v2030 = vmul.f32 %v2024, 1.442695
        %v2031 = vpow.pop %v2030
        %v2032 = vmul.f32 %v2025, 1.442695
        %v2033 = vpow.pop %v2032
        %v2034 = vadd.f32 %v2027, 2.0
        %v2035 = vadd.f32 %v2029, 2.0
        %v2036 = vadd.f32 %v2031, 2.0
        %v2037 = vadd.f32 %v2033, 2.0
        %v2038 = vmul.f32 %v2027, %v2034
        %v2039 = vmul.f32 %v2029, %v2035
        %v2040 = vmul.f32 %v2031, %v2036
        %v2041 = vmul.f32 %v2033, %v2037
        %v2042 = vadd.f32 %v2038, 2.0
        %v2043 = vadd.f32 %v2039, 2.0
        %v2044 = vadd.f32 %v2040, 2.0
        %v2045 = vadd.f32 %v2041, 2.0
        %v2046 = vrcp.pop %v2042
        %v2047 = vrcp.pop %v2043
        %v2048 = vrcp.pop %v2044
        %v2049 = vrcp.pop %v2045
        %v2050 = vmul.f32 %v2042, %v2046
        %v2051 = vmul.f32 %v2043, %v2047
        %v2052 = vmul.f32 %v2044, %v2048
        %v2053 = vmul.f32 %v2045, %v2049
        %v2054 = vsub.f32 2.0, %v2050
        %v2055 = vsub.f32 2.0, %v2051
        %v2056 = vsub.f32 2.0, %v2052
        %v2057 = vsub.f32 2.0, %v2053
        %v2058 = vmul.f32 %v2046, %v2054
        %v2059 = vmul.f32 %v2047, %v2055
        %v2060 = vmul.f32 %v2048, %v2056
        %v2061 = vmul.f32 %v2049, %v2057
        %v2062 = vadd.f32 %v2018, %v2018
        %v2063 = vadd.f32 %v2019, %v2019
        %v2064 = vadd.f32 %v2020, %v2020
        %v2065 = vadd.f32 %v2021, %v2021
        %v2066 = vmul.f32 %v2062, %v2058
        %v2067 = vmul.f32 %v2063, %v2059
        %v2068 = vmul.f32 %v2064, %v2060
        %v2069 = vmul.f32 %v2065, %v2061
        %v2070 = vsub.f32 %v2018, %v2066
        %v2071 = vsub.f32 %v2019, %v2067
        %v2072 = vsub.f32 %v2020, %v2068
        %v2073 = vsub.f32 %v2021, %v2069
        %v2074 = vadd.f32 %v1970, %v1972
        %2075 = vadd.xlane.f32.xlu0 %v2074
        %v2076 = vpop.xlane.xlu0 %2075
        %v2077 = vadd.f32 %v1974, %v1976
        %2078 = vadd.xlane.f32.xlu0 %v2077
        %v2079 = vpop.xlane.xlu0 %2078
        %v2080 = vmul.f32 %v1970, %v1970
        %v2081 = vmul.f32 %v1972, %v1972
        %v2082 = vmul.f32 %v1974, %v1974
        %v2083 = vmul.f32 %v1976, %v1976
        %v2084 = vadd.f32 %v2080, %v2081
        %2085 = vadd.xlane.f32.xlu0 %v2084
        %v2086 = vpop.xlane.xlu0 %2085
        %v2087 = vadd.f32 %v2082, %v2083
        %2088 = vadd.xlane.f32.xlu0 %v2087
        %v2089 = vpop.xlane.xlu0 %2088
        %v2090 = vmul.f32 %v2076, 0.005
        %v2091 = vmul.f32 %v2079, 0.005
        %v2092 = vmul.f32 %v2086, 0.005
        %v2093 = vmul.f32 %v2089, 0.005
        %v2094 = vmul.f32 %v2090, %v2090
        %v2095 = vmul.f32 %v2091, %v2091
        %v2096 = vsub.f32 %v2092, %v2094
        %v2097 = vsub.f32 %v2093, %v2095
        %v2098 = vsub.f32 %v1970, %v2090
        %v2099 = vsub.f32 %v1972, %v2090
        %v2100 = vsub.f32 %v1974, %v2091
        %v2101 = vsub.f32 %v1976, %v2091
        %v2102 = vadd.f32 %v2096, 1e-05
        %v2103 = vadd.f32 %v2097, 1e-05
        %v2104 = vrsqrt.pop %v2102
        %v2105 = vrsqrt.pop %v2103
        %v2106 = vmul.f32 %v2098, %v2104
        %v2107 = vmul.f32 %v2099, %v2104
        %v2108 = vmul.f32 %v2100, %v2105
        %v2109 = vmul.f32 %v2101, %v2105
        %v2110 = vmul.f32 %v2106, %v534
        %v2111 = vmul.f32 %v2107, %v538
        %v2112 = vmul.f32 %v2108, %v534
        %v2113 = vmul.f32 %v2109, %v538
        %v2114 = vadd.f32 %v2110, %v549
        %v2115 = vadd.f32 %v2111, %v553
        %v2116 = vadd.f32 %v2112, %v549
        %v2117 = vadd.f32 %v2113, %v553
        %v2118 = vmin.f32 %v2114, 20.0
        %v2119 = vmin.f32 %v2115, 20.0
        %v2120 = vmin.f32 %v2116, 20.0
        %v2121 = vmin.f32 %v2117, 20.0
        %v2122 = vmul.f32 %v2118, 1.442695
        %v2123 = vpow.pop %v2122
        %v2124 = vmul.f32 %v2119, 1.442695
        %v2125 = vpow.pop %v2124
        %v2126 = vmul.f32 %v2120, 1.442695
        %v2127 = vpow.pop %v2126
        %v2128 = vmul.f32 %v2121, 1.442695
        %v2129 = vpow.pop %v2128
        %v2130 = vadd.f32 %v2123, 2.0
        %v2131 = vadd.f32 %v2125, 2.0
        %v2132 = vadd.f32 %v2127, 2.0
        %v2133 = vadd.f32 %v2129, 2.0
        %v2134 = vmul.f32 %v2123, %v2130
        %v2135 = vmul.f32 %v2125, %v2131
        %v2136 = vmul.f32 %v2127, %v2132
        %v2137 = vmul.f32 %v2129, %v2133
        %v2138 = vadd.f32 %v2134, 2.0
        %v2139 = vadd.f32 %v2135, 2.0
        %v2140 = vadd.f32 %v2136, 2.0
        %v2141 = vadd.f32 %v2137, 2.0
        %v2142 = vrcp.pop %v2138
        %v2143 = vrcp.pop %v2139
        %v2144 = vrcp.pop %v2140
        %v2145 = vrcp.pop %v2141
        %v2146 = vmul.f32 %v2138, %v2142
        %v2147 = vmul.f32 %v2139, %v2143
        %v2148 = vmul.f32 %v2140, %v2144
        %v2149 = vmul.f32 %v2141, %v2145
        %v2150 = vsub.f32 2.0, %v2146
        %v2151 = vsub.f32 2.0, %v2147
        %v2152 = vsub.f32 2.0, %v2148
        %v2153 = vsub.f32 2.0, %v2149
        %v2154 = vmul.f32 %v2142, %v2150
        %v2155 = vmul.f32 %v2143, %v2151
        %v2156 = vmul.f32 %v2144, %v2152
        %v2157 = vmul.f32 %v2145, %v2153
        %v2158 = vadd.f32 %v2114, %v2114
        %v2159 = vadd.f32 %v2115, %v2115
        %v2160 = vadd.f32 %v2116, %v2116
        %v2161 = vadd.f32 %v2117, %v2117
        %v2162 = vmul.f32 %v2158, %v2154
        %v2163 = vmul.f32 %v2159, %v2155
        %v2164 = vmul.f32 %v2160, %v2156
        %v2165 = vmul.f32 %v2161, %v2157
        %v2166 = vsub.f32 %v2114, %v2162
        %v2167 = vsub.f32 %v2115, %v2163
        %v2168 = vsub.f32 %v2116, %v2164
        %v2169 = vsub.f32 %v2117, %v2165
        %s2170 = scalar_lea.vmem [#allocation3], 768
        %v2171 = vld [vmem:[%s2170] sm:$0xff]
        %v2172 = vld [vmem:[%s2170 + $0x8] sm:$0xff]
        %v2173 = vld [vmem:[%s2170 + $0x10] sm:$0xff]
        %v2174 = vld [vmem:[%s2170 + $0x18] sm:$0xff]
        %v2175 = vld [vmem:[%s2170 + $0x20] sm:$0xff]
        %v2176 = vld [vmem:[%s2170 + $0x28] sm:$0xff]
        %v2177 = vld [vmem:[%s2170 + $0x30] sm:$0xff]
        %v2178 = vld [vmem:[%s2170 + $0x38] sm:$0xff]
        %v2179 = vld [vmem:[%s2170 + $0x40] sm:$0xff]
        %v2180 = vld [vmem:[%s2170 + $0x48] sm:$0xff]
        %v2181 = vld [vmem:[%s2170 + $0x50] sm:$0xff]
        %v2182 = vld [vmem:[%s2170 + $0x58] sm:$0xff]
        %v2183 = vld [vmem:[%s2170 + $0x60] sm:$0xff]
        %v2184 = vld [vmem:[%s2170 + $0x68] sm:$0xff]
        %v2185 = vld [vmem:[%s2170 + $0x70] sm:$0xff]
        %v2186 = vld [vmem:[%s2170 + $0x78] sm:$0xff]
        %v2187 = vld [vmem:[%s2170 + $0x80] sm:$0xff]
        %v2188 = vld [vmem:[%s2170 + $0x88] sm:$0xff]
        %v2189 = vld [vmem:[%s2170 + $0x90] sm:$0xff]
        %v2190 = vld [vmem:[%s2170 + $0x98] sm:$0xff]
        %v2191 = vld [vmem:[%s2170 + $0xa0] sm:$0xff]
        %v2192 = vld [vmem:[%s2170 + $0xa8] sm:$0xff]
        %v2193 = vld [vmem:[%s2170 + $0xb0] sm:$0xff]
        %v2194 = vld [vmem:[%s2170 + $0xb8] sm:$0xff]
        %v2195 = vld [vmem:[%s2170 + $0xc0] sm:$0xff]
        %v2196 = vld [vmem:[%s2170 + $0xc8] sm:$0xff]
        %v2197 = vld [vmem:[%s2170 + $0xd0] sm:$0xff]
        %v2198 = vld [vmem:[%s2170 + $0xd8] sm:$0xff]
        %v2199 = vld [vmem:[%s2170 + $0xe0] sm:$0xff]
        %v2200 = vld [vmem:[%s2170 + $0xe8] sm:$0xff]
        %v2201 = vld [vmem:[%s2170 + $0xf0] sm:$0xff]
        %v2202 = vld [vmem:[%s2170 + $0xf8] sm:$0xff]
        %s2203 = scalar_lea.vmem %s4, 6
        %v2204 = vld [vmem:[%s2203] sm:$0x3]
        %v2205 = vpack.c.bf16 %v2072, %v2070
        %v2206 = vpack.c.bf16 %v2073, %v2071
        %v2208 = vlaneseq
        %v2209 = vshrl.u32 %v2208, 7
        %v2210 = vsub.s32 0, %v2209
        %v2211 = vrot.slane %v2204, %v2210
        %v2212 = vlaneseq
        %v2213 = vshrl.u32 %v2212, 7
        %v2214 = vsub.s32 1, %v2213
        %v2215 = vrot.slane %v2204, %v2214
        %v2250 = vunpack.c.l.b16 %v2171
        %v2251 = vunpack.c.h.b16 %v2171
        %v2252 = vunpack.c.l.b16 %v2172
        %v2253 = vunpack.c.h.b16 %v2172
        %v2254 = vunpack.c.l.b16 %v2173
        %v2255 = vunpack.c.h.b16 %v2173
        %v2256 = vunpack.c.l.b16 %v2174
        %v2257 = vunpack.c.h.b16 %v2174
        %v2258 = vunpack.c.l.b16 %v2175
        %v2259 = vunpack.c.h.b16 %v2175
        %v2260 = vunpack.c.l.b16 %v2176
        %v2261 = vunpack.c.h.b16 %v2176
        %v2262 = vunpack.c.l.b16 %v2177
        %v2263 = vunpack.c.h.b16 %v2177
        %v2264 = vunpack.c.l.b16 %v2178
        %v2265 = vunpack.c.h.b16 %v2178
        %v2266 = vunpack.c.l.b16 %v2179
        %v2267 = vunpack.c.h.b16 %v2179
        %v2268 = vunpack.c.l.b16 %v2180
        %v2269 = vunpack.c.h.b16 %v2180
        %v2270 = vunpack.c.l.b16 %v2181
        %v2271 = vunpack.c.h.b16 %v2181
        %v2272 = vunpack.c.l.b16 %v2182
        %v2273 = vunpack.c.h.b16 %v2182
        %v2274 = vunpack.c.l.b16 %v2183
        %v2275 = vunpack.c.h.b16 %v2183
        %v2276 = vunpack.c.l.b16 %v2184
        %v2277 = vunpack.c.h.b16 %v2184
        %v2278 = vunpack.c.l.b16 %v2185
        %v2279 = vunpack.c.h.b16 %v2185
        %v2280 = vunpack.c.l.b16 %v2186
        %v2281 = vunpack.c.h.b16 %v2186
        %v2282 = vunpack.c.l.b16 %v2187
        %v2283 = vunpack.c.h.b16 %v2187
        %v2284 = vunpack.c.l.b16 %v2188
        %v2285 = vunpack.c.h.b16 %v2188
        %v2286 = vunpack.c.l.b16 %v2189
        %v2287 = vunpack.c.h.b16 %v2189
        %v2288 = vunpack.c.l.b16 %v2190
        %v2289 = vunpack.c.h.b16 %v2190
        %v2290 = vunpack.c.l.b16 %v2191
        %v2291 = vunpack.c.h.b16 %v2191
        %v2292 = vunpack.c.l.b16 %v2192
        %v2293 = vunpack.c.h.b16 %v2192
        %v2294 = vunpack.c.l.b16 %v2193
        %v2295 = vunpack.c.h.b16 %v2193
        %v2296 = vunpack.c.l.b16 %v2194
        %v2297 = vunpack.c.h.b16 %v2194
        %v2298 = vunpack.c.l.b16 %v2195
        %v2299 = vunpack.c.h.b16 %v2195
        %v2300 = vunpack.c.l.b16 %v2196
        %v2301 = vunpack.c.h.b16 %v2196
        %v2302 = vunpack.c.l.b16 %v2197
        %v2303 = vunpack.c.h.b16 %v2197
        %v2304 = vunpack.c.l.b16 %v2198
        %v2305 = vunpack.c.h.b16 %v2198
        %v2306 = vunpack.c.l.b16 %v2199
        %v2307 = vunpack.c.h.b16 %v2199
        %v2308 = vunpack.c.l.b16 %v2200
        %v2309 = vunpack.c.h.b16 %v2200
        %v2310 = vunpack.c.l.b16 %v2201
        %v2311 = vunpack.c.h.b16 %v2201
        %v2312 = vunpack.c.l.b16 %v2202
        %v2313 = vunpack.c.h.b16 %v2202
        %v2314 = vpack.c.b16 %v2252, %v2250
        %v2315 = vpack.c.b16 %v2253, %v2251
        %v2316 = vpack.c.b16 %v2256, %v2254
        %v2317 = vpack.c.b16 %v2257, %v2255
        %v2318 = vpack.c.b16 %v2260, %v2258
        %v2319 = vpack.c.b16 %v2261, %v2259
        %v2320 = vpack.c.b16 %v2264, %v2262
        %v2321 = vpack.c.b16 %v2265, %v2263
        %v2322 = vpack.c.b16 %v2268, %v2266
        %v2323 = vpack.c.b16 %v2269, %v2267
        %v2324 = vpack.c.b16 %v2272, %v2270
        %v2325 = vpack.c.b16 %v2273, %v2271
        %v2326 = vpack.c.b16 %v2276, %v2274
        %v2327 = vpack.c.b16 %v2277, %v2275
        %v2328 = vpack.c.b16 %v2280, %v2278
        %v2329 = vpack.c.b16 %v2281, %v2279
        %v2330 = vpack.c.b16 %v2284, %v2282
        %v2331 = vpack.c.b16 %v2285, %v2283
        %v2332 = vpack.c.b16 %v2288, %v2286
        %v2333 = vpack.c.b16 %v2289, %v2287
        %v2334 = vpack.c.b16 %v2292, %v2290
        %v2335 = vpack.c.b16 %v2293, %v2291
        %v2336 = vpack.c.b16 %v2296, %v2294
        %v2337 = vpack.c.b16 %v2297, %v2295
        %v2338 = vpack.c.b16 %v2300, %v2298
        %v2339 = vpack.c.b16 %v2301, %v2299
        %v2340 = vpack.c.b16 %v2304, %v2302
        %v2341 = vpack.c.b16 %v2305, %v2303
        %v2342 = vpack.c.b16 %v2308, %v2306
        %v2343 = vpack.c.b16 %v2309, %v2307
        %v2344 = vpack.c.b16 %v2312, %v2310
        %v2345 = vpack.c.b16 %v2313, %v2311
        %2378 = vmatprep.subr.bf16.mxu0 %v2329
        %2379 = vmatpush1.bf16.msra.mxu0 %v2328
        %2380 = vmatprep.subr.bf16.mxu0 %v2327
        %2381 = vmatpush1.bf16.msra.mxu0 %v2326
        %2382 = vmatprep.subr.bf16.mxu0 %v2325
        %2383 = vmatpush1.bf16.msra.mxu0 %v2324
        %2384 = vmatprep.subr.bf16.mxu0 %v2323
        %2385 = vmatpush1.bf16.msra.mxu0 %v2322
        %2386 = vmatprep.subr.bf16.mxu0 %v2321
        %2387 = vmatpush1.bf16.msra.mxu0 %v2320
        %2388 = vmatprep.subr.bf16.mxu0 %v2319
        %2389 = vmatpush1.bf16.msra.mxu0 %v2318
        %2390 = vmatprep.subr.bf16.mxu0 %v2317
        %2391 = vmatpush1.bf16.msra.mxu0 %v2316
        %2392 = vmatprep.subr.bf16.mxu0 %v2315
        %2393 = vmatpush1.bf16.msra.mxu0 %v2314
        %2394 = vmatprep.subr.bf16.mxu0 %v2345
        %2395 = vmatpush2.bf16.msra.mxu0 %v2344
        %2396 = vmatprep.subr.bf16.mxu0 %v2343
        %2397 = vmatpush2.bf16.msra.mxu0 %v2342
        %2398 = vmatprep.subr.bf16.mxu0 %v2341
        %2399 = vmatpush2.bf16.msra.mxu0 %v2340
        %2400 = vmatprep.subr.bf16.mxu0 %v2339
        %2401 = vmatpush2.bf16.msra.mxu0 %v2338
        %2402 = vmatprep.subr.bf16.mxu0 %v2337
        %2403 = vmatpush2.bf16.msra.mxu0 %v2336
        %2404 = vmatprep.subr.bf16.mxu0 %v2335
        %2405 = vmatpush2.bf16.msra.mxu0 %v2334
        %2406 = vmatprep.subr.bf16.mxu0 %v2333
        %2407 = vmatpush2.bf16.msra.mxu0 %v2332
        %2408 = vmatprep.subr.bf16.mxu0 %v2331
        %2409 = vmatpush2.bf16.msra.mxu0 %v2330
        %2410 = vmatprep.mubr.bf16.mxu0 %v2206
        %2411 = vmatmul.mubr.bf16.gmra.mxu0 %v2205
        %v2412 = vpop.f32.mrf.mxu0
        %v2413 = vadd.f32 %v2211, %v2412
        %v2414 = vpop.f32.mrf.mxu0
        %v2415 = vadd.f32 %v2215, %v2414
        %v2416 = vpop.f32.mrf.mxu0
        %v2417 = vadd.f32 %v2211, %v2416
        %v2418 = vpop.f32.mrf.mxu0
        %v2419 = vadd.f32 %v2215, %v2418
        %2420 = vdwg.mxu0
        %v2421 = vpack.c.bf16 %v2168, %v2166
        %v2422 = vpack.c.bf16 %v2169, %v2167
        %2423 = vmatprep.subr.bf16.mxu0 %v2329
        %2424 = vmatpush1.bf16.msra.mxu0 %v2328
        %2425 = vmatprep.subr.bf16.mxu0 %v2327
        %2426 = vmatpush1.bf16.msra.mxu0 %v2326
        %2427 = vmatprep.subr.bf16.mxu0 %v2325
        %2428 = vmatpush1.bf16.msra.mxu0 %v2324
        %2429 = vmatprep.subr.bf16.mxu0 %v2323
        %2430 = vmatpush1.bf16.msra.mxu0 %v2322
        %2431 = vmatprep.subr.bf16.mxu0 %v2321
        %2432 = vmatpush1.bf16.msra.mxu0 %v2320
        %2433 = vmatprep.subr.bf16.mxu0 %v2319
        %2434 = vmatpush1.bf16.msra.mxu0 %v2318
        %2435 = vmatprep.subr.bf16.mxu0 %v2317
        %2436 = vmatpush1.bf16.msra.mxu0 %v2316
        %2437 = vmatprep.subr.bf16.mxu0 %v2315
        %2438 = vmatpush1.bf16.msra.mxu0 %v2314
        %2439 = vmatprep.subr.bf16.mxu0 %v2345
        %2440 = vmatpush2.bf16.msra.mxu0 %v2344
        %2441 = vmatprep.subr.bf16.mxu0 %v2343
        %2442 = vmatpush2.bf16.msra.mxu0 %v2342
        %2443 = vmatprep.subr.bf16.mxu0 %v2341
        %2444 = vmatpush2.bf16.msra.mxu0 %v2340
        %2445 = vmatprep.subr.bf16.mxu0 %v2339
        %2446 = vmatpush2.bf16.msra.mxu0 %v2338
        %2447 = vmatprep.subr.bf16.mxu0 %v2337
        %2448 = vmatpush2.bf16.msra.mxu0 %v2336
        %2449 = vmatprep.subr.bf16.mxu0 %v2335
        %2450 = vmatpush2.bf16.msra.mxu0 %v2334
        %2451 = vmatprep.subr.bf16.mxu0 %v2333
        %2452 = vmatpush2.bf16.msra.mxu0 %v2332
        %2453 = vmatprep.subr.bf16.mxu0 %v2331
        %2454 = vmatpush2.bf16.msra.mxu0 %v2330
        %2455 = vmatprep.mubr.bf16.mxu0 %v2422
        %2456 = vmatmul.mubr.bf16.gmra.mxu0 %v2421
        %v2457 = vpop.f32.mrf.mxu0
        %v2458 = vadd.f32 %v2211, %v2457
        %v2459 = vpop.f32.mrf.mxu0
        %v2460 = vadd.f32 %v2215, %v2459
        %v2461 = vpop.f32.mrf.mxu0
        %v2462 = vadd.f32 %v2211, %v2461
        %v2463 = vpop.f32.mrf.mxu0
        %v2464 = vadd.f32 %v2215, %v2463
        %2465 = vdwg.mxu0
        %v2466 = vadd.f32 %v2413, %v2415
        %2467 = vadd.xlane.f32.xlu0 %v2466
        %v2468 = vpop.xlane.xlu0 %2467
        %v2469 = vadd.f32 %v2417, %v2419
        %2470 = vadd.xlane.f32.xlu0 %v2469
        %v2471 = vpop.xlane.xlu0 %2470
        %v2472 = vmul.f32 %v2413, %v2413
        %v2473 = vmul.f32 %v2415, %v2415
        %v2474 = vmul.f32 %v2417, %v2417
        %v2475 = vmul.f32 %v2419, %v2419
        %v2476 = vadd.f32 %v2472, %v2473
        %2477 = vadd.xlane.f32.xlu0 %v2476
        %v2478 = vpop.xlane.xlu0 %2477
        %v2479 = vadd.f32 %v2474, %v2475
        %2480 = vadd.xlane.f32.xlu0 %v2479
        %v2481 = vpop.xlane.xlu0 %2480
        %v2482 = vmul.f32 %v2468, 0.005
        %v2483 = vmul.f32 %v2471, 0.005
        %v2484 = vmul.f32 %v2478, 0.005
        %v2485 = vmul.f32 %v2481, 0.005
        %v2486 = vmul.f32 %v2482, %v2482
        %v2487 = vmul.f32 %v2483, %v2483
        %v2488 = vsub.f32 %v2484, %v2486
        %v2489 = vsub.f32 %v2485, %v2487
        %v2490 = vsub.f32 %v2413, %v2482
        %v2491 = vsub.f32 %v2415, %v2482
        %v2492 = vsub.f32 %v2417, %v2483
        %v2493 = vsub.f32 %v2419, %v2483
        %v2494 = vadd.f32 %v2488, 1e-05
        %v2495 = vadd.f32 %v2489, 1e-05
        %v2496 = vrsqrt.pop %v2494
        %v2497 = vrsqrt.pop %v2495
        %v2498 = vmul.f32 %v2490, %v2496
        %v2499 = vmul.f32 %v2491, %v2496
        %v2500 = vmul.f32 %v2492, %v2497
        %v2501 = vmul.f32 %v2493, %v2497
        %v2502 = vmul.f32 %v2498, %v534
        %v2503 = vmul.f32 %v2499, %v538
        %v2504 = vmul.f32 %v2500, %v534
        %v2505 = vmul.f32 %v2501, %v538
        %v2506 = vadd.f32 %v2502, %v549
        %v2507 = vadd.f32 %v2503, %v553
        %v2508 = vadd.f32 %v2504, %v549
        %v2509 = vadd.f32 %v2505, %v553
        %v2510 = vmin.f32 %v2506, 20.0
        %v2511 = vmin.f32 %v2507, 20.0
        %v2512 = vmin.f32 %v2508, 20.0
        %v2513 = vmin.f32 %v2509, 20.0
        %v2514 = vmul.f32 %v2510, 1.442695
        %v2515 = vpow.pop %v2514
        %v2516 = vmul.f32 %v2511, 1.442695
        %v2517 = vpow.pop %v2516
        %v2518 = vmul.f32 %v2512, 1.442695
        %v2519 = vpow.pop %v2518
        %v2520 = vmul.f32 %v2513, 1.442695
        %v2521 = vpow.pop %v2520
        %v2522 = vadd.f32 %v2515, 2.0
        %v2523 = vadd.f32 %v2517, 2.0
        %v2524 = vadd.f32 %v2519, 2.0
        %v2525 = vadd.f32 %v2521, 2.0
        %v2526 = vmul.f32 %v2515, %v2522
        %v2527 = vmul.f32 %v2517, %v2523
        %v2528 = vmul.f32 %v2519, %v2524
        %v2529 = vmul.f32 %v2521, %v2525
        %v2530 = vadd.f32 %v2526, 2.0
        %v2531 = vadd.f32 %v2527, 2.0
        %v2532 = vadd.f32 %v2528, 2.0
        %v2533 = vadd.f32 %v2529, 2.0
        %v2534 = vrcp.pop %v2530
        %v2535 = vrcp.pop %v2531
        %v2536 = vrcp.pop %v2532
        %v2537 = vrcp.pop %v2533
        %v2538 = vmul.f32 %v2530, %v2534
        %v2539 = vmul.f32 %v2531, %v2535
        %v2540 = vmul.f32 %v2532, %v2536
        %v2541 = vmul.f32 %v2533, %v2537
        %v2542 = vsub.f32 2.0, %v2538
        %v2543 = vsub.f32 2.0, %v2539
        %v2544 = vsub.f32 2.0, %v2540
        %v2545 = vsub.f32 2.0, %v2541
        %v2546 = vmul.f32 %v2534, %v2542
        %v2547 = vmul.f32 %v2535, %v2543
        %v2548 = vmul.f32 %v2536, %v2544
        %v2549 = vmul.f32 %v2537, %v2545
        %v2550 = vadd.f32 %v2506, %v2506
        %v2551 = vadd.f32 %v2507, %v2507
        %v2552 = vadd.f32 %v2508, %v2508
        %v2553 = vadd.f32 %v2509, %v2509
        %v2554 = vmul.f32 %v2550, %v2546
        %v2555 = vmul.f32 %v2551, %v2547
        %v2556 = vmul.f32 %v2552, %v2548
        %v2557 = vmul.f32 %v2553, %v2549
        %v2558 = vsub.f32 %v2506, %v2554
        %v2559 = vsub.f32 %v2507, %v2555
        %v2560 = vsub.f32 %v2508, %v2556
        %v2561 = vsub.f32 %v2509, %v2557
        %v2562 = vadd.f32 %v2458, %v2460
        %2563 = vadd.xlane.f32.xlu0 %v2562
        %v2564 = vpop.xlane.xlu0 %2563
        %v2565 = vadd.f32 %v2462, %v2464
        %2566 = vadd.xlane.f32.xlu0 %v2565
        %v2567 = vpop.xlane.xlu0 %2566
        %v2568 = vmul.f32 %v2458, %v2458
        %v2569 = vmul.f32 %v2460, %v2460
        %v2570 = vmul.f32 %v2462, %v2462
        %v2571 = vmul.f32 %v2464, %v2464
        %v2572 = vadd.f32 %v2568, %v2569
        %2573 = vadd.xlane.f32.xlu0 %v2572
        %v2574 = vpop.xlane.xlu0 %2573
        %v2575 = vadd.f32 %v2570, %v2571
        %2576 = vadd.xlane.f32.xlu0 %v2575
        %v2577 = vpop.xlane.xlu0 %2576
        %v2578 = vmul.f32 %v2564, 0.005
        %v2579 = vmul.f32 %v2567, 0.005
        %v2580 = vmul.f32 %v2574, 0.005
        %v2581 = vmul.f32 %v2577, 0.005
        %v2582 = vmul.f32 %v2578, %v2578
        %v2583 = vmul.f32 %v2579, %v2579
        %v2584 = vsub.f32 %v2580, %v2582
        %v2585 = vsub.f32 %v2581, %v2583
        %v2586 = vsub.f32 %v2458, %v2578
        %v2587 = vsub.f32 %v2460, %v2578
        %v2588 = vsub.f32 %v2462, %v2579
        %v2589 = vsub.f32 %v2464, %v2579
        %v2590 = vadd.f32 %v2584, 1e-05
        %v2591 = vadd.f32 %v2585, 1e-05
        %v2592 = vrsqrt.pop %v2590
        %v2593 = vrsqrt.pop %v2591
        %v2594 = vmul.f32 %v2586, %v2592
        %v2595 = vmul.f32 %v2587, %v2592
        %v2596 = vmul.f32 %v2588, %v2593
        %v2597 = vmul.f32 %v2589, %v2593
        %v2598 = vmul.f32 %v2594, %v534
        %v2599 = vmul.f32 %v2595, %v538
        %v2600 = vmul.f32 %v2596, %v534
        %v2601 = vmul.f32 %v2597, %v538
        %v2602 = vadd.f32 %v2598, %v549
        %v2603 = vadd.f32 %v2599, %v553
        %v2604 = vadd.f32 %v2600, %v549
        %v2605 = vadd.f32 %v2601, %v553
        %v2606 = vmin.f32 %v2602, 20.0
        %v2607 = vmin.f32 %v2603, 20.0
        %v2608 = vmin.f32 %v2604, 20.0
        %v2609 = vmin.f32 %v2605, 20.0
        %v2610 = vmul.f32 %v2606, 1.442695
        %v2611 = vpow.pop %v2610
        %v2612 = vmul.f32 %v2607, 1.442695
        %v2613 = vpow.pop %v2612
        %v2614 = vmul.f32 %v2608, 1.442695
        %v2615 = vpow.pop %v2614
        %v2616 = vmul.f32 %v2609, 1.442695
        %v2617 = vpow.pop %v2616
        %v2618 = vadd.f32 %v2611, 2.0
        %v2619 = vadd.f32 %v2613, 2.0
        %v2620 = vadd.f32 %v2615, 2.0
        %v2621 = vadd.f32 %v2617, 2.0
        %v2622 = vmul.f32 %v2611, %v2618
        %v2623 = vmul.f32 %v2613, %v2619
        %v2624 = vmul.f32 %v2615, %v2620
        %v2625 = vmul.f32 %v2617, %v2621
        %v2626 = vadd.f32 %v2622, 2.0
        %v2627 = vadd.f32 %v2623, 2.0
        %v2628 = vadd.f32 %v2624, 2.0
        %v2629 = vadd.f32 %v2625, 2.0
        %v2630 = vrcp.pop %v2626
        %v2631 = vrcp.pop %v2627
        %v2632 = vrcp.pop %v2628
        %v2633 = vrcp.pop %v2629
        %v2634 = vmul.f32 %v2626, %v2630
        %v2635 = vmul.f32 %v2627, %v2631
        %v2636 = vmul.f32 %v2628, %v2632
        %v2637 = vmul.f32 %v2629, %v2633
        %v2638 = vsub.f32 2.0, %v2634
        %v2639 = vsub.f32 2.0, %v2635
        %v2640 = vsub.f32 2.0, %v2636
        %v2641 = vsub.f32 2.0, %v2637
        %v2642 = vmul.f32 %v2630, %v2638
        %v2643 = vmul.f32 %v2631, %v2639
        %v2644 = vmul.f32 %v2632, %v2640
        %v2645 = vmul.f32 %v2633, %v2641
        %v2646 = vadd.f32 %v2602, %v2602
        %v2647 = vadd.f32 %v2603, %v2603
        %v2648 = vadd.f32 %v2604, %v2604
        %v2649 = vadd.f32 %v2605, %v2605
        %v2650 = vmul.f32 %v2646, %v2642
        %v2651 = vmul.f32 %v2647, %v2643
        %v2652 = vmul.f32 %v2648, %v2644
        %v2653 = vmul.f32 %v2649, %v2645
        %v2654 = vsub.f32 %v2602, %v2650
        %v2655 = vsub.f32 %v2603, %v2651
        %v2656 = vsub.f32 %v2604, %v2652
        %v2657 = vsub.f32 %v2605, %v2653
        %s2658 = scalar_lea.vmem [#allocation3], 1024
        %v2659 = vld [vmem:[%s2658] sm:$0xff]
        %v2660 = vld [vmem:[%s2658 + $0x8] sm:$0xff]
        %v2661 = vld [vmem:[%s2658 + $0x10] sm:$0xff]
        %v2662 = vld [vmem:[%s2658 + $0x18] sm:$0xff]
        %v2663 = vld [vmem:[%s2658 + $0x20] sm:$0xff]
        %v2664 = vld [vmem:[%s2658 + $0x28] sm:$0xff]
        %v2665 = vld [vmem:[%s2658 + $0x30] sm:$0xff]
        %v2666 = vld [vmem:[%s2658 + $0x38] sm:$0xff]
        %v2667 = vld [vmem:[%s2658 + $0x40] sm:$0xff]
        %v2668 = vld [vmem:[%s2658 + $0x48] sm:$0xff]
        %v2669 = vld [vmem:[%s2658 + $0x50] sm:$0xff]
        %v2670 = vld [vmem:[%s2658 + $0x58] sm:$0xff]
        %v2671 = vld [vmem:[%s2658 + $0x60] sm:$0xff]
        %v2672 = vld [vmem:[%s2658 + $0x68] sm:$0xff]
        %v2673 = vld [vmem:[%s2658 + $0x70] sm:$0xff]
        %v2674 = vld [vmem:[%s2658 + $0x78] sm:$0xff]
        %v2675 = vld [vmem:[%s2658 + $0x80] sm:$0xff]
        %v2676 = vld [vmem:[%s2658 + $0x88] sm:$0xff]
        %v2677 = vld [vmem:[%s2658 + $0x90] sm:$0xff]
        %v2678 = vld [vmem:[%s2658 + $0x98] sm:$0xff]
        %v2679 = vld [vmem:[%s2658 + $0xa0] sm:$0xff]
        %v2680 = vld [vmem:[%s2658 + $0xa8] sm:$0xff]
        %v2681 = vld [vmem:[%s2658 + $0xb0] sm:$0xff]
        %v2682 = vld [vmem:[%s2658 + $0xb8] sm:$0xff]
        %v2683 = vld [vmem:[%s2658 + $0xc0] sm:$0xff]
        %v2684 = vld [vmem:[%s2658 + $0xc8] sm:$0xff]
        %v2685 = vld [vmem:[%s2658 + $0xd0] sm:$0xff]
        %v2686 = vld [vmem:[%s2658 + $0xd8] sm:$0xff]
        %v2687 = vld [vmem:[%s2658 + $0xe0] sm:$0xff]
        %v2688 = vld [vmem:[%s2658 + $0xe8] sm:$0xff]
        %v2689 = vld [vmem:[%s2658 + $0xf0] sm:$0xff]
        %v2690 = vld [vmem:[%s2658 + $0xf8] sm:$0xff]
        %s2691 = scalar_lea.vmem %s4, 8
        %v2692 = vld [vmem:[%s2691] sm:$0x3]
        %v2693 = vpack.c.bf16 %v2560, %v2558
        %v2694 = vpack.c.bf16 %v2561, %v2559
        %v2696 = vlaneseq
        %v2697 = vshrl.u32 %v2696, 7
        %v2698 = vsub.s32 0, %v2697
        %v2699 = vrot.slane %v2692, %v2698
        %v2700 = vlaneseq
        %v2701 = vshrl.u32 %v2700, 7
        %v2702 = vsub.s32 1, %v2701
        %v2703 = vrot.slane %v2692, %v2702
        %v2738 = vunpack.c.l.b16 %v2659
        %v2739 = vunpack.c.h.b16 %v2659
        %v2740 = vunpack.c.l.b16 %v2660
        %v2741 = vunpack.c.h.b16 %v2660
        %v2742 = vunpack.c.l.b16 %v2661
        %v2743 = vunpack.c.h.b16 %v2661
        %v2744 = vunpack.c.l.b16 %v2662
        %v2745 = vunpack.c.h.b16 %v2662
        %v2746 = vunpack.c.l.b16 %v2663
        %v2747 = vunpack.c.h.b16 %v2663
        %v2748 = vunpack.c.l.b16 %v2664
        %v2749 = vunpack.c.h.b16 %v2664
        %v2750 = vunpack.c.l.b16 %v2665
        %v2751 = vunpack.c.h.b16 %v2665
        %v2752 = vunpack.c.l.b16 %v2666
        %v2753 = vunpack.c.h.b16 %v2666
        %v2754 = vunpack.c.l.b16 %v2667
        %v2755 = vunpack.c.h.b16 %v2667
        %v2756 = vunpack.c.l.b16 %v2668
        %v2757 = vunpack.c.h.b16 %v2668
        %v2758 = vunpack.c.l.b16 %v2669
        %v2759 = vunpack.c.h.b16 %v2669
        %v2760 = vunpack.c.l.b16 %v2670
        %v2761 = vunpack.c.h.b16 %v2670
        %v2762 = vunpack.c.l.b16 %v2671
        %v2763 = vunpack.c.h.b16 %v2671
        %v2764 = vunpack.c.l.b16 %v2672
        %v2765 = vunpack.c.h.b16 %v2672
        %v2766 = vunpack.c.l.b16 %v2673
        %v2767 = vunpack.c.h.b16 %v2673
        %v2768 = vunpack.c.l.b16 %v2674
        %v2769 = vunpack.c.h.b16 %v2674
        %v2770 = vunpack.c.l.b16 %v2675
        %v2771 = vunpack.c.h.b16 %v2675
        %v2772 = vunpack.c.l.b16 %v2676
        %v2773 = vunpack.c.h.b16 %v2676
        %v2774 = vunpack.c.l.b16 %v2677
        %v2775 = vunpack.c.h.b16 %v2677
        %v2776 = vunpack.c.l.b16 %v2678
        %v2777 = vunpack.c.h.b16 %v2678
        %v2778 = vunpack.c.l.b16 %v2679
        %v2779 = vunpack.c.h.b16 %v2679
        %v2780 = vunpack.c.l.b16 %v2680
        %v2781 = vunpack.c.h.b16 %v2680
        %v2782 = vunpack.c.l.b16 %v2681
        %v2783 = vunpack.c.h.b16 %v2681
        %v2784 = vunpack.c.l.b16 %v2682
        %v2785 = vunpack.c.h.b16 %v2682
        %v2786 = vunpack.c.l.b16 %v2683
        %v2787 = vunpack.c.h.b16 %v2683
        %v2788 = vunpack.c.l.b16 %v2684
        %v2789 = vunpack.c.h.b16 %v2684
        %v2790 = vunpack.c.l.b16 %v2685
        %v2791 = vunpack.c.h.b16 %v2685
        %v2792 = vunpack.c.l.b16 %v2686
        %v2793 = vunpack.c.h.b16 %v2686
        %v2794 = vunpack.c.l.b16 %v2687
        %v2795 = vunpack.c.h.b16 %v2687
        %v2796 = vunpack.c.l.b16 %v2688
        %v2797 = vunpack.c.h.b16 %v2688
        %v2798 = vunpack.c.l.b16 %v2689
        %v2799 = vunpack.c.h.b16 %v2689
        %v2800 = vunpack.c.l.b16 %v2690
        %v2801 = vunpack.c.h.b16 %v2690
        %v2802 = vpack.c.b16 %v2740, %v2738
        %v2803 = vpack.c.b16 %v2741, %v2739
        %v2804 = vpack.c.b16 %v2744, %v2742
        %v2805 = vpack.c.b16 %v2745, %v2743
        %v2806 = vpack.c.b16 %v2748, %v2746
        %v2807 = vpack.c.b16 %v2749, %v2747
        %v2808 = vpack.c.b16 %v2752, %v2750
        %v2809 = vpack.c.b16 %v2753, %v2751
        %v2810 = vpack.c.b16 %v2756, %v2754
        %v2811 = vpack.c.b16 %v2757, %v2755
        %v2812 = vpack.c.b16 %v2760, %v2758
        %v2813 = vpack.c.b16 %v2761, %v2759
        %v2814 = vpack.c.b16 %v2764, %v2762
        %v2815 = vpack.c.b16 %v2765, %v2763
        %v2816 = vpack.c.b16 %v2768, %v2766
        %v2817 = vpack.c.b16 %v2769, %v2767
        %v2818 = vpack.c.b16 %v2772, %v2770
        %v2819 = vpack.c.b16 %v2773, %v2771
        %v2820 = vpack.c.b16 %v2776, %v2774
        %v2821 = vpack.c.b16 %v2777, %v2775
        %v2822 = vpack.c.b16 %v2780, %v2778
        %v2823 = vpack.c.b16 %v2781, %v2779
        %v2824 = vpack.c.b16 %v2784, %v2782
        %v2825 = vpack.c.b16 %v2785, %v2783
        %v2826 = vpack.c.b16 %v2788, %v2786
        %v2827 = vpack.c.b16 %v2789, %v2787
        %v2828 = vpack.c.b16 %v2792, %v2790
        %v2829 = vpack.c.b16 %v2793, %v2791
        %v2830 = vpack.c.b16 %v2796, %v2794
        %v2831 = vpack.c.b16 %v2797, %v2795
        %v2832 = vpack.c.b16 %v2800, %v2798
        %v2833 = vpack.c.b16 %v2801, %v2799
        %2866 = vmatprep.subr.bf16.mxu0 %v2817
        %2867 = vmatpush1.bf16.msra.mxu0 %v2816
        %2868 = vmatprep.subr.bf16.mxu0 %v2815
        %2869 = vmatpush1.bf16.msra.mxu0 %v2814
        %2870 = vmatprep.subr.bf16.mxu0 %v2813
        %2871 = vmatpush1.bf16.msra.mxu0 %v2812
        %2872 = vmatprep.subr.bf16.mxu0 %v2811
        %2873 = vmatpush1.bf16.msra.mxu0 %v2810
        %2874 = vmatprep.subr.bf16.mxu0 %v2809
        %2875 = vmatpush1.bf16.msra.mxu0 %v2808
        %2876 = vmatprep.subr.bf16.mxu0 %v2807
        %2877 = vmatpush1.bf16.msra.mxu0 %v2806
        %2878 = vmatprep.subr.bf16.mxu0 %v2805
        %2879 = vmatpush1.bf16.msra.mxu0 %v2804
        %2880 = vmatprep.subr.bf16.mxu0 %v2803
        %2881 = vmatpush1.bf16.msra.mxu0 %v2802
        %2882 = vmatprep.subr.bf16.mxu0 %v2833
        %2883 = vmatpush2.bf16.msra.mxu0 %v2832
        %2884 = vmatprep.subr.bf16.mxu0 %v2831
        %2885 = vmatpush2.bf16.msra.mxu0 %v2830
        %2886 = vmatprep.subr.bf16.mxu0 %v2829
        %2887 = vmatpush2.bf16.msra.mxu0 %v2828
        %2888 = vmatprep.subr.bf16.mxu0 %v2827
        %2889 = vmatpush2.bf16.msra.mxu0 %v2826
        %2890 = vmatprep.subr.bf16.mxu0 %v2825
        %2891 = vmatpush2.bf16.msra.mxu0 %v2824
        %2892 = vmatprep.subr.bf16.mxu0 %v2823
        %2893 = vmatpush2.bf16.msra.mxu0 %v2822
        %2894 = vmatprep.subr.bf16.mxu0 %v2821
        %2895 = vmatpush2.bf16.msra.mxu0 %v2820
        %2896 = vmatprep.subr.bf16.mxu0 %v2819
        %2897 = vmatpush2.bf16.msra.mxu0 %v2818
        %2898 = vmatprep.mubr.bf16.mxu0 %v2694
        %2899 = vmatmul.mubr.bf16.gmra.mxu0 %v2693
        %v2900 = vpop.f32.mrf.mxu0
        %v2901 = vadd.f32 %v2699, %v2900
        %v2902 = vpop.f32.mrf.mxu0
        %v2903 = vadd.f32 %v2703, %v2902
        %v2904 = vpop.f32.mrf.mxu0
        %v2905 = vadd.f32 %v2699, %v2904
        %v2906 = vpop.f32.mrf.mxu0
        %v2907 = vadd.f32 %v2703, %v2906
        %2908 = vdwg.mxu0
        %v2909 = vpack.c.bf16 %v2656, %v2654
        %v2910 = vpack.c.bf16 %v2657, %v2655
        %2911 = vmatprep.subr.bf16.mxu0 %v2817
        %2912 = vmatpush1.bf16.msra.mxu0 %v2816
        %2913 = vmatprep.subr.bf16.mxu0 %v2815
        %2914 = vmatpush1.bf16.msra.mxu0 %v2814
        %2915 = vmatprep.subr.bf16.mxu0 %v2813
        %2916 = vmatpush1.bf16.msra.mxu0 %v2812
        %2917 = vmatprep.subr.bf16.mxu0 %v2811
        %2918 = vmatpush1.bf16.msra.mxu0 %v2810
        %2919 = vmatprep.subr.bf16.mxu0 %v2809
        %2920 = vmatpush1.bf16.msra.mxu0 %v2808
        %2921 = vmatprep.subr.bf16.mxu0 %v2807
        %2922 = vmatpush1.bf16.msra.mxu0 %v2806
        %2923 = vmatprep.subr.bf16.mxu0 %v2805
        %2924 = vmatpush1.bf16.msra.mxu0 %v2804
        %2925 = vmatprep.subr.bf16.mxu0 %v2803
        %2926 = vmatpush1.bf16.msra.mxu0 %v2802
        %2927 = vmatprep.subr.bf16.mxu0 %v2833
        %2928 = vmatpush2.bf16.msra.mxu0 %v2832
        %2929 = vmatprep.subr.bf16.mxu0 %v2831
        %2930 = vmatpush2.bf16.msra.mxu0 %v2830
        %2931 = vmatprep.subr.bf16.mxu0 %v2829
        %2932 = vmatpush2.bf16.msra.mxu0 %v2828
        %2933 = vmatprep.subr.bf16.mxu0 %v2827
        %2934 = vmatpush2.bf16.msra.mxu0 %v2826
        %2935 = vmatprep.subr.bf16.mxu0 %v2825
        %2936 = vmatpush2.bf16.msra.mxu0 %v2824
        %2937 = vmatprep.subr.bf16.mxu0 %v2823
        %2938 = vmatpush2.bf16.msra.mxu0 %v2822
        %2939 = vmatprep.subr.bf16.mxu0 %v2821
        %2940 = vmatpush2.bf16.msra.mxu0 %v2820
        %2941 = vmatprep.subr.bf16.mxu0 %v2819
        %2942 = vmatpush2.bf16.msra.mxu0 %v2818
        %2943 = vmatprep.mubr.bf16.mxu0 %v2910
        %2944 = vmatmul.mubr.bf16.gmra.mxu0 %v2909
        %v2945 = vpop.f32.mrf.mxu0
        %v2946 = vadd.f32 %v2699, %v2945
        %v2947 = vpop.f32.mrf.mxu0
        %v2948 = vadd.f32 %v2703, %v2947
        %v2949 = vpop.f32.mrf.mxu0
        %v2950 = vadd.f32 %v2699, %v2949
        %v2951 = vpop.f32.mrf.mxu0
        %v2952 = vadd.f32 %v2703, %v2951
        %2953 = vdwg.mxu0
        %v2954 = vadd.f32 %v2901, %v2903
        %2955 = vadd.xlane.f32.xlu0 %v2954
        %v2956 = vpop.xlane.xlu0 %2955
        %v2957 = vadd.f32 %v2905, %v2907
        %2958 = vadd.xlane.f32.xlu0 %v2957
        %v2959 = vpop.xlane.xlu0 %2958
        %v2960 = vmul.f32 %v2901, %v2901
        %v2961 = vmul.f32 %v2903, %v2903
        %v2962 = vmul.f32 %v2905, %v2905
        %v2963 = vmul.f32 %v2907, %v2907
        %v2964 = vadd.f32 %v2960, %v2961
        %2965 = vadd.xlane.f32.xlu0 %v2964
        %v2966 = vpop.xlane.xlu0 %2965
        %v2967 = vadd.f32 %v2962, %v2963
        %2968 = vadd.xlane.f32.xlu0 %v2967
        %v2969 = vpop.xlane.xlu0 %2968
        %v2970 = vmul.f32 %v2956, 0.005
        %v2971 = vmul.f32 %v2959, 0.005
        %v2972 = vmul.f32 %v2966, 0.005
        %v2973 = vmul.f32 %v2969, 0.005
        %v2974 = vmul.f32 %v2970, %v2970
        %v2975 = vmul.f32 %v2971, %v2971
        %v2976 = vsub.f32 %v2972, %v2974
        %v2977 = vsub.f32 %v2973, %v2975
        %v2978 = vsub.f32 %v2901, %v2970
        %v2979 = vsub.f32 %v2903, %v2970
        %v2980 = vsub.f32 %v2905, %v2971
        %v2981 = vsub.f32 %v2907, %v2971
        %v2982 = vadd.f32 %v2976, 1e-05
        %v2983 = vadd.f32 %v2977, 1e-05
        %v2984 = vrsqrt.pop %v2982
        %v2985 = vrsqrt.pop %v2983
        %v2986 = vmul.f32 %v2978, %v2984
        %v2987 = vmul.f32 %v2979, %v2984
        %v2988 = vmul.f32 %v2980, %v2985
        %v2989 = vmul.f32 %v2981, %v2985
        %v2990 = vmul.f32 %v2986, %v534
        %v2991 = vmul.f32 %v2987, %v538
        %v2992 = vmul.f32 %v2988, %v534
        %v2993 = vmul.f32 %v2989, %v538
        %v2994 = vadd.f32 %v2990, %v549
        %v2995 = vadd.f32 %v2991, %v553
        %v2996 = vadd.f32 %v2992, %v549
        %v2997 = vadd.f32 %v2993, %v553
        %v2998 = vmin.f32 %v2994, 20.0
        %v2999 = vmin.f32 %v2995, 20.0
        %v3000 = vmin.f32 %v2996, 20.0
        %v3001 = vmin.f32 %v2997, 20.0
        %v3002 = vmul.f32 %v2998, 1.442695
        %v3003 = vpow.pop %v3002
        %v3004 = vmul.f32 %v2999, 1.442695
        %v3005 = vpow.pop %v3004
        %v3006 = vmul.f32 %v3000, 1.442695
        %v3007 = vpow.pop %v3006
        %v3008 = vmul.f32 %v3001, 1.442695
        %v3009 = vpow.pop %v3008
        %v3010 = vadd.f32 %v3003, 2.0
        %v3011 = vadd.f32 %v3005, 2.0
        %v3012 = vadd.f32 %v3007, 2.0
        %v3013 = vadd.f32 %v3009, 2.0
        %v3014 = vmul.f32 %v3003, %v3010
        %v3015 = vmul.f32 %v3005, %v3011
        %v3016 = vmul.f32 %v3007, %v3012
        %v3017 = vmul.f32 %v3009, %v3013
        %v3018 = vadd.f32 %v3014, 2.0
        %v3019 = vadd.f32 %v3015, 2.0
        %v3020 = vadd.f32 %v3016, 2.0
        %v3021 = vadd.f32 %v3017, 2.0
        %v3022 = vrcp.pop %v3018
        %v3023 = vrcp.pop %v3019
        %v3024 = vrcp.pop %v3020
        %v3025 = vrcp.pop %v3021
        %v3026 = vmul.f32 %v3018, %v3022
        %v3027 = vmul.f32 %v3019, %v3023
        %v3028 = vmul.f32 %v3020, %v3024
        %v3029 = vmul.f32 %v3021, %v3025
        %v3030 = vsub.f32 2.0, %v3026
        %v3031 = vsub.f32 2.0, %v3027
        %v3032 = vsub.f32 2.0, %v3028
        %v3033 = vsub.f32 2.0, %v3029
        %v3034 = vmul.f32 %v3022, %v3030
        %v3035 = vmul.f32 %v3023, %v3031
        %v3036 = vmul.f32 %v3024, %v3032
        %v3037 = vmul.f32 %v3025, %v3033
        %v3038 = vadd.f32 %v2994, %v2994
        %v3039 = vadd.f32 %v2995, %v2995
        %v3040 = vadd.f32 %v2996, %v2996
        %v3041 = vadd.f32 %v2997, %v2997
        %v3042 = vmul.f32 %v3038, %v3034
        %v3043 = vmul.f32 %v3039, %v3035
        %v3044 = vmul.f32 %v3040, %v3036
        %v3045 = vmul.f32 %v3041, %v3037
        %v3046 = vsub.f32 %v2994, %v3042
        %v3047 = vsub.f32 %v2995, %v3043
        %v3048 = vsub.f32 %v2996, %v3044
        %v3049 = vsub.f32 %v2997, %v3045
        %v3050 = vadd.f32 %v2946, %v2948
        %3051 = vadd.xlane.f32.xlu0 %v3050
        %v3052 = vpop.xlane.xlu0 %3051
        %v3053 = vadd.f32 %v2950, %v2952
        %3054 = vadd.xlane.f32.xlu0 %v3053
        %v3055 = vpop.xlane.xlu0 %3054
        %v3056 = vmul.f32 %v2946, %v2946
        %v3057 = vmul.f32 %v2948, %v2948
        %v3058 = vmul.f32 %v2950, %v2950
        %v3059 = vmul.f32 %v2952, %v2952
        %v3060 = vadd.f32 %v3056, %v3057
        %3061 = vadd.xlane.f32.xlu0 %v3060
        %v3062 = vpop.xlane.xlu0 %3061
        %v3063 = vadd.f32 %v3058, %v3059
        %3064 = vadd.xlane.f32.xlu0 %v3063
        %v3065 = vpop.xlane.xlu0 %3064
        %v3066 = vmul.f32 %v3052, 0.005
        %v3067 = vmul.f32 %v3055, 0.005
        %v3068 = vmul.f32 %v3062, 0.005
        %v3069 = vmul.f32 %v3065, 0.005
        %v3070 = vmul.f32 %v3066, %v3066
        %v3071 = vmul.f32 %v3067, %v3067
        %v3072 = vsub.f32 %v3068, %v3070
        %v3073 = vsub.f32 %v3069, %v3071
        %v3074 = vsub.f32 %v2946, %v3066
        %v3075 = vsub.f32 %v2948, %v3066
        %v3076 = vsub.f32 %v2950, %v3067
        %v3077 = vsub.f32 %v2952, %v3067
        %v3078 = vadd.f32 %v3072, 1e-05
        %v3079 = vadd.f32 %v3073, 1e-05
        %v3080 = vrsqrt.pop %v3078
        %v3081 = vrsqrt.pop %v3079
        %v3082 = vmul.f32 %v3074, %v3080
        %v3083 = vmul.f32 %v3075, %v3080
        %v3084 = vmul.f32 %v3076, %v3081
        %v3085 = vmul.f32 %v3077, %v3081
        %v3086 = vmul.f32 %v3082, %v534
        %v3087 = vmul.f32 %v3083, %v538
        %v3088 = vmul.f32 %v3084, %v534
        %v3089 = vmul.f32 %v3085, %v538
        %v3090 = vadd.f32 %v3086, %v549
        %v3091 = vadd.f32 %v3087, %v553
        %v3092 = vadd.f32 %v3088, %v549
        %v3093 = vadd.f32 %v3089, %v553
        %v3094 = vmin.f32 %v3090, 20.0
        %v3095 = vmin.f32 %v3091, 20.0
        %v3096 = vmin.f32 %v3092, 20.0
        %v3097 = vmin.f32 %v3093, 20.0
        %v3098 = vmul.f32 %v3094, 1.442695
        %v3099 = vpow.pop %v3098
        %v3100 = vmul.f32 %v3095, 1.442695
        %v3101 = vpow.pop %v3100
        %v3102 = vmul.f32 %v3096, 1.442695
        %v3103 = vpow.pop %v3102
        %v3104 = vmul.f32 %v3097, 1.442695
        %v3105 = vpow.pop %v3104
        %v3106 = vadd.f32 %v3099, 2.0
        %v3107 = vadd.f32 %v3101, 2.0
        %v3108 = vadd.f32 %v3103, 2.0
        %v3109 = vadd.f32 %v3105, 2.0
        %v3110 = vmul.f32 %v3099, %v3106
        %v3111 = vmul.f32 %v3101, %v3107
        %v3112 = vmul.f32 %v3103, %v3108
        %v3113 = vmul.f32 %v3105, %v3109
        %v3114 = vadd.f32 %v3110, 2.0
        %v3115 = vadd.f32 %v3111, 2.0
        %v3116 = vadd.f32 %v3112, 2.0
        %v3117 = vadd.f32 %v3113, 2.0
        %v3118 = vrcp.pop %v3114
        %v3119 = vrcp.pop %v3115
        %v3120 = vrcp.pop %v3116
        %v3121 = vrcp.pop %v3117
        %v3122 = vmul.f32 %v3114, %v3118
        %v3123 = vmul.f32 %v3115, %v3119
        %v3124 = vmul.f32 %v3116, %v3120
        %v3125 = vmul.f32 %v3117, %v3121
        %v3126 = vsub.f32 2.0, %v3122
        %v3127 = vsub.f32 2.0, %v3123
        %v3128 = vsub.f32 2.0, %v3124
        %v3129 = vsub.f32 2.0, %v3125
        %v3130 = vmul.f32 %v3118, %v3126
        %v3131 = vmul.f32 %v3119, %v3127
        %v3132 = vmul.f32 %v3120, %v3128
        %v3133 = vmul.f32 %v3121, %v3129
        %v3134 = vadd.f32 %v3090, %v3090
        %v3135 = vadd.f32 %v3091, %v3091
        %v3136 = vadd.f32 %v3092, %v3092
        %v3137 = vadd.f32 %v3093, %v3093
        %v3138 = vmul.f32 %v3134, %v3130
        %v3139 = vmul.f32 %v3135, %v3131
        %v3140 = vmul.f32 %v3136, %v3132
        %v3141 = vmul.f32 %v3137, %v3133
        %v3142 = vsub.f32 %v3090, %v3138
        %v3143 = vsub.f32 %v3091, %v3139
        %v3144 = vsub.f32 %v3092, %v3140
        %v3145 = vsub.f32 %v3093, %v3141
        %s3146 = scalar_lea.vmem [#allocation3], 1280
        %v3147 = vld [vmem:[%s3146] sm:$0xff]
        %v3148 = vld [vmem:[%s3146 + $0x8] sm:$0xff]
        %v3149 = vld [vmem:[%s3146 + $0x10] sm:$0xff]
        %v3150 = vld [vmem:[%s3146 + $0x18] sm:$0xff]
        %v3151 = vld [vmem:[%s3146 + $0x20] sm:$0xff]
        %v3152 = vld [vmem:[%s3146 + $0x28] sm:$0xff]
        %v3153 = vld [vmem:[%s3146 + $0x30] sm:$0xff]
        %v3154 = vld [vmem:[%s3146 + $0x38] sm:$0xff]
        %v3155 = vld [vmem:[%s3146 + $0x40] sm:$0xff]
        %v3156 = vld [vmem:[%s3146 + $0x48] sm:$0xff]
        %v3157 = vld [vmem:[%s3146 + $0x50] sm:$0xff]
        %v3158 = vld [vmem:[%s3146 + $0x58] sm:$0xff]
        %v3159 = vld [vmem:[%s3146 + $0x60] sm:$0xff]
        %v3160 = vld [vmem:[%s3146 + $0x68] sm:$0xff]
        %v3161 = vld [vmem:[%s3146 + $0x70] sm:$0xff]
        %v3162 = vld [vmem:[%s3146 + $0x78] sm:$0xff]
        %v3163 = vld [vmem:[%s3146 + $0x80] sm:$0xff]
        %v3164 = vld [vmem:[%s3146 + $0x88] sm:$0xff]
        %v3165 = vld [vmem:[%s3146 + $0x90] sm:$0xff]
        %v3166 = vld [vmem:[%s3146 + $0x98] sm:$0xff]
        %v3167 = vld [vmem:[%s3146 + $0xa0] sm:$0xff]
        %v3168 = vld [vmem:[%s3146 + $0xa8] sm:$0xff]
        %v3169 = vld [vmem:[%s3146 + $0xb0] sm:$0xff]
        %v3170 = vld [vmem:[%s3146 + $0xb8] sm:$0xff]
        %v3171 = vld [vmem:[%s3146 + $0xc0] sm:$0xff]
        %v3172 = vld [vmem:[%s3146 + $0xc8] sm:$0xff]
        %v3173 = vld [vmem:[%s3146 + $0xd0] sm:$0xff]
        %v3174 = vld [vmem:[%s3146 + $0xd8] sm:$0xff]
        %v3175 = vld [vmem:[%s3146 + $0xe0] sm:$0xff]
        %v3176 = vld [vmem:[%s3146 + $0xe8] sm:$0xff]
        %v3177 = vld [vmem:[%s3146 + $0xf0] sm:$0xff]
        %v3178 = vld [vmem:[%s3146 + $0xf8] sm:$0xff]
        %s3179 = scalar_lea.vmem %s4, 10
        %v3180 = vld [vmem:[%s3179] sm:$0x3]
        %v3181 = vpack.c.bf16 %v3048, %v3046
        %v3182 = vpack.c.bf16 %v3049, %v3047
        %v3184 = vlaneseq
        %v3185 = vshrl.u32 %v3184, 7
        %v3186 = vsub.s32 0, %v3185
        %v3187 = vrot.slane %v3180, %v3186
        %v3188 = vlaneseq
        %v3189 = vshrl.u32 %v3188, 7
        %v3190 = vsub.s32 1, %v3189
        %v3191 = vrot.slane %v3180, %v3190
        %v3226 = vunpack.c.l.b16 %v3147
        %v3227 = vunpack.c.h.b16 %v3147
        %v3228 = vunpack.c.l.b16 %v3148
        %v3229 = vunpack.c.h.b16 %v3148
        %v3230 = vunpack.c.l.b16 %v3149
        %v3231 = vunpack.c.h.b16 %v3149
        %v3232 = vunpack.c.l.b16 %v3150
        %v3233 = vunpack.c.h.b16 %v3150
        %v3234 = vunpack.c.l.b16 %v3151
        %v3235 = vunpack.c.h.b16 %v3151
        %v3236 = vunpack.c.l.b16 %v3152
        %v3237 = vunpack.c.h.b16 %v3152
        %v3238 = vunpack.c.l.b16 %v3153
        %v3239 = vunpack.c.h.b16 %v3153
        %v3240 = vunpack.c.l.b16 %v3154
        %v3241 = vunpack.c.h.b16 %v3154
        %v3242 = vunpack.c.l.b16 %v3155
        %v3243 = vunpack.c.h.b16 %v3155
        %v3244 = vunpack.c.l.b16 %v3156
        %v3245 = vunpack.c.h.b16 %v3156
        %v3246 = vunpack.c.l.b16 %v3157
        %v3247 = vunpack.c.h.b16 %v3157
        %v3248 = vunpack.c.l.b16 %v3158
        %v3249 = vunpack.c.h.b16 %v3158
        %v3250 = vunpack.c.l.b16 %v3159
        %v3251 = vunpack.c.h.b16 %v3159
        %v3252 = vunpack.c.l.b16 %v3160
        %v3253 = vunpack.c.h.b16 %v3160
        %v3254 = vunpack.c.l.b16 %v3161
        %v3255 = vunpack.c.h.b16 %v3161
        %v3256 = vunpack.c.l.b16 %v3162
        %v3257 = vunpack.c.h.b16 %v3162
        %v3258 = vunpack.c.l.b16 %v3163
        %v3259 = vunpack.c.h.b16 %v3163
        %v3260 = vunpack.c.l.b16 %v3164
        %v3261 = vunpack.c.h.b16 %v3164
        %v3262 = vunpack.c.l.b16 %v3165
        %v3263 = vunpack.c.h.b16 %v3165
        %v3264 = vunpack.c.l.b16 %v3166
        %v3265 = vunpack.c.h.b16 %v3166
        %v3266 = vunpack.c.l.b16 %v3167
        %v3267 = vunpack.c.h.b16 %v3167
        %v3268 = vunpack.c.l.b16 %v3168
        %v3269 = vunpack.c.h.b16 %v3168
        %v3270 = vunpack.c.l.b16 %v3169
        %v3271 = vunpack.c.h.b16 %v3169
        %v3272 = vunpack.c.l.b16 %v3170
        %v3273 = vunpack.c.h.b16 %v3170
        %v3274 = vunpack.c.l.b16 %v3171
        %v3275 = vunpack.c.h.b16 %v3171
        %v3276 = vunpack.c.l.b16 %v3172
        %v3277 = vunpack.c.h.b16 %v3172
        %v3278 = vunpack.c.l.b16 %v3173
        %v3279 = vunpack.c.h.b16 %v3173
        %v3280 = vunpack.c.l.b16 %v3174
        %v3281 = vunpack.c.h.b16 %v3174
        %v3282 = vunpack.c.l.b16 %v3175
        %v3283 = vunpack.c.h.b16 %v3175
        %v3284 = vunpack.c.l.b16 %v3176
        %v3285 = vunpack.c.h.b16 %v3176
        %v3286 = vunpack.c.l.b16 %v3177
        %v3287 = vunpack.c.h.b16 %v3177
        %v3288 = vunpack.c.l.b16 %v3178
        %v3289 = vunpack.c.h.b16 %v3178
        %v3290 = vpack.c.b16 %v3228, %v3226
        %v3291 = vpack.c.b16 %v3229, %v3227
        %v3292 = vpack.c.b16 %v3232, %v3230
        %v3293 = vpack.c.b16 %v3233, %v3231
        %v3294 = vpack.c.b16 %v3236, %v3234
        %v3295 = vpack.c.b16 %v3237, %v3235
        %v3296 = vpack.c.b16 %v3240, %v3238
        %v3297 = vpack.c.b16 %v3241, %v3239
        %v3298 = vpack.c.b16 %v3244, %v3242
        %v3299 = vpack.c.b16 %v3245, %v3243
        %v3300 = vpack.c.b16 %v3248, %v3246
        %v3301 = vpack.c.b16 %v3249, %v3247
        %v3302 = vpack.c.b16 %v3252, %v3250
        %v3303 = vpack.c.b16 %v3253, %v3251
        %v3304 = vpack.c.b16 %v3256, %v3254
        %v3305 = vpack.c.b16 %v3257, %v3255
        %v3306 = vpack.c.b16 %v3260, %v3258
        %v3307 = vpack.c.b16 %v3261, %v3259
        %v3308 = vpack.c.b16 %v3264, %v3262
        %v3309 = vpack.c.b16 %v3265, %v3263
        %v3310 = vpack.c.b16 %v3268, %v3266
        %v3311 = vpack.c.b16 %v3269, %v3267
        %v3312 = vpack.c.b16 %v3272, %v3270
        %v3313 = vpack.c.b16 %v3273, %v3271
        %v3314 = vpack.c.b16 %v3276, %v3274
        %v3315 = vpack.c.b16 %v3277, %v3275
        %v3316 = vpack.c.b16 %v3280, %v3278
        %v3317 = vpack.c.b16 %v3281, %v3279
        %v3318 = vpack.c.b16 %v3284, %v3282
        %v3319 = vpack.c.b16 %v3285, %v3283
        %v3320 = vpack.c.b16 %v3288, %v3286
        %v3321 = vpack.c.b16 %v3289, %v3287
        %3354 = vmatprep.subr.bf16.mxu0 %v3305
        %3355 = vmatpush1.bf16.msra.mxu0 %v3304
        %3356 = vmatprep.subr.bf16.mxu0 %v3303
        %3357 = vmatpush1.bf16.msra.mxu0 %v3302
        %3358 = vmatprep.subr.bf16.mxu0 %v3301
        %3359 = vmatpush1.bf16.msra.mxu0 %v3300
        %3360 = vmatprep.subr.bf16.mxu0 %v3299
        %3361 = vmatpush1.bf16.msra.mxu0 %v3298
        %3362 = vmatprep.subr.bf16.mxu0 %v3297
        %3363 = vmatpush1.bf16.msra.mxu0 %v3296
        %3364 = vmatprep.subr.bf16.mxu0 %v3295
        %3365 = vmatpush1.bf16.msra.mxu0 %v3294
        %3366 = vmatprep.subr.bf16.mxu0 %v3293
        %3367 = vmatpush1.bf16.msra.mxu0 %v3292
        %3368 = vmatprep.subr.bf16.mxu0 %v3291
        %3369 = vmatpush1.bf16.msra.mxu0 %v3290
        %3370 = vmatprep.subr.bf16.mxu0 %v3321
        %3371 = vmatpush2.bf16.msra.mxu0 %v3320
        %3372 = vmatprep.subr.bf16.mxu0 %v3319
        %3373 = vmatpush2.bf16.msra.mxu0 %v3318
        %3374 = vmatprep.subr.bf16.mxu0 %v3317
        %3375 = vmatpush2.bf16.msra.mxu0 %v3316
        %3376 = vmatprep.subr.bf16.mxu0 %v3315
        %3377 = vmatpush2.bf16.msra.mxu0 %v3314
        %3378 = vmatprep.subr.bf16.mxu0 %v3313
        %3379 = vmatpush2.bf16.msra.mxu0 %v3312
        %3380 = vmatprep.subr.bf16.mxu0 %v3311
        %3381 = vmatpush2.bf16.msra.mxu0 %v3310
        %3382 = vmatprep.subr.bf16.mxu0 %v3309
        %3383 = vmatpush2.bf16.msra.mxu0 %v3308
        %3384 = vmatprep.subr.bf16.mxu0 %v3307
        %3385 = vmatpush2.bf16.msra.mxu0 %v3306
        %3386 = vmatprep.mubr.bf16.mxu0 %v3182
        %3387 = vmatmul.mubr.bf16.gmra.mxu0 %v3181
        %v3388 = vpop.f32.mrf.mxu0
        %v3389 = vadd.f32 %v3187, %v3388
        %v3390 = vpop.f32.mrf.mxu0
        %v3391 = vadd.f32 %v3191, %v3390
        %v3392 = vpop.f32.mrf.mxu0
        %v3393 = vadd.f32 %v3187, %v3392
        %v3394 = vpop.f32.mrf.mxu0
        %v3395 = vadd.f32 %v3191, %v3394
        %3396 = vdwg.mxu0
        %v3397 = vpack.c.bf16 %v3144, %v3142
        %v3398 = vpack.c.bf16 %v3145, %v3143
        %3399 = vmatprep.subr.bf16.mxu0 %v3305
        %3400 = vmatpush1.bf16.msra.mxu0 %v3304
        %3401 = vmatprep.subr.bf16.mxu0 %v3303
        %3402 = vmatpush1.bf16.msra.mxu0 %v3302
        %3403 = vmatprep.subr.bf16.mxu0 %v3301
        %3404 = vmatpush1.bf16.msra.mxu0 %v3300
        %3405 = vmatprep.subr.bf16.mxu0 %v3299
        %3406 = vmatpush1.bf16.msra.mxu0 %v3298
        %3407 = vmatprep.subr.bf16.mxu0 %v3297
        %3408 = vmatpush1.bf16.msra.mxu0 %v3296
        %3409 = vmatprep.subr.bf16.mxu0 %v3295
        %3410 = vmatpush1.bf16.msra.mxu0 %v3294
        %3411 = vmatprep.subr.bf16.mxu0 %v3293
        %3412 = vmatpush1.bf16.msra.mxu0 %v3292
        %3413 = vmatprep.subr.bf16.mxu0 %v3291
        %3414 = vmatpush1.bf16.msra.mxu0 %v3290
        %3415 = vmatprep.subr.bf16.mxu0 %v3321
        %3416 = vmatpush2.bf16.msra.mxu0 %v3320
        %3417 = vmatprep.subr.bf16.mxu0 %v3319
        %3418 = vmatpush2.bf16.msra.mxu0 %v3318
        %3419 = vmatprep.subr.bf16.mxu0 %v3317
        %3420 = vmatpush2.bf16.msra.mxu0 %v3316
        %3421 = vmatprep.subr.bf16.mxu0 %v3315
        %3422 = vmatpush2.bf16.msra.mxu0 %v3314
        %3423 = vmatprep.subr.bf16.mxu0 %v3313
        %3424 = vmatpush2.bf16.msra.mxu0 %v3312
        %3425 = vmatprep.subr.bf16.mxu0 %v3311
        %3426 = vmatpush2.bf16.msra.mxu0 %v3310
        %3427 = vmatprep.subr.bf16.mxu0 %v3309
        %3428 = vmatpush2.bf16.msra.mxu0 %v3308
        %3429 = vmatprep.subr.bf16.mxu0 %v3307
        %3430 = vmatpush2.bf16.msra.mxu0 %v3306
        %3431 = vmatprep.mubr.bf16.mxu0 %v3398
        %3432 = vmatmul.mubr.bf16.gmra.mxu0 %v3397
        %v3433 = vpop.f32.mrf.mxu0
        %v3434 = vadd.f32 %v3187, %v3433
        %v3435 = vpop.f32.mrf.mxu0
        %v3436 = vadd.f32 %v3191, %v3435
        %v3437 = vpop.f32.mrf.mxu0
        %v3438 = vadd.f32 %v3187, %v3437
        %v3439 = vpop.f32.mrf.mxu0
        %v3440 = vadd.f32 %v3191, %v3439
        %3441 = vdwg.mxu0
        %v3442 = vadd.f32 %v3389, %v3391
        %3443 = vadd.xlane.f32.xlu0 %v3442
        %v3444 = vpop.xlane.xlu0 %3443
        %v3445 = vadd.f32 %v3393, %v3395
        %3446 = vadd.xlane.f32.xlu0 %v3445
        %v3447 = vpop.xlane.xlu0 %3446
        %v3448 = vmul.f32 %v3389, %v3389
        %v3449 = vmul.f32 %v3391, %v3391
        %v3450 = vmul.f32 %v3393, %v3393
        %v3451 = vmul.f32 %v3395, %v3395
        %v3452 = vadd.f32 %v3448, %v3449
        %3453 = vadd.xlane.f32.xlu0 %v3452
        %v3454 = vpop.xlane.xlu0 %3453
        %v3455 = vadd.f32 %v3450, %v3451
        %3456 = vadd.xlane.f32.xlu0 %v3455
        %v3457 = vpop.xlane.xlu0 %3456
        %v3458 = vmul.f32 %v3444, 0.005
        %v3459 = vmul.f32 %v3447, 0.005
        %v3460 = vmul.f32 %v3454, 0.005
        %v3461 = vmul.f32 %v3457, 0.005
        %v3462 = vmul.f32 %v3458, %v3458
        %v3463 = vmul.f32 %v3459, %v3459
        %v3464 = vsub.f32 %v3460, %v3462
        %v3465 = vsub.f32 %v3461, %v3463
        %v3466 = vsub.f32 %v3389, %v3458
        %v3467 = vsub.f32 %v3391, %v3458
        %v3468 = vsub.f32 %v3393, %v3459
        %v3469 = vsub.f32 %v3395, %v3459
        %v3470 = vadd.f32 %v3464, 1e-05
        %v3471 = vadd.f32 %v3465, 1e-05
        %v3472 = vrsqrt.pop %v3470
        %v3473 = vrsqrt.pop %v3471
        %v3474 = vmul.f32 %v3466, %v3472
        %v3475 = vmul.f32 %v3467, %v3472
        %v3476 = vmul.f32 %v3468, %v3473
        %v3477 = vmul.f32 %v3469, %v3473
        %v3478 = vmul.f32 %v3474, %v534
        %v3479 = vmul.f32 %v3475, %v538
        %v3480 = vmul.f32 %v3476, %v534
        %v3481 = vmul.f32 %v3477, %v538
        %v3482 = vadd.f32 %v3478, %v549
        %v3483 = vadd.f32 %v3479, %v553
        %v3484 = vadd.f32 %v3480, %v549
        %v3485 = vadd.f32 %v3481, %v553
        %v3486 = vmin.f32 %v3482, 20.0
        %v3487 = vmin.f32 %v3483, 20.0
        %v3488 = vmin.f32 %v3484, 20.0
        %v3489 = vmin.f32 %v3485, 20.0
        %v3490 = vmul.f32 %v3486, 1.442695
        %v3491 = vpow.pop %v3490
        %v3492 = vmul.f32 %v3487, 1.442695
        %v3493 = vpow.pop %v3492
        %v3494 = vmul.f32 %v3488, 1.442695
        %v3495 = vpow.pop %v3494
        %v3496 = vmul.f32 %v3489, 1.442695
        %v3497 = vpow.pop %v3496
        %v3498 = vadd.f32 %v3491, 2.0
        %v3499 = vadd.f32 %v3493, 2.0
        %v3500 = vadd.f32 %v3495, 2.0
        %v3501 = vadd.f32 %v3497, 2.0
        %v3502 = vmul.f32 %v3491, %v3498
        %v3503 = vmul.f32 %v3493, %v3499
        %v3504 = vmul.f32 %v3495, %v3500
        %v3505 = vmul.f32 %v3497, %v3501
        %v3506 = vadd.f32 %v3502, 2.0
        %v3507 = vadd.f32 %v3503, 2.0
        %v3508 = vadd.f32 %v3504, 2.0
        %v3509 = vadd.f32 %v3505, 2.0
        %v3510 = vrcp.pop %v3506
        %v3511 = vrcp.pop %v3507
        %v3512 = vrcp.pop %v3508
        %v3513 = vrcp.pop %v3509
        %v3514 = vmul.f32 %v3506, %v3510
        %v3515 = vmul.f32 %v3507, %v3511
        %v3516 = vmul.f32 %v3508, %v3512
        %v3517 = vmul.f32 %v3509, %v3513
        %v3518 = vsub.f32 2.0, %v3514
        %v3519 = vsub.f32 2.0, %v3515
        %v3520 = vsub.f32 2.0, %v3516
        %v3521 = vsub.f32 2.0, %v3517
        %v3522 = vmul.f32 %v3510, %v3518
        %v3523 = vmul.f32 %v3511, %v3519
        %v3524 = vmul.f32 %v3512, %v3520
        %v3525 = vmul.f32 %v3513, %v3521
        %v3526 = vadd.f32 %v3482, %v3482
        %v3527 = vadd.f32 %v3483, %v3483
        %v3528 = vadd.f32 %v3484, %v3484
        %v3529 = vadd.f32 %v3485, %v3485
        %v3530 = vmul.f32 %v3526, %v3522
        %v3531 = vmul.f32 %v3527, %v3523
        %v3532 = vmul.f32 %v3528, %v3524
        %v3533 = vmul.f32 %v3529, %v3525
        %v3534 = vsub.f32 %v3482, %v3530
        %v3535 = vsub.f32 %v3483, %v3531
        %v3536 = vsub.f32 %v3484, %v3532
        %v3537 = vsub.f32 %v3485, %v3533
        %v3538 = vadd.f32 %v3434, %v3436
        %3539 = vadd.xlane.f32.xlu0 %v3538
        %v3540 = vpop.xlane.xlu0 %3539
        %v3541 = vadd.f32 %v3438, %v3440
        %3542 = vadd.xlane.f32.xlu0 %v3541
        %v3543 = vpop.xlane.xlu0 %3542
        %v3544 = vmul.f32 %v3434, %v3434
        %v3545 = vmul.f32 %v3436, %v3436
        %v3546 = vmul.f32 %v3438, %v3438
        %v3547 = vmul.f32 %v3440, %v3440
        %v3548 = vadd.f32 %v3544, %v3545
        %3549 = vadd.xlane.f32.xlu0 %v3548
        %v3550 = vpop.xlane.xlu0 %3549
        %v3551 = vadd.f32 %v3546, %v3547
        %3552 = vadd.xlane.f32.xlu0 %v3551
        %v3553 = vpop.xlane.xlu0 %3552
        %v3554 = vmul.f32 %v3540, 0.005
        %v3555 = vmul.f32 %v3543, 0.005
        %v3556 = vmul.f32 %v3550, 0.005
        %v3557 = vmul.f32 %v3553, 0.005
        %v3558 = vmul.f32 %v3554, %v3554
        %v3559 = vmul.f32 %v3555, %v3555
        %v3560 = vsub.f32 %v3556, %v3558
        %v3561 = vsub.f32 %v3557, %v3559
        %v3562 = vsub.f32 %v3434, %v3554
        %v3563 = vsub.f32 %v3436, %v3554
        %v3564 = vsub.f32 %v3438, %v3555
        %v3565 = vsub.f32 %v3440, %v3555
        %v3566 = vadd.f32 %v3560, 1e-05
        %v3567 = vadd.f32 %v3561, 1e-05
        %v3568 = vrsqrt.pop %v3566
        %v3569 = vrsqrt.pop %v3567
        %v3570 = vmul.f32 %v3562, %v3568
        %v3571 = vmul.f32 %v3563, %v3568
        %v3572 = vmul.f32 %v3564, %v3569
        %v3573 = vmul.f32 %v3565, %v3569
        %v3574 = vmul.f32 %v3570, %v534
        %v3575 = vmul.f32 %v3571, %v538
        %v3576 = vmul.f32 %v3572, %v534
        %v3577 = vmul.f32 %v3573, %v538
        %v3578 = vadd.f32 %v3574, %v549
        %v3579 = vadd.f32 %v3575, %v553
        %v3580 = vadd.f32 %v3576, %v549
        %v3581 = vadd.f32 %v3577, %v553
        %v3582 = vmin.f32 %v3578, 20.0
        %v3583 = vmin.f32 %v3579, 20.0
        %v3584 = vmin.f32 %v3580, 20.0
        %v3585 = vmin.f32 %v3581, 20.0
        %v3586 = vmul.f32 %v3582, 1.442695
        %v3587 = vpow.pop %v3586
        %v3588 = vmul.f32 %v3583, 1.442695
        %v3589 = vpow.pop %v3588
        %v3590 = vmul.f32 %v3584, 1.442695
        %v3591 = vpow.pop %v3590
        %v3592 = vmul.f32 %v3585, 1.442695
        %v3593 = vpow.pop %v3592
        %v3594 = vadd.f32 %v3587, 2.0
        %v3595 = vadd.f32 %v3589, 2.0
        %v3596 = vadd.f32 %v3591, 2.0
        %v3597 = vadd.f32 %v3593, 2.0
        %v3598 = vmul.f32 %v3587, %v3594
        %v3599 = vmul.f32 %v3589, %v3595
        %v3600 = vmul.f32 %v3591, %v3596
        %v3601 = vmul.f32 %v3593, %v3597
        %v3602 = vadd.f32 %v3598, 2.0
        %v3603 = vadd.f32 %v3599, 2.0
        %v3604 = vadd.f32 %v3600, 2.0
        %v3605 = vadd.f32 %v3601, 2.0
        %v3606 = vrcp.pop %v3602
        %v3607 = vrcp.pop %v3603
        %v3608 = vrcp.pop %v3604
        %v3609 = vrcp.pop %v3605
        %v3610 = vmul.f32 %v3602, %v3606
        %v3611 = vmul.f32 %v3603, %v3607
        %v3612 = vmul.f32 %v3604, %v3608
        %v3613 = vmul.f32 %v3605, %v3609
        %v3614 = vsub.f32 2.0, %v3610
        %v3615 = vsub.f32 2.0, %v3611
        %v3616 = vsub.f32 2.0, %v3612
        %v3617 = vsub.f32 2.0, %v3613
        %v3618 = vmul.f32 %v3606, %v3614
        %v3619 = vmul.f32 %v3607, %v3615
        %v3620 = vmul.f32 %v3608, %v3616
        %v3621 = vmul.f32 %v3609, %v3617
        %v3622 = vadd.f32 %v3578, %v3578
        %v3623 = vadd.f32 %v3579, %v3579
        %v3624 = vadd.f32 %v3580, %v3580
        %v3625 = vadd.f32 %v3581, %v3581
        %v3626 = vmul.f32 %v3622, %v3618
        %v3627 = vmul.f32 %v3623, %v3619
        %v3628 = vmul.f32 %v3624, %v3620
        %v3629 = vmul.f32 %v3625, %v3621
        %v3630 = vsub.f32 %v3578, %v3626
        %v3631 = vsub.f32 %v3579, %v3627
        %v3632 = vsub.f32 %v3580, %v3628
        %v3633 = vsub.f32 %v3581, %v3629
        %v3634 = vld [vmem:[%s7] sm:$0x3]
        %v3635 = vld [vmem:[#allocation2] sm:$0x1]
        %v3637 = vlaneseq
        %v3638 = vshrl.u32 %v3637, 7
        %v3639 = vsub.s32 0, %v3638
        %v3640 = vrot.slane %v3634, %v3639
        %v3641 = vlaneseq
        %v3642 = vshrl.u32 %v3641, 7
        %v3643 = vsub.s32 1, %v3642
        %v3644 = vrot.slane %v3634, %v3643
        %v3647 = vmul.f32 %v3534, %v3640
        %v3648 = vmul.f32 %v3535, %v3644
        %v3649 = vmul.f32 %v3536, %v3640
        %v3650 = vmul.f32 %v3537, %v3644
        %v3651 = vadd.f32 %v3647, %v3648
        %3652 = vadd.xlane.f32.xlu0 %v3651
        %v3653 = vpop.xlane.xlu0 %3652
        %v3654 = vadd.f32 %v3649, %v3650
        %3655 = vadd.xlane.f32.xlu0 %v3654
        %v3656 = vpop.xlane.xlu0 %3655
        %v3658 = vlaneseq
        %v3659 = vshrl.u32 %v3658, 7
        %v3660 = vsub.s32 0, %v3659
        %v3661 = vrot.slane %v3635, %v3660
        %v3663 = vadd.f32 %v3653, %v3661
        %v3664 = vadd.f32 %v3656, %v3661
        %v3665 = vmul.f32 %v3630, %v3640
        %v3666 = vmul.f32 %v3631, %v3644
        %v3667 = vmul.f32 %v3632, %v3640
        %v3668 = vmul.f32 %v3633, %v3644
        %v3669 = vadd.f32 %v3665, %v3666
        %3670 = vadd.xlane.f32.xlu0 %v3669
        %v3671 = vpop.xlane.xlu0 %3670
        %v3672 = vadd.f32 %v3667, %v3668
        %3673 = vadd.xlane.f32.xlu0 %v3672
        %v3674 = vpop.xlane.xlu0 %3673
        %v3675 = vadd.f32 %v3671, %v3661
        %v3676 = vadd.f32 %v3674, %v3661
        %v3677 = vmax.f32 %v3663, 0.0
        %v3678 = vmax.f32 %v3664, 0.0
        %vm3679 = vcmp.ne.f32.partialorder %v3663, %v3663
        %vm3680 = vcmp.ne.f32.partialorder %v3664, %v3664
        %v3681 = vadd.f32 %v3663, 0.0
        %v3682 = vadd.f32 %v3664, 0.0
        %v3683 = vand.u32 2147483647, %v3663
        %v3684 = vand.u32 2147483647, %v3664
        %v3685 = vsub.f32 0.0, %v3683
        %v3686 = vsub.f32 0.0, %v3684
        %v3687 = vmul.f32 %v3685, 1.442695
        %v3688 = vpow.pop %v3687
        %v3689 = vmul.f32 %v3686, 1.442695
        %v3690 = vpow.pop %v3689
        %v3691 = vadd.f32 %v3688, 1.0
        %v3692 = vlog2.pop %v3691
        %v3693 = vmul.f32 %v3692, 0.6931472
        %v3694 = vmul.f32 -0.5, %v3688
        %v3695 = vadd.f32 %v3694, 1.0
        %v3696 = vmul.f32 %v3695, %v3688
        %v3697 = vand.u32 2147483647, %v3688
        %vm3698 = vcmp.lt.f32.partialorder %v3697, 0.0004427343
        %v3699 = vsel %vm3698, %v3696, %v3693
        %v3700 = vadd.f32 %v3690, 1.0
        %v3701 = vlog2.pop %v3700
        %v3702 = vmul.f32 %v3701, 0.6931472
        %v3703 = vmul.f32 -0.5, %v3690
        %v3704 = vadd.f32 %v3703, 1.0
        %v3705 = vmul.f32 %v3704, %v3690
        %v3706 = vand.u32 2147483647, %v3690
        %vm3707 = vcmp.lt.f32.partialorder %v3706, 0.0004427343
        %v3708 = vsel %vm3707, %v3705, %v3702
        %v3709 = vadd.f32 %v3677, %v3699
        %v3710 = vadd.f32 %v3678, %v3708
        %v3711 = vsel %vm3679, %v3681, %v3709
        %v3712 = vsel %vm3680, %v3682, %v3710
        %vm3713 = vcmask 7168
        %3714 = vst.msk [vmem:[%s351] sm:$0xff] %vm3713, %v3711
        %3715 = vst.msk [vmem:[%s351 + $0x8] sm:$0xff] %vm3713, %v3712
        %v3716 = vmax.f32 %v3675, 0.0
        %v3717 = vmax.f32 %v3676, 0.0
        %vm3718 = vcmp.ne.f32.partialorder %v3675, %v3675
        %vm3719 = vcmp.ne.f32.partialorder %v3676, %v3676
        %v3720 = vadd.f32 %v3675, 0.0
        %v3721 = vadd.f32 %v3676, 0.0
        %v3722 = vand.u32 2147483647, %v3675
        %v3723 = vand.u32 2147483647, %v3676
        %v3724 = vsub.f32 0.0, %v3722
        %v3725 = vsub.f32 0.0, %v3723
        %v3726 = vmul.f32 %v3724, 1.442695
        %v3727 = vpow.pop %v3726
        %v3728 = vmul.f32 %v3725, 1.442695
        %v3729 = vpow.pop %v3728
        %v3730 = vadd.f32 %v3727, 1.0
        %v3731 = vlog2.pop %v3730
        %v3732 = vmul.f32 %v3731, 0.6931472
        %v3733 = vmul.f32 -0.5, %v3727
        %v3734 = vadd.f32 %v3733, 1.0
        %v3735 = vmul.f32 %v3734, %v3727
        %v3736 = vand.u32 2147483647, %v3727
        %vm3737 = vcmp.lt.f32.partialorder %v3736, 0.0004427343
        %v3738 = vsel %vm3737, %v3735, %v3732
        %v3739 = vadd.f32 %v3729, 1.0
        %v3740 = vlog2.pop %v3739
        %v3741 = vmul.f32 %v3740, 0.6931472
        %v3742 = vmul.f32 -0.5, %v3729
        %v3743 = vadd.f32 %v3742, 1.0
        %v3744 = vmul.f32 %v3743, %v3729
        %v3745 = vand.u32 2147483647, %v3729
        %vm3746 = vcmp.lt.f32.partialorder %v3745, 0.0004427343
        %v3747 = vsel %vm3746, %v3744, %v3741
        %v3748 = vadd.f32 %v3716, %v3738
        %v3749 = vadd.f32 %v3717, %v3747
        %v3750 = vsel %vm3718, %v3720, %v3748
        %v3751 = vsel %vm3719, %v3721, %v3749
        %3752 = vst.msk [vmem:[%s351 + $0x10] sm:$0xff] %vm3713, %v3750
        %3753 = vst.msk [vmem:[%s351 + $0x18] sm:$0xff] %vm3713, %v3751
        %s3754 = smul.u32 4, %s23
        %p3755 = scmp.lt.s32.totalorder %s3754, 7
        %s3756 = scalar_select %p3755, %s3754, 7
        %s3757 = smul.addr %s3756, 8
        %s3758 = scalar_lea.vmem %s9, %s3757
        // Predicated region
        $region61: #{cann_forward.1} parent=55 // pred_check
          %p3759 = pneg %p235
        $region62: #{cann_forward.1} parent=55 // pred_check_branch
          %3761 = sbr.rel (%p3759) target = $region64
        $region63: #{cann_forward.1} parent=55 // pred_region
          %s3762 = smul.u32 4, %s23
        $region64: #{cann_forward.1} parent=55 // pred_fallthru
          _
      $region56: #{cann_forward.1} parent=5 // pred_fallthru
        _
      %p3763 = scmp.le.s32.totalorder 2, %s18
      // Predicated region
      $region65: #{cann_forward.1} parent=5 // pred_check
        %p3764 = pneg %p3763
      $region66: #{cann_forward.1} parent=5 // pred_check_branch
        %3766 = sbr.rel (%p3764) target = $region68
      $region67: #{cann_forward.1} parent=5 // pred_region
        %s3767 = ssub.s32 %s18, 2
        // Predicated region
        $region69: #{cann_forward.1} parent=67 // pred_check
          %p3768 = pneg %p241
        $region70: #{cann_forward.1} parent=67 // pred_check_branch
          %3770 = sbr.rel (%p3768) target = $region72
        $region71: #{cann_forward.1} parent=67 // pred_region
          %s3771 = smul.u32 4, %s24
          %p3772 = scmp.lt.s32.totalorder %s3771, 7
          %s3773 = scalar_select %p3772, %s3771, 7
          %s3774 = smul.addr %s3773, 8
          %s3775 = scalar_lea.vmem %s9, %s3774
        $region72: #{cann_forward.1} parent=67 // pred_fallthru
          _
      $region68: #{cann_forward.1} parent=5 // pred_fallthru
        _
    $region6: #{cann_forward.1} parent=1 // loop_footer
      %s22 = sadd.s32 1, %s18
    $region7: #{cann_forward.1} parent=1 // loop_footer_branch
      %17 = sbr.rel target = $region3
    $region8: #{cann_forward.1} parent=1 // loop_exit
      _
    %3776 = vsyncpa [#allocation4], 1
    %s3777 = scalar_lea.sflag [#allocation4], 1
    %3778 = vsyncpa %s3777, 1

</llo_original>
